<compile_context>
chip_gen: v7x
topology: tpu7x:2x2x1
jax: 0.10.0
libtpu: 0.0.40
codegen_flags: <defaults>
</compile_context>

<pallas_src>
import math
from functools import partial

import jax
import jax.numpy as jnp
from jax.experimental import pallas as pl
from jax.experimental.pallas import tpu as pltpu

EMBED_SIZE = 256
HEADS = 8
HEAD_DIM = EMBED_SIZE // HEADS


def _self_attention_kernel(bias_ref, v_ref, k_ref, q_ref,
                           wv_ref, wk_ref, wq_ref, wo_ref, bo_ref,
                           out_ref, *, mxu_dtype):
    """One batch tile per grid step. Blocks:
       bias_ref : (B, 1, Lk) f32     additive mask bias (0 keep / -1e20 masked)
       v/k/q    : (B, L, E)  f32
       wv/wk/wq : (E, E)     f32|bf16 block-diagonal (wq carries 1/sqrt(E))
       wo       : (E, E)     f32|bf16 (transposed: x @ W)
       bo       : (1, E)     f32
       out      : (B, Lq, E) f32
    """
    B, Lv, E = v_ref.shape
    _, Lk, _ = k_ref.shape
    _, Lq, _ = q_ref.shape

    def mm(a, b):
        return jnp.dot(a.astype(mxu_dtype), b.astype(mxu_dtype),
                       preferred_element_type=jnp.float32)

    # Full-width block-diagonal projections: one lane-dense ExE matmul each.
    vproj = mm(v_ref[...].reshape(B * Lv, E), wv_ref[...]).reshape(B, Lv, E)
    kproj = mm(k_ref[...].reshape(B * Lk, E), wk_ref[...]).reshape(B, Lk, E)
    qproj = mm(q_ref[...].reshape(B * Lq, E), wq_ref[...]).reshape(B, Lq, E)

    # Hoisted broadcast: done once, reused by every head (no per-head
    # broadcast_in_dim re-materialization).
    bias_b = jnp.broadcast_to(bias_ref[...], (B, Lq, Lk))

    # Accumulator seeded with the output bias (drops the final bias add).
    acc = jnp.broadcast_to(bo_ref[...], (B * Lq, E)).astype(jnp.float32)

    for h in range(HEADS):                          # static unrolled head loop
        lo = h * HEAD_DIM
        hi = lo + HEAD_DIM
        qh = qproj[:, :, lo:hi]                     # (B, Lq, D)
        kh = kproj[:, :, lo:hi]                     # (B, Lk, D)
        vh = vproj[:, :, lo:hi]                     # (B, Lv, D)

        # energy = Q . K contracted on head_dim (no explicit K transpose);
        # wq already carries the 1/sqrt(embed_size) scale.
        energy = jnp.einsum('bqd,bkd->bqk',
                            qh.astype(mxu_dtype), kh.astype(mxu_dtype),
                            preferred_element_type=jnp.float32)   # (B, Lq, Lk)
        e = energy + bias_b
        e = e - jnp.max(e, axis=-1, keepdims=True)
        p = jnp.exp(e)
        attn = p * pl.reciprocal(jnp.sum(p, axis=-1, keepdims=True), approx=True)

        oh = jnp.einsum('bqk,bkd->bqd',
                        attn.astype(mxu_dtype), vh.astype(mxu_dtype),
                        preferred_element_type=jnp.float32)       # (B, Lq, D)
        # Fold straight into the output projection: acc += oh @ Wo[lo:hi, :].
        acc = acc + mm(oh.reshape(B * Lq, HEAD_DIM), wo_ref[lo:hi, :])

    out_ref[...] = acc.reshape(B, Lq, E).astype(out_ref.dtype)


def _vmem_capacity_bytes():
    try:
        return int(pltpu.get_tpu_info().vmem_capacity_bytes)
    except Exception:
        return 64 * 1024 * 1024   # conservative (v7x-sized) fallback


def _vmem_step_bytes(bt, Lq, Lk, Lv, E):
    f32 = 4
    # Double-buffered pipelined inputs/outputs + mask bias.
    io = 2 * bt * (Lv + Lk + 2 * Lq) * E * f32 + 2 * bt * Lk * f32
    # Weights + output bias (still double-buffered despite constant index maps).
    w = 2 * (4 * E * E + E) * f32
    # In-kernel intermediates: 3 projections + accumulator + live energy/prob
    # tile + one head output.
    interm = bt * (3 * max(Lq, Lk, Lv) + Lq) * E * f32
    interm += 2 * bt * Lq * Lk * f32 + bt * Lq * HEAD_DIM * f32
    return io + w + interm


def _pick_b_tile(N, Lq, Lk, Lv, E, vmem_budget_bytes):
    # Target ~1024 rows per projection matmul to amortize the ~0.35us fixed
    # per-grid-step overhead and fill the MXU.
    bt = max(1, min(N, 1024 // max(Lq, 1)))
    # Shrink until the per-step working set fits the generation's VMEM budget.
    while bt > 1 and _vmem_step_bytes(bt, Lq, Lk, Lv, E) > vmem_budget_bytes:
        bt = (bt + 1) // 2
    # Keep >= 2 grid steps so both v7x TensorCores get work along "parallel".
    if N >= 2:
        bt = min(bt, pl.cdiv(N, 2))
    return max(bt, 1)


def self_attention_pallas(values, keys, query, mask, params,
                          b_tile=None, mxu_bf16=False):
    """values/keys/query: (N, L, E) float32; mask: (N, Lk) int32 (1=keep, 0=mask)."""
    wv_t, wk_t, wq_t, wo_t, bo = params
    N, Lq, E = query.shape
    Lk = keys.shape[1]
    Lv = values.shape[1]
    assert E == EMBED_SIZE

    cap = _vmem_capacity_bytes()
    if b_tile is None:
        b_tile = _pick_b_tile(N, Lq, Lk, Lv, E, int(0.6 * cap))

    mxu_dtype = jnp.bfloat16 if mxu_bf16 else jnp.float32

    # Block-diagonal projection weights (one 256-wide matmul per tensor inside
    # the kernel); softmax scale folded into Wq.  Ship them in the MXU dtype so
    # bf16 mode also halves weight DMA bytes.
    eye_h = jnp.eye(HEADS, dtype=jnp.float32)
    wv_bd = jnp.kron(eye_h, wv_t).astype(mxu_dtype)
    wk_bd = jnp.kron(eye_h, wk_t).astype(mxu_dtype)
    wq_bd = (jnp.kron(eye_h, wq_t)
             * jnp.float32(1.0 / math.sqrt(EMBED_SIZE))).astype(mxu_dtype)
    wo = wo_t.astype(mxu_dtype)
    bo2 = bo.reshape(1, E)   # stays f32: seeds the f32 accumulator

    # Mask -> additive f32 bias (0 keep / -1e20 masked), one row per batch.
    bias = jnp.where(mask == 0, jnp.float32(-1e20), jnp.float32(0.0))
    bias = bias.reshape(N, 1, Lk)

    # Pad the batch so b_tile need not divide N (padded rows: zeros + keep-mask,
    # sliced off below).
    n_pad = pl.cdiv(N, b_tile) * b_tile
    if n_pad != N:
        pad = n_pad - N
        values = jnp.pad(values, ((0, pad), (0, 0), (0, 0)))
        keys = jnp.pad(keys, ((0, pad), (0, 0), (0, 0)))
        query = jnp.pad(query, ((0, pad), (0, 0), (0, 0)))
        bias = jnp.pad(bias, ((0, pad), (0, 0), (0, 0)))

    grid = (n_pad // b_tile,)

    flops = 2 * n_pad * (3 * Lv * E * E + 2 * Lq * Lk * E + Lq * E * E)
    transcendentals = n_pad * HEADS * Lq * Lk
    bytes_accessed = 4 * (n_pad * (Lv + Lk + 2 * Lq) * E + n_pad * Lk
                          + 4 * E * E + E)

    out = pl.pallas_call(
        partial(_self_attention_kernel, mxu_dtype=mxu_dtype),
        out_shape=jax.ShapeDtypeStruct((n_pad, Lq, E), jnp.float32),
        grid_spec=pltpu.PrefetchScalarGridSpec(
            num_scalar_prefetch=0,
            grid=grid,
            in_specs=[
                pl.BlockSpec((b_tile, 1, Lk), lambda b: (b, 0, 0)),   # mask bias
                pl.BlockSpec((b_tile, Lv, E), lambda b: (b, 0, 0)),   # values
                pl.BlockSpec((b_tile, Lk, E), lambda b: (b, 0, 0)),   # keys
                pl.BlockSpec((b_tile, Lq, E), lambda b: (b, 0, 0)),   # query
                pl.BlockSpec((E, E), lambda b: (0, 0)),               # Wv block-diag
                pl.BlockSpec((E, E), lambda b: (0, 0)),               # Wk block-diag
                pl.BlockSpec((E, E), lambda b: (0, 0)),               # Wq block-diag (scaled)
                pl.BlockSpec((E, E), lambda b: (0, 0)),               # Wo^T
                pl.BlockSpec((1, E), lambda b: (0, 0)),               # bo
            ],
            out_specs=pl.BlockSpec((b_tile, Lq, E), lambda b: (b, 0, 0)),
        ),
        compiler_params=pltpu.CompilerParams(
            dimension_semantics=("parallel",),
            vmem_limit_bytes=int(0.75 * cap)),
        cost_estimate=pl.CostEstimate(
            flops=flops, transcendentals=transcendentals,
            bytes_accessed=bytes_accessed),
    )(bias, values, keys, query, wv_bd, wk_bd, wq_bd, wo, bo2)

    return out[:N] if n_pad != N else out


def self_attention_ref(values, keys, query, mask, params):
    """Pure-JAX reference mirroring the PyTorch forward exactly."""
    wv_t, wk_t, wq_t, wo_t, bo = params
    N, Lq, E = query.shape
    Lk = keys.shape[1]
    Lv = values.shape[1]
    v = values.reshape(N, Lv, HEADS, HEAD_DIM) @ wv_t
    k = keys.reshape(N, Lk, HEADS, HEAD_DIM) @ wk_t
    q = query.reshape(N, Lq, HEADS, HEAD_DIM) @ wq_t
    energy = jnp.einsum('nqhd,nkhd->nhqk', q, k)
    energy = jnp.where(mask[:, None, None, :] == 0, -1e20, energy)
    attn = jax.nn.softmax(energy / math.sqrt(EMBED_SIZE), axis=3)
    out = jnp.einsum('nhql,nlhd->nqhd', attn, v).reshape(N, Lq, E)
    return out @ wo_t + bo


def init_params(key):
    """Deterministic init mimicking nn.Linear defaults (uniform +/- 1/sqrt(fan_in)).
       Returned weights are transposed to (in, out)."""
    k1, k2, k3, k4, k5 = jax.random.split(key, 5)
    lim_d = 1.0 / math.sqrt(HEAD_DIM)
    lim_e = 1.0 / math.sqrt(EMBED_SIZE)
    wv_t = jax.random.uniform(k1, (HEAD_DIM, HEAD_DIM), jnp.float32, -lim_d, lim_d)
    wk_t = jax.random.uniform(k2, (HEAD_DIM, HEAD_DIM), jnp.float32, -lim_d, lim_d)
    wq_t = jax.random.uniform(k3, (HEAD_DIM, HEAD_DIM), jnp.float32, -lim_d, lim_d)
    wo_t = jax.random.uniform(k4, (EMBED_SIZE, EMBED_SIZE), jnp.float32, -lim_e, lim_e)
    bo = jax.random.uniform(k5, (EMBED_SIZE,), jnp.float32, -lim_e, lim_e)
    return (wv_t, wk_t, wq_t, wo_t, bo)


if __name__ == "__main__":
    key = jax.random.PRNGKey(0)
    kp, kv, kk, kq = jax.random.split(key, 4)

    N, L = 2, 8  # small batch / seq; embed_size=256, heads=8 as in the module
    params = init_params(kp)

    values = jax.random.normal(kv, (N, L, EMBED_SIZE), jnp.float32)
    keys = jax.random.normal(kk, (N, L, EMBED_SIZE), jnp.float32)
    query = jax.random.normal(kq, (N, L, EMBED_SIZE), jnp.float32)

    # mask: 1 = attend, 0 = masked.  Deterministic: mask out last 2 keys of batch 1.
    mask = jnp.ones((N, L), jnp.int32)
    mask = mask.at[1, -2:].set(0)

    expected = self_attention_ref(values, keys, query, mask, params)

    # Default f32-MXU path: near-exact parity with the f32 reference (tolerance
    # only relaxed for the EUP approximate reciprocal in the softmax denom).
    out = jax.block_until_ready(
        self_attention_pallas(values, keys, query, mask, params))
    assert out.shape == (N, L, EMBED_SIZE)
    assert jnp.allclose(out, expected, atol=2e-3, rtol=2e-3), \
        "f32 path mismatch vs reference"

    # bf16-MXU-operand path (f32 accumulation): native MXU throughput + halved
    # weight DMA; checked at bf16-appropriate tolerance.
    out_bf16 = jax.block_until_ready(
        self_attention_pallas(values, keys, query, mask, params, mxu_bf16=True))
    assert jnp.allclose(out_bf16, expected, atol=6e-2, rtol=6e-2), \
        "bf16 path mismatch vs reference"

    print("KERNEL_OK")
</pallas_src>

<mosaic_0001>
module attributes {stable_mosaic.version = 11 : i64} {
  func.func @_self_attention_kernel(%arg0: i32, %arg1: memref<1x1x8xf32, #tpu.memory_space<vmem>>, %arg2: memref<1x8x256xf32, #tpu.memory_space<vmem>>, %arg3: memref<1x8x256xf32, #tpu.memory_space<vmem>>, %arg4: memref<1x8x256xf32, #tpu.memory_space<vmem>>, %arg5: memref<256x256xf32, #tpu.memory_space<vmem>>, %arg6: memref<256x256xf32, #tpu.memory_space<vmem>>, %arg7: memref<256x256xf32, #tpu.memory_space<vmem>>, %arg8: memref<256x256xf32, #tpu.memory_space<vmem>>, %arg9: memref<1x256xf32, #tpu.memory_space<vmem>>, %arg10: memref<1x8x256xf32, #tpu.memory_space<vmem>>) attributes {dimension_semantics = [#tpu.dimension_semantics<parallel>], iteration_bounds = array<i64: 2>, scalar_prefetch = 0 : i64, scratch_operands = 0 : i64, tpu.core_type = #tpu.core_type<tc>, window_params = [{transform_indices = @transform_0, window_bounds = array<i64: 1, 1, 8>}, {transform_indices = @transform_1, window_bounds = array<i64: 1, 8, 256>}, {transform_indices = @transform_2, window_bounds = array<i64: 1, 8, 256>}, {transform_indices = @transform_3, window_bounds = array<i64: 1, 8, 256>}, {pipeline_mode = #tpu.pipeline_mode<synchronous>, transform_indices = @transform_4, window_bounds = array<i64: 256, 256>}, {pipeline_mode = #tpu.pipeline_mode<synchronous>, transform_indices = @transform_5, window_bounds = array<i64: 256, 256>}, {pipeline_mode = #tpu.pipeline_mode<synchronous>, transform_indices = @transform_6, window_bounds = array<i64: 256, 256>}, {pipeline_mode = #tpu.pipeline_mode<synchronous>, transform_indices = @transform_7, window_bounds = array<i64: 256, 256>}, {pipeline_mode = #tpu.pipeline_mode<synchronous>, transform_indices = @transform_8, window_bounds = array<i64: 1, 256>}, {transform_indices = @transform_9, window_bounds = array<i64: 1, 8, 256>}]} {
    %c0 = arith.constant 0 : index
    %c0_0 = arith.constant 0 : index
    %c0_1 = arith.constant 0 : index
    %0 = vector.load %arg2[%c0, %c0_0, %c0_1] : memref<1x8x256xf32, #tpu.memory_space<vmem>>, vector<1x8x256xf32>
    %1 = vector.shape_cast %0 : vector<1x8x256xf32> to vector<8x256xf32>
    %c0_2 = arith.constant 0 : index
    %c0_3 = arith.constant 0 : index
    %2 = vector.load %arg5[%c0_2, %c0_3] : memref<256x256xf32, #tpu.memory_space<vmem>>, vector<256x256xf32>
    %cst = arith.constant dense<0.000000e+00> : vector<8x256xf32>
    %3 = tpu.matmul %1, %2, %cst {dimension_numbers = #tpu.dot_dimension_numbers<[1], [0], [0], [1], [0, 0, 1, 1], [], []>} : vector<8x256xf32>, vector<256x256xf32>, vector<8x256xf32> -> vector<8x256xf32>
    %4 = vector.shape_cast %3 : vector<8x256xf32> to vector<1x8x256xf32>
    %c0_4 = arith.constant 0 : index
    %c0_5 = arith.constant 0 : index
    %c0_6 = arith.constant 0 : index
    %5 = vector.load %arg3[%c0_4, %c0_5, %c0_6] : memref<1x8x256xf32, #tpu.memory_space<vmem>>, vector<1x8x256xf32>
    %6 = vector.shape_cast %5 : vector<1x8x256xf32> to vector<8x256xf32>
    %c0_7 = arith.constant 0 : index
    %c0_8 = arith.constant 0 : index
    %7 = vector.load %arg6[%c0_7, %c0_8] : memref<256x256xf32, #tpu.memory_space<vmem>>, vector<256x256xf32>
    %cst_9 = arith.constant dense<0.000000e+00> : vector<8x256xf32>
    %8 = tpu.matmul %6, %7, %cst_9 {dimension_numbers = #tpu.dot_dimension_numbers<[1], [0], [0], [1], [0, 0, 1, 1], [], []>} : vector<8x256xf32>, vector<256x256xf32>, vector<8x256xf32> -> vector<8x256xf32>
    %9 = vector.shape_cast %8 : vector<8x256xf32> to vector<1x8x256xf32>
    %c0_10 = arith.constant 0 : index
    %c0_11 = arith.constant 0 : index
    %c0_12 = arith.constant 0 : index
    %10 = vector.load %arg4[%c0_10, %c0_11, %c0_12] : memref<1x8x256xf32, #tpu.memory_space<vmem>>, vector<1x8x256xf32>
    %11 = vector.shape_cast %10 : vector<1x8x256xf32> to vector<8x256xf32>
    %c0_13 = arith.constant 0 : index
    %c0_14 = arith.constant 0 : index
    %12 = vector.load %arg7[%c0_13, %c0_14] : memref<256x256xf32, #tpu.memory_space<vmem>>, vector<256x256xf32>
    %cst_15 = arith.constant dense<0.000000e+00> : vector<8x256xf32>
    %13 = tpu.matmul %11, %12, %cst_15 {dimension_numbers = #tpu.dot_dimension_numbers<[1], [0], [0], [1], [0, 0, 1, 1], [], []>} : vector<8x256xf32>, vector<256x256xf32>, vector<8x256xf32> -> vector<8x256xf32>
    %14 = vector.shape_cast %13 : vector<8x256xf32> to vector<1x8x256xf32>
    %c0_16 = arith.constant 0 : index
    %c0_17 = arith.constant 0 : index
    %c0_18 = arith.constant 0 : index
    %15 = vector.load %arg1[%c0_16, %c0_17, %c0_18] : memref<1x1x8xf32, #tpu.memory_space<vmem>>, vector<1x1x8xf32>
    %16 = vector.shape_cast %15 : vector<1x1x8xf32> to vector<1x1x8xf32>
    %17 = vector.broadcast %16 : vector<1x1x8xf32> to vector<1x8x8xf32>
    %c0_19 = arith.constant 0 : index
    %c0_20 = arith.constant 0 : index
    %18 = vector.load %arg9[%c0_19, %c0_20] : memref<1x256xf32, #tpu.memory_space<vmem>>, vector<1x256xf32>
    %19 = vector.shape_cast %18 : vector<1x256xf32> to vector<1x256xf32>
    %20 = vector.broadcast %19 : vector<1x256xf32> to vector<8x256xf32>
    %21 = vector.extract_strided_slice %14 {offsets = [0, 0, 0], sizes = [1, 8, 32], strides = [1, 1, 1]} : vector<1x8x256xf32> to vector<1x8x32xf32>
    %22 = vector.extract_strided_slice %9 {offsets = [0, 0, 0], sizes = [1, 8, 32], strides = [1, 1, 1]} : vector<1x8x256xf32> to vector<1x8x32xf32>
    %23 = vector.extract_strided_slice %4 {offsets = [0, 0, 0], sizes = [1, 8, 32], strides = [1, 1, 1]} : vector<1x8x256xf32> to vector<1x8x32xf32>
    "tpu.trace_start"() <{level = 10 : i32, message = "bqd,bkd->bqk"}> : () -> ()
    %cst_21 = arith.constant dense<0.000000e+00> : vector<1x8x8xf32>
    %24 = tpu.matmul %21, %22, %cst_21 {dimension_numbers = #tpu.dot_dimension_numbers<[2], [2], [1], [1], [0, 0, 0, 1, 1, 1], [0], [0]>} : vector<1x8x32xf32>, vector<1x8x32xf32>, vector<1x8x8xf32> -> vector<1x8x8xf32>
    "tpu.trace_stop"() : () -> ()
    %25 = arith.addf %24, %17 : vector<1x8x8xf32>
    %cst_22 = arith.constant dense<0xFF800000> : vector<1x8xf32>
    %26 = vector.multi_reduction <maximumf>, %25, %cst_22 [2] : vector<1x8x8xf32> to vector<1x8xf32>
    %27 = vector.shape_cast %26 : vector<1x8xf32> to vector<1x8x1xf32>
    %28 = vector.broadcast %27 : vector<1x8x1xf32> to vector<1x8x8xf32>
    %29 = arith.subf %25, %28 : vector<1x8x8xf32>
    %30 = math.exp %29 : vector<1x8x8xf32>
    %cst_23 = arith.constant dense<0.000000e+00> : vector<1x8xf32>
    %31 = vector.multi_reduction <add>, %30, %cst_23 [2] : vector<1x8x8xf32> to vector<1x8xf32>
    %32 = vector.shape_cast %31 : vector<1x8xf32> to vector<1x8x1xf32>
    %33 = tpu.reciprocal %32 {approx = true} : vector<1x8x1xf32> -> vector<1x8x1xf32>
    %34 = vector.broadcast %33 : vector<1x8x1xf32> to vector<1x8x8xf32>
    %35 = arith.mulf %30, %34 : vector<1x8x8xf32>
    "tpu.trace_start"() <{level = 10 : i32, message = "bqk,bkd->bqd"}> : () -> ()
    %cst_24 = arith.constant dense<0.000000e+00> : vector<1x8x32xf32>
    %36 = tpu.matmul %35, %23, %cst_24 {dimension_numbers = #tpu.dot_dimension_numbers<[2], [1], [1], [2], [0, 0, 0, 1, 1, 2], [0], [0]>} : vector<1x8x8xf32>, vector<1x8x32xf32>, vector<1x8x32xf32> -> vector<1x8x32xf32>
    "tpu.trace_stop"() : () -> ()
    %37 = vector.shape_cast %36 : vector<1x8x32xf32> to vector<8x32xf32>
    %c0_25 = arith.constant 0 : index
    %c0_26 = arith.constant 0 : index
    %38 = vector.load %arg8[%c0_25, %c0_26] : memref<256x256xf32, #tpu.memory_space<vmem>>, vector<32x256xf32>
    %cst_27 = arith.constant dense<0.000000e+00> : vector<8x256xf32>
    %39 = tpu.matmul %37, %38, %cst_27 {dimension_numbers = #tpu.dot_dimension_numbers<[1], [0], [0], [1], [0, 0, 1, 1], [], []>} : vector<8x32xf32>, vector<32x256xf32>, vector<8x256xf32> -> vector<8x256xf32>
    %40 = arith.addf %20, %39 : vector<8x256xf32>
    %41 = vector.extract_strided_slice %14 {offsets = [0, 0, 32], sizes = [1, 8, 32], strides = [1, 1, 1]} : vector<1x8x256xf32> to vector<1x8x32xf32>
    %42 = vector.extract_strided_slice %9 {offsets = [0, 0, 32], sizes = [1, 8, 32], strides = [1, 1, 1]} : vector<1x8x256xf32> to vector<1x8x32xf32>
    %43 = vector.extract_strided_slice %4 {offsets = [0, 0, 32], sizes = [1, 8, 32], strides = [1, 1, 1]} : vector<1x8x256xf32> to vector<1x8x32xf32>
    "tpu.trace_start"() <{level = 10 : i32, message = "bqd,bkd->bqk"}> : () -> ()
    %cst_28 = arith.constant dense<0.000000e+00> : vector<1x8x8xf32>
    %44 = tpu.matmul %41, %42, %cst_28 {dimension_numbers = #tpu.dot_dimension_numbers<[2], [2], [1], [1], [0, 0, 0, 1, 1, 1], [0], [0]>} : vector<1x8x32xf32>, vector<1x8x32xf32>, vector<1x8x8xf32> -> vector<1x8x8xf32>
    "tpu.trace_stop"() : () -> ()
    %45 = arith.addf %44, %17 : vector<1x8x8xf32>
    %cst_29 = arith.constant dense<0xFF800000> : vector<1x8xf32>
    %46 = vector.multi_reduction <maximumf>, %45, %cst_29 [2] : vector<1x8x8xf32> to vector<1x8xf32>
    %47 = vector.shape_cast %46 : vector<1x8xf32> to vector<1x8x1xf32>
    %48 = vector.broadcast %47 : vector<1x8x1xf32> to vector<1x8x8xf32>
    %49 = arith.subf %45, %48 : vector<1x8x8xf32>
    %50 = math.exp %49 : vector<1x8x8xf32>
    %cst_30 = arith.constant dense<0.000000e+00> : vector<1x8xf32>
    %51 = vector.multi_reduction <add>, %50, %cst_30 [2] : vector<1x8x8xf32> to vector<1x8xf32>
    %52 = vector.shape_cast %51 : vector<1x8xf32> to vector<1x8x1xf32>
    %53 = tpu.reciprocal %52 {approx = true} : vector<1x8x1xf32> -> vector<1x8x1xf32>
    %54 = vector.broadcast %53 : vector<1x8x1xf32> to vector<1x8x8xf32>
    %55 = arith.mulf %50, %54 : vector<1x8x8xf32>
    "tpu.trace_start"() <{level = 10 : i32, message = "bqk,bkd->bqd"}> : () -> ()
    %cst_31 = arith.constant dense<0.000000e+00> : vector<1x8x32xf32>
    %56 = tpu.matmul %55, %43, %cst_31 {dimension_numbers = #tpu.dot_dimension_numbers<[2], [1], [1], [2], [0, 0, 0, 1, 1, 2], [0], [0]>} : vector<1x8x8xf32>, vector<1x8x32xf32>, vector<1x8x32xf32> -> vector<1x8x32xf32>
    "tpu.trace_stop"() : () -> ()
    %57 = vector.shape_cast %56 : vector<1x8x32xf32> to vector<8x32xf32>
    %c32 = arith.constant 32 : index
    %c0_32 = arith.constant 0 : index
    %58 = vector.load %arg8[%c32, %c0_32] : memref<256x256xf32, #tpu.memory_space<vmem>>, vector<32x256xf32>
    %cst_33 = arith.constant dense<0.000000e+00> : vector<8x256xf32>
    %59 = tpu.matmul %57, %58, %cst_33 {dimension_numbers = #tpu.dot_dimension_numbers<[1], [0], [0], [1], [0, 0, 1, 1], [], []>} : vector<8x32xf32>, vector<32x256xf32>, vector<8x256xf32> -> vector<8x256xf32>
    %60 = arith.addf %40, %59 : vector<8x256xf32>
    %61 = vector.extract_strided_slice %14 {offsets = [0, 0, 64], sizes = [1, 8, 32], strides = [1, 1, 1]} : vector<1x8x256xf32> to vector<1x8x32xf32>
    %62 = vector.extract_strided_slice %9 {offsets = [0, 0, 64], sizes = [1, 8, 32], strides = [1, 1, 1]} : vector<1x8x256xf32> to vector<1x8x32xf32>
    %63 = vector.extract_strided_slice %4 {offsets = [0, 0, 64], sizes = [1, 8, 32], strides = [1, 1, 1]} : vector<1x8x256xf32> to vector<1x8x32xf32>
    "tpu.trace_start"() <{level = 10 : i32, message = "bqd,bkd->bqk"}> : () -> ()
    %cst_34 = arith.constant dense<0.000000e+00> : vector<1x8x8xf32>
    %64 = tpu.matmul %61, %62, %cst_34 {dimension_numbers = #tpu.dot_dimension_numbers<[2], [2], [1], [1], [0, 0, 0, 1, 1, 1], [0], [0]>} : vector<1x8x32xf32>, vector<1x8x32xf32>, vector<1x8x8xf32> -> vector<1x8x8xf32>
    "tpu.trace_stop"() : () -> ()
    %65 = arith.addf %64, %17 : vector<1x8x8xf32>
    %cst_35 = arith.constant dense<0xFF800000> : vector<1x8xf32>
    %66 = vector.multi_reduction <maximumf>, %65, %cst_35 [2] : vector<1x8x8xf32> to vector<1x8xf32>
    %67 = vector.shape_cast %66 : vector<1x8xf32> to vector<1x8x1xf32>
    %68 = vector.broadcast %67 : vector<1x8x1xf32> to vector<1x8x8xf32>
    %69 = arith.subf %65, %68 : vector<1x8x8xf32>
    %70 = math.exp %69 : vector<1x8x8xf32>
    %cst_36 = arith.constant dense<0.000000e+00> : vector<1x8xf32>
    %71 = vector.multi_reduction <add>, %70, %cst_36 [2] : vector<1x8x8xf32> to vector<1x8xf32>
    %72 = vector.shape_cast %71 : vector<1x8xf32> to vector<1x8x1xf32>
    %73 = tpu.reciprocal %72 {approx = true} : vector<1x8x1xf32> -> vector<1x8x1xf32>
    %74 = vector.broadcast %73 : vector<1x8x1xf32> to vector<1x8x8xf32>
    %75 = arith.mulf %70, %74 : vector<1x8x8xf32>
    "tpu.trace_start"() <{level = 10 : i32, message = "bqk,bkd->bqd"}> : () -> ()
    %cst_37 = arith.constant dense<0.000000e+00> : vector<1x8x32xf32>
    %76 = tpu.matmul %75, %63, %cst_37 {dimension_numbers = #tpu.dot_dimension_numbers<[2], [1], [1], [2], [0, 0, 0, 1, 1, 2], [0], [0]>} : vector<1x8x8xf32>, vector<1x8x32xf32>, vector<1x8x32xf32> -> vector<1x8x32xf32>
    "tpu.trace_stop"() : () -> ()
    %77 = vector.shape_cast %76 : vector<1x8x32xf32> to vector<8x32xf32>
    %c64 = arith.constant 64 : index
    %c0_38 = arith.constant 0 : index
    %78 = vector.load %arg8[%c64, %c0_38] : memref<256x256xf32, #tpu.memory_space<vmem>>, vector<32x256xf32>
    %cst_39 = arith.constant dense<0.000000e+00> : vector<8x256xf32>
    %79 = tpu.matmul %77, %78, %cst_39 {dimension_numbers = #tpu.dot_dimension_numbers<[1], [0], [0], [1], [0, 0, 1, 1], [], []>} : vector<8x32xf32>, vector<32x256xf32>, vector<8x256xf32> -> vector<8x256xf32>
    %80 = arith.addf %60, %79 : vector<8x256xf32>
    %81 = vector.extract_strided_slice %14 {offsets = [0, 0, 96], sizes = [1, 8, 32], strides = [1, 1, 1]} : vector<1x8x256xf32> to vector<1x8x32xf32>
    %82 = vector.extract_strided_slice %9 {offsets = [0, 0, 96], sizes = [1, 8, 32], strides = [1, 1, 1]} : vector<1x8x256xf32> to vector<1x8x32xf32>
    %83 = vector.extract_strided_slice %4 {offsets = [0, 0, 96], sizes = [1, 8, 32], strides = [1, 1, 1]} : vector<1x8x256xf32> to vector<1x8x32xf32>
    "tpu.trace_start"() <{level = 10 : i32, message = "bqd,bkd->bqk"}> : () -> ()
    %cst_40 = arith.constant dense<0.000000e+00> : vector<1x8x8xf32>
    %84 = tpu.matmul %81, %82, %cst_40 {dimension_numbers = #tpu.dot_dimension_numbers<[2], [2], [1], [1], [0, 0, 0, 1, 1, 1], [0], [0]>} : vector<1x8x32xf32>, vector<1x8x32xf32>, vector<1x8x8xf32> -> vector<1x8x8xf32>
    "tpu.trace_stop"() : () -> ()
    %85 = arith.addf %84, %17 : vector<1x8x8xf32>
    %cst_41 = arith.constant dense<0xFF800000> : vector<1x8xf32>
    %86 = vector.multi_reduction <maximumf>, %85, %cst_41 [2] : vector<1x8x8xf32> to vector<1x8xf32>
    %87 = vector.shape_cast %86 : vector<1x8xf32> to vector<1x8x1xf32>
    %88 = vector.broadcast %87 : vector<1x8x1xf32> to vector<1x8x8xf32>
    %89 = arith.subf %85, %88 : vector<1x8x8xf32>
    %90 = math.exp %89 : vector<1x8x8xf32>
    %cst_42 = arith.constant dense<0.000000e+00> : vector<1x8xf32>
    %91 = vector.multi_reduction <add>, %90, %cst_42 [2] : vector<1x8x8xf32> to vector<1x8xf32>
    %92 = vector.shape_cast %91 : vector<1x8xf32> to vector<1x8x1xf32>
    %93 = tpu.reciprocal %92 {approx = true} : vector<1x8x1xf32> -> vector<1x8x1xf32>
    %94 = vector.broadcast %93 : vector<1x8x1xf32> to vector<1x8x8xf32>
    %95 = arith.mulf %90, %94 : vector<1x8x8xf32>
    "tpu.trace_start"() <{level = 10 : i32, message = "bqk,bkd->bqd"}> : () -> ()
    %cst_43 = arith.constant dense<0.000000e+00> : vector<1x8x32xf32>
    %96 = tpu.matmul %95, %83, %cst_43 {dimension_numbers = #tpu.dot_dimension_numbers<[2], [1], [1], [2], [0, 0, 0, 1, 1, 2], [0], [0]>} : vector<1x8x8xf32>, vector<1x8x32xf32>, vector<1x8x32xf32> -> vector<1x8x32xf32>
    "tpu.trace_stop"() : () -> ()
    %97 = vector.shape_cast %96 : vector<1x8x32xf32> to vector<8x32xf32>
    %c96 = arith.constant 96 : index
    %c0_44 = arith.constant 0 : index
    %98 = vector.load %arg8[%c96, %c0_44] : memref<256x256xf32, #tpu.memory_space<vmem>>, vector<32x256xf32>
    %cst_45 = arith.constant dense<0.000000e+00> : vector<8x256xf32>
    %99 = tpu.matmul %97, %98, %cst_45 {dimension_numbers = #tpu.dot_dimension_numbers<[1], [0], [0], [1], [0, 0, 1, 1], [], []>} : vector<8x32xf32>, vector<32x256xf32>, vector<8x256xf32> -> vector<8x256xf32>
    %100 = arith.addf %80, %99 : vector<8x256xf32>
    %101 = vector.extract_strided_slice %14 {offsets = [0, 0, 128], sizes = [1, 8, 32], strides = [1, 1, 1]} : vector<1x8x256xf32> to vector<1x8x32xf32>
    %102 = vector.extract_strided_slice %9 {offsets = [0, 0, 128], sizes = [1, 8, 32], strides = [1, 1, 1]} : vector<1x8x256xf32> to vector<1x8x32xf32>
    %103 = vector.extract_strided_slice %4 {offsets = [0, 0, 128], sizes = [1, 8, 32], strides = [1, 1, 1]} : vector<1x8x256xf32> to vector<1x8x32xf32>
    "tpu.trace_start"() <{level = 10 : i32, message = "bqd,bkd->bqk"}> : () -> ()
    %cst_46 = arith.constant dense<0.000000e+00> : vector<1x8x8xf32>
    %104 = tpu.matmul %101, %102, %cst_46 {dimension_numbers = #tpu.dot_dimension_numbers<[2], [2], [1], [1], [0, 0, 0, 1, 1, 1], [0], [0]>} : vector<1x8x32xf32>, vector<1x8x32xf32>, vector<1x8x8xf32> -> vector<1x8x8xf32>
    "tpu.trace_stop"() : () -> ()
    %105 = arith.addf %104, %17 : vector<1x8x8xf32>
    %cst_47 = arith.constant dense<0xFF800000> : vector<1x8xf32>
    %106 = vector.multi_reduction <maximumf>, %105, %cst_47 [2] : vector<1x8x8xf32> to vector<1x8xf32>
    %107 = vector.shape_cast %106 : vector<1x8xf32> to vector<1x8x1xf32>
    %108 = vector.broadcast %107 : vector<1x8x1xf32> to vector<1x8x8xf32>
    %109 = arith.subf %105, %108 : vector<1x8x8xf32>
    %110 = math.exp %109 : vector<1x8x8xf32>
    %cst_48 = arith.constant dense<0.000000e+00> : vector<1x8xf32>
    %111 = vector.multi_reduction <add>, %110, %cst_48 [2] : vector<1x8x8xf32> to vector<1x8xf32>
    %112 = vector.shape_cast %111 : vector<1x8xf32> to vector<1x8x1xf32>
    %113 = tpu.reciprocal %112 {approx = true} : vector<1x8x1xf32> -> vector<1x8x1xf32>
    %114 = vector.broadcast %113 : vector<1x8x1xf32> to vector<1x8x8xf32>
    %115 = arith.mulf %110, %114 : vector<1x8x8xf32>
    "tpu.trace_start"() <{level = 10 : i32, message = "bqk,bkd->bqd"}> : () -> ()
    %cst_49 = arith.constant dense<0.000000e+00> : vector<1x8x32xf32>
    %116 = tpu.matmul %115, %103, %cst_49 {dimension_numbers = #tpu.dot_dimension_numbers<[2], [1], [1], [2], [0, 0, 0, 1, 1, 2], [0], [0]>} : vector<1x8x8xf32>, vector<1x8x32xf32>, vector<1x8x32xf32> -> vector<1x8x32xf32>
    "tpu.trace_stop"() : () -> ()
    %117 = vector.shape_cast %116 : vector<1x8x32xf32> to vector<8x32xf32>
    %c128 = arith.constant 128 : index
    %c0_50 = arith.constant 0 : index
    %118 = vector.load %arg8[%c128, %c0_50] : memref<256x256xf32, #tpu.memory_space<vmem>>, vector<32x256xf32>
    %cst_51 = arith.constant dense<0.000000e+00> : vector<8x256xf32>
    %119 = tpu.matmul %117, %118, %cst_51 {dimension_numbers = #tpu.dot_dimension_numbers<[1], [0], [0], [1], [0, 0, 1, 1], [], []>} : vector<8x32xf32>, vector<32x256xf32>, vector<8x256xf32> -> vector<8x256xf32>
    %120 = arith.addf %100, %119 : vector<8x256xf32>
    %121 = vector.extract_strided_slice %14 {offsets = [0, 0, 160], sizes = [1, 8, 32], strides = [1, 1, 1]} : vector<1x8x256xf32> to vector<1x8x32xf32>
    %122 = vector.extract_strided_slice %9 {offsets = [0, 0, 160], sizes = [1, 8, 32], strides = [1, 1, 1]} : vector<1x8x256xf32> to vector<1x8x32xf32>
    %123 = vector.extract_strided_slice %4 {offsets = [0, 0, 160], sizes = [1, 8, 32], strides = [1, 1, 1]} : vector<1x8x256xf32> to vector<1x8x32xf32>
    "tpu.trace_start"() <{level = 10 : i32, message = "bqd,bkd->bqk"}> : () -> ()
    %cst_52 = arith.constant dense<0.000000e+00> : vector<1x8x8xf32>
    %124 = tpu.matmul %121, %122, %cst_52 {dimension_numbers = #tpu.dot_dimension_numbers<[2], [2], [1], [1], [0, 0, 0, 1, 1, 1], [0], [0]>} : vector<1x8x32xf32>, vector<1x8x32xf32>, vector<1x8x8xf32> -> vector<1x8x8xf32>
    "tpu.trace_stop"() : () -> ()
    %125 = arith.addf %124, %17 : vector<1x8x8xf32>
    %cst_53 = arith.constant dense<0xFF800000> : vector<1x8xf32>
    %126 = vector.multi_reduction <maximumf>, %125, %cst_53 [2] : vector<1x8x8xf32> to vector<1x8xf32>
    %127 = vector.shape_cast %126 : vector<1x8xf32> to vector<1x8x1xf32>
    %128 = vector.broadcast %127 : vector<1x8x1xf32> to vector<1x8x8xf32>
    %129 = arith.subf %125, %128 : vector<1x8x8xf32>
    %130 = math.exp %129 : vector<1x8x8xf32>
    %cst_54 = arith.constant dense<0.000000e+00> : vector<1x8xf32>
    %131 = vector.multi_reduction <add>, %130, %cst_54 [2] : vector<1x8x8xf32> to vector<1x8xf32>
    %132 = vector.shape_cast %131 : vector<1x8xf32> to vector<1x8x1xf32>
    %133 = tpu.reciprocal %132 {approx = true} : vector<1x8x1xf32> -> vector<1x8x1xf32>
    %134 = vector.broadcast %133 : vector<1x8x1xf32> to vector<1x8x8xf32>
    %135 = arith.mulf %130, %134 : vector<1x8x8xf32>
    "tpu.trace_start"() <{level = 10 : i32, message = "bqk,bkd->bqd"}> : () -> ()
    %cst_55 = arith.constant dense<0.000000e+00> : vector<1x8x32xf32>
    %136 = tpu.matmul %135, %123, %cst_55 {dimension_numbers = #tpu.dot_dimension_numbers<[2], [1], [1], [2], [0, 0, 0, 1, 1, 2], [0], [0]>} : vector<1x8x8xf32>, vector<1x8x32xf32>, vector<1x8x32xf32> -> vector<1x8x32xf32>
    "tpu.trace_stop"() : () -> ()
    %137 = vector.shape_cast %136 : vector<1x8x32xf32> to vector<8x32xf32>
    %c160 = arith.constant 160 : index
    %c0_56 = arith.constant 0 : index
    %138 = vector.load %arg8[%c160, %c0_56] : memref<256x256xf32, #tpu.memory_space<vmem>>, vector<32x256xf32>
    %cst_57 = arith.constant dense<0.000000e+00> : vector<8x256xf32>
    %139 = tpu.matmul %137, %138, %cst_57 {dimension_numbers = #tpu.dot_dimension_numbers<[1], [0], [0], [1], [0, 0, 1, 1], [], []>} : vector<8x32xf32>, vector<32x256xf32>, vector<8x256xf32> -> vector<8x256xf32>
    %140 = arith.addf %120, %139 : vector<8x256xf32>
    %141 = vector.extract_strided_slice %14 {offsets = [0, 0, 192], sizes = [1, 8, 32], strides = [1, 1, 1]} : vector<1x8x256xf32> to vector<1x8x32xf32>
    %142 = vector.extract_strided_slice %9 {offsets = [0, 0, 192], sizes = [1, 8, 32], strides = [1, 1, 1]} : vector<1x8x256xf32> to vector<1x8x32xf32>
    %143 = vector.extract_strided_slice %4 {offsets = [0, 0, 192], sizes = [1, 8, 32], strides = [1, 1, 1]} : vector<1x8x256xf32> to vector<1x8x32xf32>
    "tpu.trace_start"() <{level = 10 : i32, message = "bqd,bkd->bqk"}> : () -> ()
    %cst_58 = arith.constant dense<0.000000e+00> : vector<1x8x8xf32>
    %144 = tpu.matmul %141, %142, %cst_58 {dimension_numbers = #tpu.dot_dimension_numbers<[2], [2], [1], [1], [0, 0, 0, 1, 1, 1], [0], [0]>} : vector<1x8x32xf32>, vector<1x8x32xf32>, vector<1x8x8xf32> -> vector<1x8x8xf32>
    "tpu.trace_stop"() : () -> ()
    %145 = arith.addf %144, %17 : vector<1x8x8xf32>
    %cst_59 = arith.constant dense<0xFF800000> : vector<1x8xf32>
    %146 = vector.multi_reduction <maximumf>, %145, %cst_59 [2] : vector<1x8x8xf32> to vector<1x8xf32>
    %147 = vector.shape_cast %146 : vector<1x8xf32> to vector<1x8x1xf32>
    %148 = vector.broadcast %147 : vector<1x8x1xf32> to vector<1x8x8xf32>
    %149 = arith.subf %145, %148 : vector<1x8x8xf32>
    %150 = math.exp %149 : vector<1x8x8xf32>
    %cst_60 = arith.constant dense<0.000000e+00> : vector<1x8xf32>
    %151 = vector.multi_reduction <add>, %150, %cst_60 [2] : vector<1x8x8xf32> to vector<1x8xf32>
    %152 = vector.shape_cast %151 : vector<1x8xf32> to vector<1x8x1xf32>
    %153 = tpu.reciprocal %152 {approx = true} : vector<1x8x1xf32> -> vector<1x8x1xf32>
    %154 = vector.broadcast %153 : vector<1x8x1xf32> to vector<1x8x8xf32>
    %155 = arith.mulf %150, %154 : vector<1x8x8xf32>
    "tpu.trace_start"() <{level = 10 : i32, message = "bqk,bkd->bqd"}> : () -> ()
    %cst_61 = arith.constant dense<0.000000e+00> : vector<1x8x32xf32>
    %156 = tpu.matmul %155, %143, %cst_61 {dimension_numbers = #tpu.dot_dimension_numbers<[2], [1], [1], [2], [0, 0, 0, 1, 1, 2], [0], [0]>} : vector<1x8x8xf32>, vector<1x8x32xf32>, vector<1x8x32xf32> -> vector<1x8x32xf32>
    "tpu.trace_stop"() : () -> ()
    %157 = vector.shape_cast %156 : vector<1x8x32xf32> to vector<8x32xf32>
    %c192 = arith.constant 192 : index
    %c0_62 = arith.constant 0 : index
    %158 = vector.load %arg8[%c192, %c0_62] : memref<256x256xf32, #tpu.memory_space<vmem>>, vector<32x256xf32>
    %cst_63 = arith.constant dense<0.000000e+00> : vector<8x256xf32>
    %159 = tpu.matmul %157, %158, %cst_63 {dimension_numbers = #tpu.dot_dimension_numbers<[1], [0], [0], [1], [0, 0, 1, 1], [], []>} : vector<8x32xf32>, vector<32x256xf32>, vector<8x256xf32> -> vector<8x256xf32>
    %160 = arith.addf %140, %159 : vector<8x256xf32>
    %161 = vector.extract_strided_slice %14 {offsets = [0, 0, 224], sizes = [1, 8, 32], strides = [1, 1, 1]} : vector<1x8x256xf32> to vector<1x8x32xf32>
    %162 = vector.extract_strided_slice %9 {offsets = [0, 0, 224], sizes = [1, 8, 32], strides = [1, 1, 1]} : vector<1x8x256xf32> to vector<1x8x32xf32>
    %163 = vector.extract_strided_slice %4 {offsets = [0, 0, 224], sizes = [1, 8, 32], strides = [1, 1, 1]} : vector<1x8x256xf32> to vector<1x8x32xf32>
    "tpu.trace_start"() <{level = 10 : i32, message = "bqd,bkd->bqk"}> : () -> ()
    %cst_64 = arith.constant dense<0.000000e+00> : vector<1x8x8xf32>
    %164 = tpu.matmul %161, %162, %cst_64 {dimension_numbers = #tpu.dot_dimension_numbers<[2], [2], [1], [1], [0, 0, 0, 1, 1, 1], [0], [0]>} : vector<1x8x32xf32>, vector<1x8x32xf32>, vector<1x8x8xf32> -> vector<1x8x8xf32>
    "tpu.trace_stop"() : () -> ()
    %165 = arith.addf %164, %17 : vector<1x8x8xf32>
    %cst_65 = arith.constant dense<0xFF800000> : vector<1x8xf32>
    %166 = vector.multi_reduction <maximumf>, %165, %cst_65 [2] : vector<1x8x8xf32> to vector<1x8xf32>
    %167 = vector.shape_cast %166 : vector<1x8xf32> to vector<1x8x1xf32>
    %168 = vector.broadcast %167 : vector<1x8x1xf32> to vector<1x8x8xf32>
    %169 = arith.subf %165, %168 : vector<1x8x8xf32>
    %170 = math.exp %169 : vector<1x8x8xf32>
    %cst_66 = arith.constant dense<0.000000e+00> : vector<1x8xf32>
    %171 = vector.multi_reduction <add>, %170, %cst_66 [2] : vector<1x8x8xf32> to vector<1x8xf32>
    %172 = vector.shape_cast %171 : vector<1x8xf32> to vector<1x8x1xf32>
    %173 = tpu.reciprocal %172 {approx = true} : vector<1x8x1xf32> -> vector<1x8x1xf32>
    %174 = vector.broadcast %173 : vector<1x8x1xf32> to vector<1x8x8xf32>
    %175 = arith.mulf %170, %174 : vector<1x8x8xf32>
    "tpu.trace_start"() <{level = 10 : i32, message = "bqk,bkd->bqd"}> : () -> ()
    %cst_67 = arith.constant dense<0.000000e+00> : vector<1x8x32xf32>
    %176 = tpu.matmul %175, %163, %cst_67 {dimension_numbers = #tpu.dot_dimension_numbers<[2], [1], [1], [2], [0, 0, 0, 1, 1, 2], [0], [0]>} : vector<1x8x8xf32>, vector<1x8x32xf32>, vector<1x8x32xf32> -> vector<1x8x32xf32>
    "tpu.trace_stop"() : () -> ()
    %177 = vector.shape_cast %176 : vector<1x8x32xf32> to vector<8x32xf32>
    %c224 = arith.constant 224 : index
    %c0_68 = arith.constant 0 : index
    %178 = vector.load %arg8[%c224, %c0_68] : memref<256x256xf32, #tpu.memory_space<vmem>>, vector<32x256xf32>
    %cst_69 = arith.constant dense<0.000000e+00> : vector<8x256xf32>
    %179 = tpu.matmul %177, %178, %cst_69 {dimension_numbers = #tpu.dot_dimension_numbers<[1], [0], [0], [1], [0, 0, 1, 1], [], []>} : vector<8x32xf32>, vector<32x256xf32>, vector<8x256xf32> -> vector<8x256xf32>
    %180 = arith.addf %160, %179 : vector<8x256xf32>
    %181 = vector.shape_cast %180 : vector<8x256xf32> to vector<1x8x256xf32>
    %c0_70 = arith.constant 0 : index
    %c0_71 = arith.constant 0 : index
    %c0_72 = arith.constant 0 : index
    %182 = vector.load %arg10[%c0_70, %c0_71, %c0_72] : memref<1x8x256xf32, #tpu.memory_space<vmem>>, vector<1x8x256xf32>
    tpu.vector_store %arg10[%c0_70, %c0_71, %c0_72], %181 {strides = array<i32>} : memref<1x8x256xf32, #tpu.memory_space<vmem>>, vector<1x8x256xf32>,
    return
  }
  func.func @transform_0(%arg0: i32) -> (i32, i32, i32) {
    %c0_i32 = arith.constant 0 : i32
    %c0_i32_0 = arith.constant 0 : i32
    %c0_i32_1 = arith.constant 0 : i32
    return %arg0, %c0_i32, %c0_i32_0 : i32, i32, i32
  }
  func.func @transform_1(%arg0: i32) -> (i32, i32, i32) {
    %c0_i32 = arith.constant 0 : i32
    %c0_i32_0 = arith.constant 0 : i32
    %c0_i32_1 = arith.constant 0 : i32
    return %arg0, %c0_i32, %c0_i32_0 : i32, i32, i32
  }
  func.func @transform_2(%arg0: i32) -> (i32, i32, i32) {
    %c0_i32 = arith.constant 0 : i32
    %c0_i32_0 = arith.constant 0 : i32
    %c0_i32_1 = arith.constant 0 : i32
    return %arg0, %c0_i32, %c0_i32_0 : i32, i32, i32
  }
  func.func @transform_3(%arg0: i32) -> (i32, i32, i32) {
    %c0_i32 = arith.constant 0 : i32
    %c0_i32_0 = arith.constant 0 : i32
    %c0_i32_1 = arith.constant 0 : i32
    return %arg0, %c0_i32, %c0_i32_0 : i32, i32, i32
  }
  func.func @transform_4(%arg0: i32) -> (i32, i32) {
    %c0_i32 = arith.constant 0 : i32
    %c0_i32_0 = arith.constant 0 : i32
    %c0_i32_1 = arith.constant 0 : i32
    return %c0_i32, %c0_i32_0 : i32, i32
  }
  func.func @transform_5(%arg0: i32) -> (i32, i32) {
    %c0_i32 = arith.constant 0 : i32
    %c0_i32_0 = arith.constant 0 : i32
    %c0_i32_1 = arith.constant 0 : i32
    return %c0_i32, %c0_i32_0 : i32, i32
  }
  func.func @transform_6(%arg0: i32) -> (i32, i32) {
    %c0_i32 = arith.constant 0 : i32
    %c0_i32_0 = arith.constant 0 : i32
    %c0_i32_1 = arith.constant 0 : i32
    return %c0_i32, %c0_i32_0 : i32, i32
  }
  func.func @transform_7(%arg0: i32) -> (i32, i32) {
    %c0_i32 = arith.constant 0 : i32
    %c0_i32_0 = arith.constant 0 : i32
    %c0_i32_1 = arith.constant 0 : i32
    return %c0_i32, %c0_i32_0 : i32, i32
  }
  func.func @transform_8(%arg0: i32) -> (i32, i32) {
    %c0_i32 = arith.constant 0 : i32
    %c0_i32_0 = arith.constant 0 : i32
    %c0_i32_1 = arith.constant 0 : i32
    return %c0_i32, %c0_i32_0 : i32, i32
  }
  func.func @transform_9(%arg0: i32) -> (i32, i32, i32) {
    %c0_i32 = arith.constant 0 : i32
    %c0_i32_0 = arith.constant 0 : i32
    %c0_i32_1 = arith.constant 0 : i32
    return %arg0, %c0_i32, %c0_i32_0 : i32, i32, i32
  }
}

</mosaic_0001>

<llo_original>
// kernel: tpu_custom_call.1
$region0: #{tpu_custom_call.1}
  #allocation0 [shape = 'u32[]', space=smem, size = 0x4, offset = 0x4, fixed_abs, tag = 'smem constant byte address 0x4 - core index']
  #allocation1 [shape = 'u32[144,128]{1,0:T(1,128)}', space=vmem, size = 0x12000, scoped, tag = 'internal scratch']
  %s0 = inlined_call_operand.hbm [shape: f32[2,1,8], index: 0, kind: input, shape index: {}]
  %s1 = inlined_call_operand.hbm [shape: f32[2,8,256], index: 1, kind: input, shape index: {}]
  %s2 = inlined_call_operand.hbm [shape: f32[2,8,256], index: 2, kind: input, shape index: {}]
  %s3 = inlined_call_operand.hbm [shape: f32[2,8,256], index: 3, kind: input, shape index: {}]
  %s4 = inlined_call_operand.hbm [shape: f32[256,256], index: 4, kind: input, shape index: {}]
  %s5 = inlined_call_operand.hbm [shape: f32[256,256], index: 5, kind: input, shape index: {}]
  %s6 = inlined_call_operand.hbm [shape: f32[256,256], index: 6, kind: input, shape index: {}]
  %s7 = inlined_call_operand.hbm [shape: f32[256,256], index: 7, kind: input, shape index: {}]
  %s8 = inlined_call_operand.vmem [shape: f32[1,256], index: 8, kind: input, shape index: {}]
  %s9 = inlined_call_operand.hbm [shape: f32[2,8,256], index: 9, kind: output, shape index: {}]
  %s10 = sld [smem:[#allocation0]]
  $region101: #{tpu_custom_call.1} parent=0
    _
  %s12 = ssub.s32 1, %s10
  %s13 = scalar_select 0, %s12, %s10
  $region1: #{tpu_custom_call.1} parent=0
    #allocation2 [shape = 'u8[1024]{0}', space=vmem, size = 0x400, scoped, tag = 'input window, operand 0']
    #allocation3 [shape = 's32[2]{0}', space=sflag, size = 0x8, scoped, tag = 'scoped memory for tpu_custom_call.1']
    #allocation4 [shape = 's32[2]{0}', space=sflag, size = 0x8, scoped, tag = 'scoped memory for tpu_custom_call.1']
    #allocation5 [shape = 'u8[16384]{0}', space=vmem, size = 0x4000, scoped, tag = 'input window, operand 1']
    #allocation6 [shape = 's32[2]{0}', space=sflag, size = 0x8, scoped, tag = 'scoped memory for tpu_custom_call.1']
    #allocation7 [shape = 'u8[16384]{0}', space=vmem, size = 0x4000, scoped, tag = 'input window, operand 2']
    #allocation8 [shape = 'u8[16384]{0}', space=vmem, size = 0x4000, scoped, tag = 'input window, operand 3']
    #allocation9 [shape = 's32[2]{0}', space=sflag, size = 0x8, scoped, tag = 'scoped memory for tpu_custom_call.1']
    #allocation10 [shape = 'u8[262144]{0}', space=vmem, size = 0x40000, scoped, tag = 'input window, operand 4, single buffered']
    #allocation11 [shape = 'u8[262144]{0}', space=vmem, size = 0x40000, scoped, tag = 'input window, operand 5, single buffered']
    #allocation12 [shape = 's32[1]{0}', space=sflag, size = 0x4, scoped, tag = 'scoped memory for tpu_custom_call.1']
    #allocation13 [shape = 'u8[262144]{0}', space=vmem, size = 0x40000, scoped, tag = 'input window, operand 6, single buffered']
    #allocation14 [shape = 'u8[262144]{0}', space=vmem, size = 0x40000, scoped, tag = 'input window, operand 7, single buffered']
    #allocation15 [shape = 's32[1]{0}', space=sflag, size = 0x4, scoped, tag = 'scoped memory for tpu_custom_call.1']
    #allocation16 [shape = 'u8[16384]{0}', space=vmem, size = 0x4000, scoped, tag = 'output window, operand 0']
    %14 = vsyncpa [#allocation3], 0
    %s15 = scalar_lea.sflag [#allocation3], 1
    %16 = vsyncpa %s15, 0
    %17 = vsyncpa [#allocation6], 0
    %s18 = scalar_lea.sflag [#allocation6], 1
    %19 = vsyncpa %s18, 0
    %20 = vsyncpa [#allocation9], 0
    %s21 = scalar_lea.sflag [#allocation9], 1
    %22 = vsyncpa %s21, 0
    %23 = vsyncpa [#allocation12], 0
    %24 = vsyncpa [#allocation15], 0
    %25 = vsyncpa [#allocation4], 0
    %s26 = scalar_lea.sflag [#allocation4], 1
    %27 = vsyncpa %s26, 0
    loop: start=0, step=1, limit=4
    $region2: #{tpu_custom_call.1} parent=1 // loop_pre_header
      _
    $region3: #{tpu_custom_call.1} parent=1 // loop_header
      %s29 = sphi 0, %s33
      %p30 = scmp.ge.s32.totalorder %s29, 4
      %s39 = sphi 0, %s41
      %s42 = sphi 0, %s39
      %s43 = sphi 0, %s42
      %s59 = sphi 0, %s43
      %s65 = sphi 0, %s67
      %s68 = sphi 0, %s65
      %s69 = sphi 0, %s68
      %s85 = sphi 0, %s69
      %s91 = sphi 0, %s93
      %s94 = sphi 0, %s91
      %s95 = sphi 0, %s94
      %s111 = sphi 0, %s95
      %s117 = sphi 0, %s119
      %s120 = sphi 0, %s117
      %s121 = sphi 0, %s120
      %s137 = sphi 0, %s121
      %s141 = sphi 0, %s141
      %s143 = sphi 0, %s141
      %s144 = sphi 0, %s143
      %s158 = sphi 0, %s144
      %s162 = sphi 0, %s162
      %s164 = sphi 0, %s162
      %s165 = sphi 0, %s164
      %s179 = sphi 0, %s165
      %s183 = sphi 0, %s183
      %s185 = sphi 0, %s183
      %s186 = sphi 0, %s185
      %s200 = sphi 0, %s186
      %s204 = sphi 0, %s204
      %s206 = sphi 0, %s204
      %s207 = sphi 0, %s206
      %s221 = sphi 0, %s207
      %s225 = sphi 0, %s225
      %s227 = sphi 0, %s225
      %s228 = sphi 0, %s227
      %s242 = sphi 0, %s228
      %s248 = sphi 0, %s250
      %s251 = sphi 0, %s248
      %s252 = sphi 0, %s251
      %s268 = sphi 0, %s252
    $region4: #{tpu_custom_call.1} parent=1 // loop_header_branch
      %32 = sbr.rel (%p30) target = $region8
    $region5: #{tpu_custom_call.1} parent=1 // loop_body
      %s34 = ssub.s32 %s29, 1
      %s35 = ssub.s32 %s29, 2
      %s36 = sadd.s32 %s29, 1
      %s37 = ssub.s32 %s29, %s36
      %p38 = scmp.eq.s32.totalorder %s37, 0
      %s40 = sadd.s32 %s39, 1
      %s41 = scalar_select %p38, %s39, %s40
      %p44 = pneg %p38
      %p45 = scmp.eq.s32.totalorder %s29, 1
      %p46 = por %p44, %p45
      %p47 = scmp.ne.s32.totalorder %s39, %s42
      %p48 = scmp.eq.s32.totalorder %s29, 0
      %p49 = por %p47, %p48
      %p50 = scmp.ne.s32.totalorder %s39, %s42
      %p51 = scmp.eq.s32.totalorder %s34, 1
      %p52 = por %p50, %p51
      %p53 = scmp.ne.s32.totalorder %s42, %s43
      %p54 = scmp.eq.s32.totalorder %s34, 0
      %p55 = por %p53, %p54
      %p56 = scmp.ne.s32.totalorder %s42, %s43
      %p57 = scmp.eq.s32.totalorder %s35, 1
      %p58 = por %p56, %p57
      %p60 = scmp.ne.s32.totalorder %s43, %s59
      %p61 = scmp.eq.s32.totalorder %s35, 0
      %p62 = por %p60, %p61
      %s63 = ssub.s32 %s29, %s36
      %p64 = scmp.eq.s32.totalorder %s63, 0
      %s66 = sadd.s32 %s65, 1
      %s67 = scalar_select %p64, %s65, %s66
      %p70 = pneg %p64
      %p71 = scmp.eq.s32.totalorder %s29, 1
      %p72 = por %p70, %p71
      %p73 = scmp.ne.s32.totalorder %s65, %s68
      %p74 = scmp.eq.s32.totalorder %s29, 0
      %p75 = por %p73, %p74
      %p76 = scmp.ne.s32.totalorder %s65, %s68
      %p77 = scmp.eq.s32.totalorder %s34, 1
      %p78 = por %p76, %p77
      %p79 = scmp.ne.s32.totalorder %s68, %s69
      %p80 = scmp.eq.s32.totalorder %s34, 0
      %p81 = por %p79, %p80
      %p82 = scmp.ne.s32.totalorder %s68, %s69
      %p83 = scmp.eq.s32.totalorder %s35, 1
      %p84 = por %p82, %p83
      %p86 = scmp.ne.s32.totalorder %s69, %s85
      %p87 = scmp.eq.s32.totalorder %s35, 0
      %p88 = por %p86, %p87
      %s89 = ssub.s32 %s29, %s36
      %p90 = scmp.eq.s32.totalorder %s89, 0
      %s92 = sadd.s32 %s91, 1
      %s93 = scalar_select %p90, %s91, %s92
      %p96 = pneg %p90
      %p97 = scmp.eq.s32.totalorder %s29, 1
      %p98 = por %p96, %p97
      %p99 = scmp.ne.s32.totalorder %s91, %s94
      %p100 = scmp.eq.s32.totalorder %s29, 0
      %p101 = por %p99, %p100
      %p102 = scmp.ne.s32.totalorder %s91, %s94
      %p103 = scmp.eq.s32.totalorder %s34, 1
      %p104 = por %p102, %p103
      %p105 = scmp.ne.s32.totalorder %s94, %s95
      %p106 = scmp.eq.s32.totalorder %s34, 0
      %p107 = por %p105, %p106
      %p108 = scmp.ne.s32.totalorder %s94, %s95
      %p109 = scmp.eq.s32.totalorder %s35, 1
      %p110 = por %p108, %p109
      %p112 = scmp.ne.s32.totalorder %s95, %s111
      %p113 = scmp.eq.s32.totalorder %s35, 0
      %p114 = por %p112, %p113
      %s115 = ssub.s32 %s29, %s36
      %p116 = scmp.eq.s32.totalorder %s115, 0
      %s118 = sadd.s32 %s117, 1
      %s119 = scalar_select %p116, %s117, %s118
      %p122 = pneg %p116
      %p123 = scmp.eq.s32.totalorder %s29, 1
      %p124 = por %p122, %p123
      %p125 = scmp.ne.s32.totalorder %s117, %s120
      %p126 = scmp.eq.s32.totalorder %s29, 0
      %p127 = por %p125, %p126
      %p128 = scmp.ne.s32.totalorder %s117, %s120
      %p129 = scmp.eq.s32.totalorder %s34, 1
      %p130 = por %p128, %p129
      %p131 = scmp.ne.s32.totalorder %s120, %s121
      %p132 = scmp.eq.s32.totalorder %s34, 0
      %p133 = por %p131, %p132
      %p134 = scmp.ne.s32.totalorder %s120, %s121
      %p135 = scmp.eq.s32.totalorder %s35, 1
      %p136 = por %p134, %p135
      %p138 = scmp.ne.s32.totalorder %s121, %s137
      %p139 = scmp.eq.s32.totalorder %s35, 0
      %p140 = por %p138, %p139
      %s142 = sadd.s32 %s141, 1
      %p145 = scmp.eq.s32.totalorder %s29, 1
      %p146 = scmp.ne.s32.totalorder %s141, %s143
      %p147 = scmp.eq.s32.totalorder %s29, 0
      %p148 = por %p146, %p147
      %p149 = scmp.ne.s32.totalorder %s141, %s143
      %p150 = scmp.eq.s32.totalorder %s34, 1
      %p151 = por %p149, %p150
      %p152 = scmp.ne.s32.totalorder %s143, %s144
      %p153 = scmp.eq.s32.totalorder %s34, 0
      %p154 = por %p152, %p153
      %p155 = scmp.ne.s32.totalorder %s143, %s144
      %p156 = scmp.eq.s32.totalorder %s35, 1
      %p157 = por %p155, %p156
      %p159 = scmp.ne.s32.totalorder %s144, %s158
      %p160 = scmp.eq.s32.totalorder %s35, 0
      %p161 = por %p159, %p160
      %s163 = sadd.s32 %s162, 1
      %p166 = scmp.eq.s32.totalorder %s29, 1
      %p167 = scmp.ne.s32.totalorder %s162, %s164
      %p168 = scmp.eq.s32.totalorder %s29, 0
      %p169 = por %p167, %p168
      %p170 = scmp.ne.s32.totalorder %s162, %s164
      %p171 = scmp.eq.s32.totalorder %s34, 1
      %p172 = por %p170, %p171
      %p173 = scmp.ne.s32.totalorder %s164, %s165
      %p174 = scmp.eq.s32.totalorder %s34, 0
      %p175 = por %p173, %p174
      %p176 = scmp.ne.s32.totalorder %s164, %s165
      %p177 = scmp.eq.s32.totalorder %s35, 1
      %p178 = por %p176, %p177
      %p180 = scmp.ne.s32.totalorder %s165, %s179
      %p181 = scmp.eq.s32.totalorder %s35, 0
      %p182 = por %p180, %p181
      %s184 = sadd.s32 %s183, 1
      %p187 = scmp.eq.s32.totalorder %s29, 1
      %p188 = scmp.ne.s32.totalorder %s183, %s185
      %p189 = scmp.eq.s32.totalorder %s29, 0
      %p190 = por %p188, %p189
      %p191 = scmp.ne.s32.totalorder %s183, %s185
      %p192 = scmp.eq.s32.totalorder %s34, 1
      %p193 = por %p191, %p192
      %p194 = scmp.ne.s32.totalorder %s185, %s186
      %p195 = scmp.eq.s32.totalorder %s34, 0
      %p196 = por %p194, %p195
      %p197 = scmp.ne.s32.totalorder %s185, %s186
      %p198 = scmp.eq.s32.totalorder %s35, 1
      %p199 = por %p197, %p198
      %p201 = scmp.ne.s32.totalorder %s186, %s200
      %p202 = scmp.eq.s32.totalorder %s35, 0
      %p203 = por %p201, %p202
      %s205 = sadd.s32 %s204, 1
      %p208 = scmp.eq.s32.totalorder %s29, 1
      %p209 = scmp.ne.s32.totalorder %s204, %s206
      %p210 = scmp.eq.s32.totalorder %s29, 0
      %p211 = por %p209, %p210
      %p212 = scmp.ne.s32.totalorder %s204, %s206
      %p213 = scmp.eq.s32.totalorder %s34, 1
      %p214 = por %p212, %p213
      %p215 = scmp.ne.s32.totalorder %s206, %s207
      %p216 = scmp.eq.s32.totalorder %s34, 0
      %p217 = por %p215, %p216
      %p218 = scmp.ne.s32.totalorder %s206, %s207
      %p219 = scmp.eq.s32.totalorder %s35, 1
      %p220 = por %p218, %p219
      %p222 = scmp.ne.s32.totalorder %s207, %s221
      %p223 = scmp.eq.s32.totalorder %s35, 0
      %p224 = por %p222, %p223
      %s226 = sadd.s32 %s225, 1
      %p229 = scmp.eq.s32.totalorder %s29, 1
      %p230 = scmp.ne.s32.totalorder %s225, %s227
      %p231 = scmp.eq.s32.totalorder %s29, 0
      %p232 = por %p230, %p231
      %p233 = scmp.ne.s32.totalorder %s225, %s227
      %p234 = scmp.eq.s32.totalorder %s34, 1
      %p235 = por %p233, %p234
      %p236 = scmp.ne.s32.totalorder %s227, %s228
      %p237 = scmp.eq.s32.totalorder %s34, 0
      %p238 = por %p236, %p237
      %p239 = scmp.ne.s32.totalorder %s227, %s228
      %p240 = scmp.eq.s32.totalorder %s35, 1
      %p241 = por %p239, %p240
      %p243 = scmp.ne.s32.totalorder %s228, %s242
      %p244 = scmp.eq.s32.totalorder %s35, 0
      %p245 = por %p243, %p244
      %s246 = ssub.s32 %s29, %s36
      %p247 = scmp.eq.s32.totalorder %s246, 0
      %s249 = sadd.s32 %s248, 1
      %s250 = scalar_select %p247, %s248, %s249
      %p253 = pneg %p247
      %p254 = scmp.eq.s32.totalorder %s29, 1
      %p255 = por %p253, %p254
      %p256 = scmp.ne.s32.totalorder %s248, %s251
      %p257 = scmp.eq.s32.totalorder %s29, 0
      %p258 = por %p256, %p257
      %p259 = scmp.ne.s32.totalorder %s248, %s251
      %p260 = scmp.eq.s32.totalorder %s34, 1
      %p261 = por %p259, %p260
      %p262 = scmp.ne.s32.totalorder %s251, %s252
      %p263 = scmp.eq.s32.totalorder %s34, 0
      %p264 = por %p262, %p263
      %p265 = scmp.ne.s32.totalorder %s251, %s252
      %p266 = scmp.eq.s32.totalorder %s35, 1
      %p267 = por %p265, %p266
      %p269 = scmp.ne.s32.totalorder %s252, %s268
      %p270 = scmp.eq.s32.totalorder %s35, 0
      %p271 = por %p269, %p270
      %p272 = scmp.le.s32.totalorder 1, %s29
      %p273 = scmp.lt.s32.totalorder %s29, 3
      %p274 = pnand %p272, %p273
      %p275 = pneg %p274
      // Predicated region
      $region9: #{tpu_custom_call.1} parent=5 // pred_check
        _
      $region10: #{tpu_custom_call.1} parent=5 // pred_check_branch
        %277 = sbr.rel (%p274) target = $region12
      $region11: #{tpu_custom_call.1} parent=5 // pred_region
        %s278 = ssub.s32 %s29, 1
        // Predicated region
        $region13: #{tpu_custom_call.1} parent=11 // pred_check
          %p279 = pneg %p154
        $region14: #{tpu_custom_call.1} parent=11 // pred_check_branch
          %281 = sbr.rel (%p279) target = $region16
        $region15: #{tpu_custom_call.1} parent=11 // pred_region
          %s283 = ssub.s32 8192, 8192
          %284 = vsyncadd [#allocation9], %s283
          %s285 = sshll.u32 [#allocation10], 4
          %s286 = int_to_ptr.vmem [resolvable:$true] %s285
          %291 = dma.hbm_to_vmem [thread:$0]  %s4, 8192, %s286, [#allocation9], 256, 256, 16
        $region16: #{tpu_custom_call.1} parent=11 // pred_fallthru
          _
        // Predicated region
        $region17: #{tpu_custom_call.1} parent=11 // pred_check
          %p292 = pneg %p175
        $region18: #{tpu_custom_call.1} parent=11 // pred_check_branch
          %294 = sbr.rel (%p292) target = $region20
        $region19: #{tpu_custom_call.1} parent=11 // pred_region
          %s296 = ssub.s32 8192, 8192
          %297 = vsyncadd [#allocation12], %s296
          %s298 = sshll.u32 [#allocation11], 4
          %s299 = int_to_ptr.vmem [resolvable:$true] %s298
          %304 = dma.hbm_to_vmem [thread:$0]  %s5, 8192, %s299, [#allocation12], 256, 256, 16
        $region20: #{tpu_custom_call.1} parent=11 // pred_fallthru
          _
        // Predicated region
        $region21: #{tpu_custom_call.1} parent=11 // pred_check
          %p305 = pneg %p196
        $region22: #{tpu_custom_call.1} parent=11 // pred_check_branch
          %307 = sbr.rel (%p305) target = $region24
        $region23: #{tpu_custom_call.1} parent=11 // pred_region
          %s309 = ssub.s32 8192, 8192
          %310 = vsyncadd [#allocation12], %s309
          %s311 = sshll.u32 [#allocation13], 4
          %s312 = int_to_ptr.vmem [resolvable:$true] %s311
          %317 = dma.hbm_to_vmem [thread:$0]  %s6, 8192, %s312, [#allocation12], 256, 256, 16
        $region24: #{tpu_custom_call.1} parent=11 // pred_fallthru
          _
        // Predicated region
        $region25: #{tpu_custom_call.1} parent=11 // pred_check
          %p318 = pneg %p217
        $region26: #{tpu_custom_call.1} parent=11 // pred_check_branch
          %320 = sbr.rel (%p318) target = $region28
        $region27: #{tpu_custom_call.1} parent=11 // pred_region
          %s322 = ssub.s32 8192, 8192
          %323 = vsyncadd [#allocation15], %s322
          %s324 = sshll.u32 [#allocation14], 4
          %s325 = int_to_ptr.vmem [resolvable:$true] %s324
          %330 = dma.hbm_to_vmem [thread:$0]  %s7, 8192, %s325, [#allocation15], 256, 256, 16
        $region28: #{tpu_custom_call.1} parent=11 // pred_fallthru
          _
        // Predicated region
        $region29: #{tpu_custom_call.1} parent=11 // pred_check
          %p331 = pneg %p238
        $region30: #{tpu_custom_call.1} parent=11 // pred_check_branch
          %333 = sbr.rel (%p331) target = $region32
        $region31: #{tpu_custom_call.1} parent=11 // pred_region
          _
        $region32: #{tpu_custom_call.1} parent=11 // pred_fallthru
          _
      $region12: #{tpu_custom_call.1} parent=5 // pred_fallthru
        _
      %p334 = scmp.lt.s32.totalorder %s29, 2
      // Predicated region
      $region33: #{tpu_custom_call.1} parent=5 // pred_check
        %p335 = pneg %p334
      $region34: #{tpu_custom_call.1} parent=5 // pred_check_branch
        %337 = sbr.rel (%p335) target = $region36
      $region35: #{tpu_custom_call.1} parent=5 // pred_region
        // Predicated region
        $region37: #{tpu_custom_call.1} parent=35 // pred_check
          %p338 = pneg %p49
        $region38: #{tpu_custom_call.1} parent=35 // pred_check_branch
          %340 = sbr.rel (%p338) target = $region40
        $region39: #{tpu_custom_call.1} parent=35 // pred_region
          %s341 = sand.u32 %s39, 1
          %s342 = scalar_lea.sflag [#allocation3], %s341
          %s343 = sand.u32 %s39, 1
          %s344 = scalar_lea.vmem [#allocation2], %s343
          %s346 = ssub.s32 16, 16
          %347 = vsyncadd %s342, %s346
          %s348 = smul.addr %s29, 16
          %s349 = scalar_lea.hbm %s0, %s348
          %s351 = sshll.u32 %s344, 4
          %s352 = int_to_ptr.vmem [resolvable:$true] %s351
          %354 = dma.hbm_to_vmem [thread:$0]  %s349, 16, %s352, %s342
        $region40: #{tpu_custom_call.1} parent=35 // pred_fallthru
          _
        // Predicated region
        $region41: #{tpu_custom_call.1} parent=35 // pred_check
          %p355 = pneg %p75
        $region42: #{tpu_custom_call.1} parent=35 // pred_check_branch
          %357 = sbr.rel (%p355) target = $region44
        $region43: #{tpu_custom_call.1} parent=35 // pred_region
          %s358 = sand.u32 %s29, 1
          %s359 = scalar_lea.sflag [#allocation6], %s358
          %s360 = sand.u32 %s65, 1
          %s361 = smul.addr %s360, 16
          %s362 = scalar_lea.vmem [#allocation5], %s361
          %s364 = ssub.s32 256, 256
          %365 = vsyncadd %s359, %s364
          %s366 = smul.addr %s29, 2
          %s367 = smul.addr %s366, 128
          %s368 = scalar_lea.hbm %s1, %s367
          %s370 = sshll.u32 %s362, 4
          %s371 = int_to_ptr.vmem [resolvable:$true] %s370
          %373 = dma.hbm_to_vmem [thread:$0]  %s368, 256, %s371, %s359
        $region44: #{tpu_custom_call.1} parent=35 // pred_fallthru
          _
        // Predicated region
        $region45: #{tpu_custom_call.1} parent=35 // pred_check
          %p374 = pneg %p101
        $region46: #{tpu_custom_call.1} parent=35 // pred_check_branch
          %376 = sbr.rel (%p374) target = $region48
        $region47: #{tpu_custom_call.1} parent=35 // pred_region
          %s377 = sand.u32 %s29, 1
          %s378 = scalar_lea.sflag [#allocation6], %s377
          %s379 = sand.u32 %s91, 1
          %s380 = smul.addr %s379, 16
          %s381 = scalar_lea.vmem [#allocation7], %s380
          %s383 = ssub.s32 256, 256
          %384 = vsyncadd %s378, %s383
          %s385 = smul.addr %s29, 2
          %s386 = smul.addr %s385, 128
          %s387 = scalar_lea.hbm %s2, %s386
          %s389 = sshll.u32 %s381, 4
          %s390 = int_to_ptr.vmem [resolvable:$true] %s389
          %392 = dma.hbm_to_vmem [thread:$0]  %s387, 256, %s390, %s378
        $region48: #{tpu_custom_call.1} parent=35 // pred_fallthru
          _
        // Predicated region
        $region49: #{tpu_custom_call.1} parent=35 // pred_check
          %p393 = pneg %p127
        $region50: #{tpu_custom_call.1} parent=35 // pred_check_branch
          %395 = sbr.rel (%p393) target = $region52
        $region51: #{tpu_custom_call.1} parent=35 // pred_region
          %s396 = sand.u32 %s29, 1
          %s397 = scalar_lea.sflag [#allocation9], %s396
          %s398 = sand.u32 %s117, 1
          %s399 = smul.addr %s398, 16
          %s400 = scalar_lea.vmem [#allocation8], %s399
          %s402 = ssub.s32 256, 256
          %403 = vsyncadd %s397, %s402
          %s404 = smul.addr %s29, 2
          %s405 = smul.addr %s404, 128
          %s406 = scalar_lea.hbm %s3, %s405
          %s408 = sshll.u32 %s400, 4
          %s409 = int_to_ptr.vmem [resolvable:$true] %s408
          %411 = dma.hbm_to_vmem [thread:$0]  %s406, 256, %s409, %s397
        $region52: #{tpu_custom_call.1} parent=35 // pred_fallthru
          _
      $region36: #{tpu_custom_call.1} parent=5 // pred_fallthru
        _
      %p412 = scmp.le.s32.totalorder 1, %s29
      %p413 = scmp.lt.s32.totalorder %s29, 3
      %p414 = pnand %p412, %p413
      %p415 = pneg %p414
      // Predicated region
      $region53: #{tpu_custom_call.1} parent=5 // pred_check
        _
      $region54: #{tpu_custom_call.1} parent=5 // pred_check_branch
        %417 = sbr.rel (%p414) target = $region56
      $region55: #{tpu_custom_call.1} parent=5 // pred_region
        %s418 = ssub.s32 %s29, 1
        %s419 = sand.u32 %s42, 1
        %s420 = scalar_lea.sflag [#allocation3], %s419
        %s421 = sand.u32 %s42, 1
        %s422 = scalar_lea.vmem [#allocation2], %s421
        // Predicated region
        $region57: #{tpu_custom_call.1} parent=55 // pred_check
          %p423 = pneg %p55
        $region58: #{tpu_custom_call.1} parent=55 // pred_check_branch
          %425 = sbr.rel (%p423) target = $region60
        $region59: #{tpu_custom_call.1} parent=55 // pred_region
          %426 = dma.done %s420, 16
        $region60: #{tpu_custom_call.1} parent=55 // pred_fallthru
          _
        %s427 = sand.u32 %s34, 1
        %s428 = scalar_lea.sflag [#allocation6], %s427
        %s429 = sand.u32 %s68, 1
        %s430 = smul.addr %s429, 16
        %s431 = scalar_lea.vmem [#allocation5], %s430
        // Predicated region
        $region61: #{tpu_custom_call.1} parent=55 // pred_check
          %p432 = pneg %p81
        $region62: #{tpu_custom_call.1} parent=55 // pred_check_branch
          %434 = sbr.rel (%p432) target = $region64
        $region63: #{tpu_custom_call.1} parent=55 // pred_region
          %435 = dma.done %s428, 256
        $region64: #{tpu_custom_call.1} parent=55 // pred_fallthru
          _
        %s436 = sand.u32 %s34, 1
        %s437 = scalar_lea.sflag [#allocation6], %s436
        %s438 = sand.u32 %s94, 1
        %s439 = smul.addr %s438, 16
        %s440 = scalar_lea.vmem [#allocation7], %s439
        // Predicated region
        $region65: #{tpu_custom_call.1} parent=55 // pred_check
          %p441 = pneg %p107
        $region66: #{tpu_custom_call.1} parent=55 // pred_check_branch
          %443 = sbr.rel (%p441) target = $region68
        $region67: #{tpu_custom_call.1} parent=55 // pred_region
          %444 = dma.done %s437, 256
        $region68: #{tpu_custom_call.1} parent=55 // pred_fallthru
          _
        %s445 = sand.u32 %s34, 1
        %s446 = scalar_lea.sflag [#allocation9], %s445
        %s447 = sand.u32 %s120, 1
        %s448 = smul.addr %s447, 16
        %s449 = scalar_lea.vmem [#allocation8], %s448
        // Predicated region
        $region69: #{tpu_custom_call.1} parent=55 // pred_check
          %p450 = pneg %p133
        $region70: #{tpu_custom_call.1} parent=55 // pred_check_branch
          %452 = sbr.rel (%p450) target = $region72
        $region71: #{tpu_custom_call.1} parent=55 // pred_region
          %453 = dma.done %s446, 256
        $region72: #{tpu_custom_call.1} parent=55 // pred_fallthru
          _
        // Predicated region
        $region73: #{tpu_custom_call.1} parent=55 // pred_check
          %p454 = pneg %p154
        $region74: #{tpu_custom_call.1} parent=55 // pred_check_branch
          %456 = sbr.rel (%p454) target = $region76
        $region75: #{tpu_custom_call.1} parent=55 // pred_region
          %457 = dma.done [#allocation9], 8192
        $region76: #{tpu_custom_call.1} parent=55 // pred_fallthru
          _
        // Predicated region
        $region77: #{tpu_custom_call.1} parent=55 // pred_check
          %p458 = pneg %p175
        $region78: #{tpu_custom_call.1} parent=55 // pred_check_branch
          %460 = sbr.rel (%p458) target = $region80
        $region79: #{tpu_custom_call.1} parent=55 // pred_region
          %461 = dma.done [#allocation12], 8192
        $region80: #{tpu_custom_call.1} parent=55 // pred_fallthru
          _
        // Predicated region
        $region81: #{tpu_custom_call.1} parent=55 // pred_check
          %p462 = pneg %p196
        $region82: #{tpu_custom_call.1} parent=55 // pred_check_branch
          %464 = sbr.rel (%p462) target = $region84
        $region83: #{tpu_custom_call.1} parent=55 // pred_region
          %465 = dma.done [#allocation12], 8192
        $region84: #{tpu_custom_call.1} parent=55 // pred_fallthru
          _
        // Predicated region
        $region85: #{tpu_custom_call.1} parent=55 // pred_check
          %p466 = pneg %p217
        $region86: #{tpu_custom_call.1} parent=55 // pred_check_branch
          %468 = sbr.rel (%p466) target = $region88
        $region87: #{tpu_custom_call.1} parent=55 // pred_region
          %469 = dma.done [#allocation15], 8192
        $region88: #{tpu_custom_call.1} parent=55 // pred_fallthru
          _
        %s470 = sand.u32 %s42, 1
        %s471 = scalar_lea.sflag [#allocation3], %s470
        %s472 = sand.u32 %s42, 1
        %s473 = scalar_lea.vmem [#allocation2], %s472
        %p474 = pneg %p55
        %p475 = pneg %p52
        %s476 = sand.u32 %s34, 1
        %s477 = scalar_lea.sflag [#allocation6], %s476
        %s478 = sand.u32 %s68, 1
        %s479 = smul.addr %s478, 16
        %s480 = scalar_lea.vmem [#allocation5], %s479
        %p481 = pneg %p81
        %p482 = pneg %p78
        %s483 = sand.u32 %s34, 1
        %s484 = scalar_lea.sflag [#allocation6], %s483
        %s485 = sand.u32 %s94, 1
        %s486 = smul.addr %s485, 16
        %s487 = scalar_lea.vmem [#allocation7], %s486
        %p488 = pneg %p107
        %p489 = pneg %p104
        %s490 = sand.u32 %s34, 1
        %s491 = scalar_lea.sflag [#allocation9], %s490
        %s492 = sand.u32 %s120, 1
        %s493 = smul.addr %s492, 16
        %s494 = scalar_lea.vmem [#allocation8], %s493
        %p495 = pneg %p133
        %p496 = pneg %p130
        %p497 = pneg %p154
        %p498 = pneg %p151
        %p499 = pneg %p175
        %p500 = pneg %p172
        %p501 = pneg %p196
        %p502 = pneg %p193
        %p503 = pneg %p217
        %p504 = pneg %p214
        %p505 = pneg %p238
        %p506 = pneg %p235
        %p507 = pneg %p264
        %p508 = pneg %p261
        %s509 = sand.u32 %s251, 1
        %s510 = scalar_lea.sflag [#allocation4], %s509
        %s511 = sand.u32 %s251, 1
        %s512 = smul.addr %s511, 16
        %s513 = scalar_lea.vmem [#allocation16], %s512
        %v514 = vld [vmem:[%s431] sm:$0xff]
        %v515 = vld [vmem:[%s431 + $0x8] sm:$0xff]
        %v516 = vld [vmem:[#allocation10] sm:$0xff]
        %v517 = vld [vmem:[#allocation10 + $0x8] sm:$0xff]
        %v518 = vld [vmem:[#allocation10 + $0x10] sm:$0xff]
        %v519 = vld [vmem:[#allocation10 + $0x18] sm:$0xff]
        %v520 = vld [vmem:[#allocation10 + $0x20] sm:$0xff]
        %v521 = vld [vmem:[#allocation10 + $0x28] sm:$0xff]
        %v522 = vld [vmem:[#allocation10 + $0x30] sm:$0xff]
        %v523 = vld [vmem:[#allocation10 + $0x38] sm:$0xff]
        %v524 = vld [vmem:[#allocation10 + $0x40] sm:$0xff]
        %v525 = vld [vmem:[#allocation10 + $0x48] sm:$0xff]
        %v526 = vld [vmem:[#allocation10 + $0x50] sm:$0xff]
        %v527 = vld [vmem:[#allocation10 + $0x58] sm:$0xff]
        %v528 = vld [vmem:[#allocation10 + $0x60] sm:$0xff]
        %v529 = vld [vmem:[#allocation10 + $0x68] sm:$0xff]
        %v530 = vld [vmem:[#allocation10 + $0x70] sm:$0xff]
        %v531 = vld [vmem:[#allocation10 + $0x78] sm:$0xff]
        %v532 = vld [vmem:[#allocation10 + $0x80] sm:$0xff]
        %v533 = vld [vmem:[#allocation10 + $0x88] sm:$0xff]
        %v534 = vld [vmem:[#allocation10 + $0x90] sm:$0xff]
        %v535 = vld [vmem:[#allocation10 + $0x98] sm:$0xff]
        %v536 = vld [vmem:[#allocation10 + $0xa0] sm:$0xff]
        %v537 = vld [vmem:[#allocation10 + $0xa8] sm:$0xff]
        %v538 = vld [vmem:[#allocation10 + $0xb0] sm:$0xff]
        %v539 = vld [vmem:[#allocation10 + $0xb8] sm:$0xff]
        %v540 = vld [vmem:[#allocation10 + $0xc0] sm:$0xff]
        %v541 = vld [vmem:[#allocation10 + $0xc8] sm:$0xff]
        %v542 = vld [vmem:[#allocation10 + $0xd0] sm:$0xff]
        %v543 = vld [vmem:[#allocation10 + $0xd8] sm:$0xff]
        %v544 = vld [vmem:[#allocation10 + $0xe0] sm:$0xff]
        %v545 = vld [vmem:[#allocation10 + $0xe8] sm:$0xff]
        %v546 = vld [vmem:[#allocation10 + $0xf0] sm:$0xff]
        %v547 = vld [vmem:[#allocation10 + $0xf8] sm:$0xff]
        %v548 = vld [vmem:[#allocation10 + $0x100] sm:$0xff]
        %v549 = vld [vmem:[#allocation10 + $0x108] sm:$0xff]
        %v550 = vld [vmem:[#allocation10 + $0x110] sm:$0xff]
        %v551 = vld [vmem:[#allocation10 + $0x118] sm:$0xff]
        %v552 = vld [vmem:[#allocation10 + $0x120] sm:$0xff]
        %v553 = vld [vmem:[#allocation10 + $0x128] sm:$0xff]
        %v554 = vld [vmem:[#allocation10 + $0x130] sm:$0xff]
        %v555 = vld [vmem:[#allocation10 + $0x138] sm:$0xff]
        %v556 = vld [vmem:[#allocation10 + $0x140] sm:$0xff]
        %v557 = vld [vmem:[#allocation10 + $0x148] sm:$0xff]
        %v558 = vld [vmem:[#allocation10 + $0x150] sm:$0xff]
        %v559 = vld [vmem:[#allocation10 + $0x158] sm:$0xff]
        %v560 = vld [vmem:[#allocation10 + $0x160] sm:$0xff]
        %v561 = vld [vmem:[#allocation10 + $0x168] sm:$0xff]
        %v562 = vld [vmem:[#allocation10 + $0x170] sm:$0xff]
        %v563 = vld [vmem:[#allocation10 + $0x178] sm:$0xff]
        %v564 = vld [vmem:[#allocation10 + $0x180] sm:$0xff]
        %v565 = vld [vmem:[#allocation10 + $0x188] sm:$0xff]
        %v566 = vld [vmem:[#allocation10 + $0x190] sm:$0xff]
        %v567 = vld [vmem:[#allocation10 + $0x198] sm:$0xff]
        %v568 = vld [vmem:[#allocation10 + $0x1a0] sm:$0xff]
        %v569 = vld [vmem:[#allocation10 + $0x1a8] sm:$0xff]
        %v570 = vld [vmem:[#allocation10 + $0x1b0] sm:$0xff]
        %v571 = vld [vmem:[#allocation10 + $0x1b8] sm:$0xff]
        %v572 = vld [vmem:[#allocation10 + $0x1c0] sm:$0xff]
        %v573 = vld [vmem:[#allocation10 + $0x1c8] sm:$0xff]
        %v574 = vld [vmem:[#allocation10 + $0x1d0] sm:$0xff]
        %v575 = vld [vmem:[#allocation10 + $0x1d8] sm:$0xff]
        %v576 = vld [vmem:[#allocation10 + $0x1e0] sm:$0xff]
        %v577 = vld [vmem:[#allocation10 + $0x1e8] sm:$0xff]
        %v578 = vld [vmem:[#allocation10 + $0x1f0] sm:$0xff]
        %v579 = vld [vmem:[#allocation10 + $0x1f8] sm:$0xff]
        %580 = vmatprep.subr.mxu0 %v517
        %581 = vmatpush1.msra.mxu0 %v516
        %582 = vmatprep.subr.mxu0 %v519
        %583 = vmatpush1.msra.mxu0 %v518
        %584 = vmatprep.subr.mxu0 %v521
        %585 = vmatpush1.msra.mxu0 %v520
        %586 = vmatprep.subr.mxu0 %v523
        %587 = vmatpush1.msra.mxu0 %v522
        %588 = vmatprep.subr.mxu0 %v525
        %589 = vmatpush1.msra.mxu0 %v524
        %590 = vmatprep.subr.mxu0 %v527
        %591 = vmatpush1.msra.mxu0 %v526
        %592 = vmatprep.subr.mxu0 %v529
        %593 = vmatpush1.msra.mxu0 %v528
        %594 = vmatprep.subr.mxu0 %v531
        %595 = vmatpush1.msra.mxu0 %v530
        %596 = vmatprep.subr.mxu0 %v533
        %597 = vmatpush1.msra.mxu0 %v532
        %598 = vmatprep.subr.mxu0 %v535
        %599 = vmatpush1.msra.mxu0 %v534
        %600 = vmatprep.subr.mxu0 %v537
        %601 = vmatpush1.msra.mxu0 %v536
        %602 = vmatprep.subr.mxu0 %v539
        %603 = vmatpush1.msra.mxu0 %v538
        %604 = vmatprep.subr.mxu0 %v541
        %605 = vmatpush1.msra.mxu0 %v540
        %606 = vmatprep.subr.mxu0 %v543
        %607 = vmatpush1.msra.mxu0 %v542
        %608 = vmatprep.subr.mxu0 %v545
        %609 = vmatpush1.msra.mxu0 %v544
        %610 = vmatprep.subr.mxu0 %v547
        %611 = vmatpush1.msra.mxu0 %v546
        %612 = vmatprep.subr.mxu0 %v549
        %613 = vmatpush1.msra.mxu0 %v548
        %614 = vmatprep.subr.mxu0 %v551
        %615 = vmatpush1.msra.mxu0 %v550
        %616 = vmatprep.subr.mxu0 %v553
        %617 = vmatpush1.msra.mxu0 %v552
        %618 = vmatprep.subr.mxu0 %v555
        %619 = vmatpush1.msra.mxu0 %v554
        %620 = vmatprep.subr.mxu0 %v557
        %621 = vmatpush1.msra.mxu0 %v556
        %622 = vmatprep.subr.mxu0 %v559
        %623 = vmatpush1.msra.mxu0 %v558
        %624 = vmatprep.subr.mxu0 %v561
        %625 = vmatpush1.msra.mxu0 %v560
        %626 = vmatprep.subr.mxu0 %v563
        %627 = vmatpush1.msra.mxu0 %v562
        %628 = vmatprep.subr.mxu0 %v565
        %629 = vmatpush1.msra.mxu0 %v564
        %630 = vmatprep.subr.mxu0 %v567
        %631 = vmatpush1.msra.mxu0 %v566
        %632 = vmatprep.subr.mxu0 %v569
        %633 = vmatpush1.msra.mxu0 %v568
        %634 = vmatprep.subr.mxu0 %v571
        %635 = vmatpush1.msra.mxu0 %v570
        %636 = vmatprep.subr.mxu0 %v573
        %637 = vmatpush1.msra.mxu0 %v572
        %638 = vmatprep.subr.mxu0 %v575
        %639 = vmatpush1.msra.mxu0 %v574
        %640 = vmatprep.subr.mxu0 %v577
        %641 = vmatpush1.msra.mxu0 %v576
        %642 = vmatprep.subr.mxu0 %v579
        %643 = vmatpush1.msra.mxu0 %v578
        %644 = vmatprep.mubr.f32.mxu0 %v515
        %645 = vmatmul.mubr.f32.gmra.mrb[0].mxu0 %v514
        %v646 = vpop.f32.mrb[0].mxu0
        %v647 = vadd.f32 0.0, %v646
        %v648 = vpop.f32.mrb[0].mxu0
        %v649 = vadd.f32 0.0, %v648
        %650 = vdwg.mxu0
        %v651 = vld [vmem:[%s440] sm:$0xff]
        %v652 = vld [vmem:[%s440 + $0x8] sm:$0xff]
        %v653 = vld [vmem:[#allocation11] sm:$0xff]
        %v654 = vld [vmem:[#allocation11 + $0x8] sm:$0xff]
        %v655 = vld [vmem:[#allocation11 + $0x10] sm:$0xff]
        %v656 = vld [vmem:[#allocation11 + $0x18] sm:$0xff]
        %v657 = vld [vmem:[#allocation11 + $0x20] sm:$0xff]
        %v658 = vld [vmem:[#allocation11 + $0x28] sm:$0xff]
        %v659 = vld [vmem:[#allocation11 + $0x30] sm:$0xff]
        %v660 = vld [vmem:[#allocation11 + $0x38] sm:$0xff]
        %v661 = vld [vmem:[#allocation11 + $0x40] sm:$0xff]
        %v662 = vld [vmem:[#allocation11 + $0x48] sm:$0xff]
        %v663 = vld [vmem:[#allocation11 + $0x50] sm:$0xff]
        %v664 = vld [vmem:[#allocation11 + $0x58] sm:$0xff]
        %v665 = vld [vmem:[#allocation11 + $0x60] sm:$0xff]
        %v666 = vld [vmem:[#allocation11 + $0x68] sm:$0xff]
        %v667 = vld [vmem:[#allocation11 + $0x70] sm:$0xff]
        %v668 = vld [vmem:[#allocation11 + $0x78] sm:$0xff]
        %v669 = vld [vmem:[#allocation11 + $0x80] sm:$0xff]
        %v670 = vld [vmem:[#allocation11 + $0x88] sm:$0xff]
        %v671 = vld [vmem:[#allocation11 + $0x90] sm:$0xff]
        %v672 = vld [vmem:[#allocation11 + $0x98] sm:$0xff]
        %v673 = vld [vmem:[#allocation11 + $0xa0] sm:$0xff]
        %v674 = vld [vmem:[#allocation11 + $0xa8] sm:$0xff]
        %v675 = vld [vmem:[#allocation11 + $0xb0] sm:$0xff]
        %v676 = vld [vmem:[#allocation11 + $0xb8] sm:$0xff]
        %v677 = vld [vmem:[#allocation11 + $0xc0] sm:$0xff]
        %v678 = vld [vmem:[#allocation11 + $0xc8] sm:$0xff]
        %v679 = vld [vmem:[#allocation11 + $0xd0] sm:$0xff]
        %v680 = vld [vmem:[#allocation11 + $0xd8] sm:$0xff]
        %v681 = vld [vmem:[#allocation11 + $0xe0] sm:$0xff]
        %v682 = vld [vmem:[#allocation11 + $0xe8] sm:$0xff]
        %v683 = vld [vmem:[#allocation11 + $0xf0] sm:$0xff]
        %v684 = vld [vmem:[#allocation11 + $0xf8] sm:$0xff]
        %v685 = vld [vmem:[#allocation11 + $0x100] sm:$0xff]
        %v686 = vld [vmem:[#allocation11 + $0x108] sm:$0xff]
        %v687 = vld [vmem:[#allocation11 + $0x110] sm:$0xff]
        %v688 = vld [vmem:[#allocation11 + $0x118] sm:$0xff]
        %v689 = vld [vmem:[#allocation11 + $0x120] sm:$0xff]
        %v690 = vld [vmem:[#allocation11 + $0x128] sm:$0xff]
        %v691 = vld [vmem:[#allocation11 + $0x130] sm:$0xff]
        %v692 = vld [vmem:[#allocation11 + $0x138] sm:$0xff]
        %v693 = vld [vmem:[#allocation11 + $0x140] sm:$0xff]
        %v694 = vld [vmem:[#allocation11 + $0x148] sm:$0xff]
        %v695 = vld [vmem:[#allocation11 + $0x150] sm:$0xff]
        %v696 = vld [vmem:[#allocation11 + $0x158] sm:$0xff]
        %v697 = vld [vmem:[#allocation11 + $0x160] sm:$0xff]
        %v698 = vld [vmem:[#allocation11 + $0x168] sm:$0xff]
        %v699 = vld [vmem:[#allocation11 + $0x170] sm:$0xff]
        %v700 = vld [vmem:[#allocation11 + $0x178] sm:$0xff]
        %v701 = vld [vmem:[#allocation11 + $0x180] sm:$0xff]
        %v702 = vld [vmem:[#allocation11 + $0x188] sm:$0xff]
        %v703 = vld [vmem:[#allocation11 + $0x190] sm:$0xff]
        %v704 = vld [vmem:[#allocation11 + $0x198] sm:$0xff]
        %v705 = vld [vmem:[#allocation11 + $0x1a0] sm:$0xff]
        %v706 = vld [vmem:[#allocation11 + $0x1a8] sm:$0xff]
        %v707 = vld [vmem:[#allocation11 + $0x1b0] sm:$0xff]
        %v708 = vld [vmem:[#allocation11 + $0x1b8] sm:$0xff]
        %v709 = vld [vmem:[#allocation11 + $0x1c0] sm:$0xff]
        %v710 = vld [vmem:[#allocation11 + $0x1c8] sm:$0xff]
        %v711 = vld [vmem:[#allocation11 + $0x1d0] sm:$0xff]
        %v712 = vld [vmem:[#allocation11 + $0x1d8] sm:$0xff]
        %v713 = vld [vmem:[#allocation11 + $0x1e0] sm:$0xff]
        %v714 = vld [vmem:[#allocation11 + $0x1e8] sm:$0xff]
        %v715 = vld [vmem:[#allocation11 + $0x1f0] sm:$0xff]
        %v716 = vld [vmem:[#allocation11 + $0x1f8] sm:$0xff]
        %717 = vmatprep.subr.mxu0 %v654
        %718 = vmatpush1.msra.mxu0 %v653
        %719 = vmatprep.subr.mxu0 %v656
        %720 = vmatpush1.msra.mxu0 %v655
        %721 = vmatprep.subr.mxu0 %v658
        %722 = vmatpush1.msra.mxu0 %v657
        %723 = vmatprep.subr.mxu0 %v660
        %724 = vmatpush1.msra.mxu0 %v659
        %725 = vmatprep.subr.mxu0 %v662
        %726 = vmatpush1.msra.mxu0 %v661
        %727 = vmatprep.subr.mxu0 %v664
        %728 = vmatpush1.msra.mxu0 %v663
        %729 = vmatprep.subr.mxu0 %v666
        %730 = vmatpush1.msra.mxu0 %v665
        %731 = vmatprep.subr.mxu0 %v668
        %732 = vmatpush1.msra.mxu0 %v667
        %733 = vmatprep.subr.mxu0 %v670
        %734 = vmatpush1.msra.mxu0 %v669
        %735 = vmatprep.subr.mxu0 %v672
        %736 = vmatpush1.msra.mxu0 %v671
        %737 = vmatprep.subr.mxu0 %v674
        %738 = vmatpush1.msra.mxu0 %v673
        %739 = vmatprep.subr.mxu0 %v676
        %740 = vmatpush1.msra.mxu0 %v675
        %741 = vmatprep.subr.mxu0 %v678
        %742 = vmatpush1.msra.mxu0 %v677
        %743 = vmatprep.subr.mxu0 %v680
        %744 = vmatpush1.msra.mxu0 %v679
        %745 = vmatprep.subr.mxu0 %v682
        %746 = vmatpush1.msra.mxu0 %v681
        %747 = vmatprep.subr.mxu0 %v684
        %748 = vmatpush1.msra.mxu0 %v683
        %749 = vmatprep.subr.mxu0 %v686
        %750 = vmatpush1.msra.mxu0 %v685
        %751 = vmatprep.subr.mxu0 %v688
        %752 = vmatpush1.msra.mxu0 %v687
        %753 = vmatprep.subr.mxu0 %v690
        %754 = vmatpush1.msra.mxu0 %v689
        %755 = vmatprep.subr.mxu0 %v692
        %756 = vmatpush1.msra.mxu0 %v691
        %757 = vmatprep.subr.mxu0 %v694
        %758 = vmatpush1.msra.mxu0 %v693
        %759 = vmatprep.subr.mxu0 %v696
        %760 = vmatpush1.msra.mxu0 %v695
        %761 = vmatprep.subr.mxu0 %v698
        %762 = vmatpush1.msra.mxu0 %v697
        %763 = vmatprep.subr.mxu0 %v700
        %764 = vmatpush1.msra.mxu0 %v699
        %765 = vmatprep.subr.mxu0 %v702
        %766 = vmatpush1.msra.mxu0 %v701
        %767 = vmatprep.subr.mxu0 %v704
        %768 = vmatpush1.msra.mxu0 %v703
        %769 = vmatprep.subr.mxu0 %v706
        %770 = vmatpush1.msra.mxu0 %v705
        %771 = vmatprep.subr.mxu0 %v708
        %772 = vmatpush1.msra.mxu0 %v707
        %773 = vmatprep.subr.mxu0 %v710
        %774 = vmatpush1.msra.mxu0 %v709
        %775 = vmatprep.subr.mxu0 %v712
        %776 = vmatpush1.msra.mxu0 %v711
        %777 = vmatprep.subr.mxu0 %v714
        %778 = vmatpush1.msra.mxu0 %v713
        %779 = vmatprep.subr.mxu0 %v716
        %780 = vmatpush1.msra.mxu0 %v715
        %781 = vmatprep.mubr.f32.mxu0 %v652
        %782 = vmatmul.mubr.f32.gmra.mrb[0].mxu0 %v651
        %v783 = vpop.f32.mrb[0].mxu0
        %v784 = vadd.f32 0.0, %v783
        %v785 = vpop.f32.mrb[0].mxu0
        %v786 = vadd.f32 0.0, %v785
        %787 = vdwg.mxu0
        %v788 = vld [vmem:[%s449] sm:$0xff]
        %v789 = vld [vmem:[%s449 + $0x8] sm:$0xff]
        %v790 = vld [vmem:[#allocation13] sm:$0xff]
        %v791 = vld [vmem:[#allocation13 + $0x8] sm:$0xff]
        %v792 = vld [vmem:[#allocation13 + $0x10] sm:$0xff]
        %v793 = vld [vmem:[#allocation13 + $0x18] sm:$0xff]
        %v794 = vld [vmem:[#allocation13 + $0x20] sm:$0xff]
        %v795 = vld [vmem:[#allocation13 + $0x28] sm:$0xff]
        %v796 = vld [vmem:[#allocation13 + $0x30] sm:$0xff]
        %v797 = vld [vmem:[#allocation13 + $0x38] sm:$0xff]
        %v798 = vld [vmem:[#allocation13 + $0x40] sm:$0xff]
        %v799 = vld [vmem:[#allocation13 + $0x48] sm:$0xff]
        %v800 = vld [vmem:[#allocation13 + $0x50] sm:$0xff]
        %v801 = vld [vmem:[#allocation13 + $0x58] sm:$0xff]
        %v802 = vld [vmem:[#allocation13 + $0x60] sm:$0xff]
        %v803 = vld [vmem:[#allocation13 + $0x68] sm:$0xff]
        %v804 = vld [vmem:[#allocation13 + $0x70] sm:$0xff]
        %v805 = vld [vmem:[#allocation13 + $0x78] sm:$0xff]
        %v806 = vld [vmem:[#allocation13 + $0x80] sm:$0xff]
        %v807 = vld [vmem:[#allocation13 + $0x88] sm:$0xff]
        %v808 = vld [vmem:[#allocation13 + $0x90] sm:$0xff]
        %v809 = vld [vmem:[#allocation13 + $0x98] sm:$0xff]
        %v810 = vld [vmem:[#allocation13 + $0xa0] sm:$0xff]
        %v811 = vld [vmem:[#allocation13 + $0xa8] sm:$0xff]
        %v812 = vld [vmem:[#allocation13 + $0xb0] sm:$0xff]
        %v813 = vld [vmem:[#allocation13 + $0xb8] sm:$0xff]
        %v814 = vld [vmem:[#allocation13 + $0xc0] sm:$0xff]
        %v815 = vld [vmem:[#allocation13 + $0xc8] sm:$0xff]
        %v816 = vld [vmem:[#allocation13 + $0xd0] sm:$0xff]
        %v817 = vld [vmem:[#allocation13 + $0xd8] sm:$0xff]
        %v818 = vld [vmem:[#allocation13 + $0xe0] sm:$0xff]
        %v819 = vld [vmem:[#allocation13 + $0xe8] sm:$0xff]
        %v820 = vld [vmem:[#allocation13 + $0xf0] sm:$0xff]
        %v821 = vld [vmem:[#allocation13 + $0xf8] sm:$0xff]
        %v822 = vld [vmem:[#allocation13 + $0x100] sm:$0xff]
        %v823 = vld [vmem:[#allocation13 + $0x108] sm:$0xff]
        %v824 = vld [vmem:[#allocation13 + $0x110] sm:$0xff]
        %v825 = vld [vmem:[#allocation13 + $0x118] sm:$0xff]
        %v826 = vld [vmem:[#allocation13 + $0x120] sm:$0xff]
        %v827 = vld [vmem:[#allocation13 + $0x128] sm:$0xff]
        %v828 = vld [vmem:[#allocation13 + $0x130] sm:$0xff]
        %v829 = vld [vmem:[#allocation13 + $0x138] sm:$0xff]
        %v830 = vld [vmem:[#allocation13 + $0x140] sm:$0xff]
        %v831 = vld [vmem:[#allocation13 + $0x148] sm:$0xff]
        %v832 = vld [vmem:[#allocation13 + $0x150] sm:$0xff]
        %v833 = vld [vmem:[#allocation13 + $0x158] sm:$0xff]
        %v834 = vld [vmem:[#allocation13 + $0x160] sm:$0xff]
        %v835 = vld [vmem:[#allocation13 + $0x168] sm:$0xff]
        %v836 = vld [vmem:[#allocation13 + $0x170] sm:$0xff]
        %v837 = vld [vmem:[#allocation13 + $0x178] sm:$0xff]
        %v838 = vld [vmem:[#allocation13 + $0x180] sm:$0xff]
        %v839 = vld [vmem:[#allocation13 + $0x188] sm:$0xff]
        %v840 = vld [vmem:[#allocation13 + $0x190] sm:$0xff]
        %v841 = vld [vmem:[#allocation13 + $0x198] sm:$0xff]
        %v842 = vld [vmem:[#allocation13 + $0x1a0] sm:$0xff]
        %v843 = vld [vmem:[#allocation13 + $0x1a8] sm:$0xff]
        %v844 = vld [vmem:[#allocation13 + $0x1b0] sm:$0xff]
        %v845 = vld [vmem:[#allocation13 + $0x1b8] sm:$0xff]
        %v846 = vld [vmem:[#allocation13 + $0x1c0] sm:$0xff]
        %v847 = vld [vmem:[#allocation13 + $0x1c8] sm:$0xff]
        %v848 = vld [vmem:[#allocation13 + $0x1d0] sm:$0xff]
        %v849 = vld [vmem:[#allocation13 + $0x1d8] sm:$0xff]
        %v850 = vld [vmem:[#allocation13 + $0x1e0] sm:$0xff]
        %v851 = vld [vmem:[#allocation13 + $0x1e8] sm:$0xff]
        %v852 = vld [vmem:[#allocation13 + $0x1f0] sm:$0xff]
        %v853 = vld [vmem:[#allocation13 + $0x1f8] sm:$0xff]
        %854 = vmatprep.subr.mxu0 %v791
        %855 = vmatpush1.msra.mxu0 %v790
        %856 = vmatprep.subr.mxu0 %v793
        %857 = vmatpush1.msra.mxu0 %v792
        %858 = vmatprep.subr.mxu0 %v795
        %859 = vmatpush1.msra.mxu0 %v794
        %860 = vmatprep.subr.mxu0 %v797
        %861 = vmatpush1.msra.mxu0 %v796
        %862 = vmatprep.subr.mxu0 %v799
        %863 = vmatpush1.msra.mxu0 %v798
        %864 = vmatprep.subr.mxu0 %v801
        %865 = vmatpush1.msra.mxu0 %v800
        %866 = vmatprep.subr.mxu0 %v803
        %867 = vmatpush1.msra.mxu0 %v802
        %868 = vmatprep.subr.mxu0 %v805
        %869 = vmatpush1.msra.mxu0 %v804
        %870 = vmatprep.subr.mxu0 %v807
        %871 = vmatpush1.msra.mxu0 %v806
        %872 = vmatprep.subr.mxu0 %v809
        %873 = vmatpush1.msra.mxu0 %v808
        %874 = vmatprep.subr.mxu0 %v811
        %875 = vmatpush1.msra.mxu0 %v810
        %876 = vmatprep.subr.mxu0 %v813
        %877 = vmatpush1.msra.mxu0 %v812
        %878 = vmatprep.subr.mxu0 %v815
        %879 = vmatpush1.msra.mxu0 %v814
        %880 = vmatprep.subr.mxu0 %v817
        %881 = vmatpush1.msra.mxu0 %v816
        %882 = vmatprep.subr.mxu0 %v819
        %883 = vmatpush1.msra.mxu0 %v818
        %884 = vmatprep.subr.mxu0 %v821
        %885 = vmatpush1.msra.mxu0 %v820
        %886 = vmatprep.subr.mxu0 %v823
        %887 = vmatpush1.msra.mxu0 %v822
        %888 = vmatprep.subr.mxu0 %v825
        %889 = vmatpush1.msra.mxu0 %v824
        %890 = vmatprep.subr.mxu0 %v827
        %891 = vmatpush1.msra.mxu0 %v826
        %892 = vmatprep.subr.mxu0 %v829
        %893 = vmatpush1.msra.mxu0 %v828
        %894 = vmatprep.subr.mxu0 %v831
        %895 = vmatpush1.msra.mxu0 %v830
        %896 = vmatprep.subr.mxu0 %v833
        %897 = vmatpush1.msra.mxu0 %v832
        %898 = vmatprep.subr.mxu0 %v835
        %899 = vmatpush1.msra.mxu0 %v834
        %900 = vmatprep.subr.mxu0 %v837
        %901 = vmatpush1.msra.mxu0 %v836
        %902 = vmatprep.subr.mxu0 %v839
        %903 = vmatpush1.msra.mxu0 %v838
        %904 = vmatprep.subr.mxu0 %v841
        %905 = vmatpush1.msra.mxu0 %v840
        %906 = vmatprep.subr.mxu0 %v843
        %907 = vmatpush1.msra.mxu0 %v842
        %908 = vmatprep.subr.mxu0 %v845
        %909 = vmatpush1.msra.mxu0 %v844
        %910 = vmatprep.subr.mxu0 %v847
        %911 = vmatpush1.msra.mxu0 %v846
        %912 = vmatprep.subr.mxu0 %v849
        %913 = vmatpush1.msra.mxu0 %v848
        %914 = vmatprep.subr.mxu0 %v851
        %915 = vmatpush1.msra.mxu0 %v850
        %916 = vmatprep.subr.mxu0 %v853
        %917 = vmatpush1.msra.mxu0 %v852
        %918 = vmatprep.mubr.f32.mxu0 %v789
        %919 = vmatmul.mubr.f32.gmra.mrb[0].mxu0 %v788
        %v920 = vpop.f32.mrb[0].mxu0
        %v921 = vadd.f32 0.0, %v920
        %v922 = vpop.f32.mrb[0].mxu0
        %v923 = vadd.f32 0.0, %v922
        %924 = vdwg.mxu0
        %v925 = vld [vmem:[%s422] sm:$0x1]
        %v927 = vlaneseq
        %v928 = vshrl.u32 %v927, 7
        %v929 = vsub.s32 0, %v928
        %v930 = vrot.slane %v925, %v929
        %v932 = vld [vmem:[%s8] sm:$0x3]
        %v934 = vlaneseq
        %v935 = vshrl.u32 %v934, 7
        %v936 = vsub.s32 0, %v935
        %v937 = vrot.slane %v932, %v936
        %v938 = vlaneseq
        %v939 = vshrl.u32 %v938, 7
        %v940 = vsub.s32 1, %v939
        %v941 = vrot.slane %v932, %v940
        %vm944 = vcmask 261120
        %v946 = vsel %vm944, %v921, 0
        %v949 = vsel %vm944, %v784, 0
        %951 = vmatprep.subr.mxu0 0.0
        %952 = vmatpush1.xpose.msra.mxu0 %v949
        %953 = vmatprep.subr.mxu0 0.0
        %954 = vmatpush1.xpose.msra.mxu0 0.0
        %955 = vmatprep.subr.mxu0 0.0
        %956 = vmatpush1.xpose.msra.mxu0 0.0
        %957 = vmatprep.subr.mxu0 0.0
        %958 = vmatpush1.xpose.msra.mxu0 0.0
        %959 = vmatprep.subr.mxu0 0.0
        %960 = vmatpush1.xpose.msra.mxu0 0.0
        %961 = vmatprep.subr.mxu0 0.0
        %962 = vmatpush1.xpose.msra.mxu0 0.0
        %963 = vmatprep.subr.mxu0 0.0
        %964 = vmatpush1.xpose.msra.mxu0 0.0
        %965 = vmatprep.subr.mxu0 0.0
        %966 = vmatpush1.xpose.msra.mxu0 0.0
        %967 = vmatprep.subr.mxu0 0.0
        %968 = vmatpush1.xpose.msra.mxu0 0.0
        %969 = vmatprep.subr.mxu0 0.0
        %970 = vmatpush1.xpose.msra.mxu0 0.0
        %971 = vmatprep.subr.mxu0 0.0
        %972 = vmatpush1.xpose.msra.mxu0 0.0
        %973 = vmatprep.subr.mxu0 0.0
        %974 = vmatpush1.xpose.msra.mxu0 0.0
        %975 = vmatprep.subr.mxu0 0.0
        %976 = vmatpush1.xpose.msra.mxu0 0.0
        %977 = vmatprep.subr.mxu0 0.0
        %978 = vmatpush1.xpose.msra.mxu0 0.0
        %979 = vmatprep.subr.mxu0 0.0
        %980 = vmatpush1.xpose.msra.mxu0 0.0
        %981 = vmatprep.subr.mxu0 0.0
        %982 = vmatpush1.xpose.msra.mxu0 0.0
        %983 = vmatprep.subr.mxu0 0.0
        %984 = vmatpush1.xpose.msra.mxu0 0.0
        %985 = vmatprep.subr.mxu0 0.0
        %986 = vmatpush1.xpose.msra.mxu0 0.0
        %987 = vmatprep.subr.mxu0 0.0
        %988 = vmatpush1.xpose.msra.mxu0 0.0
        %989 = vmatprep.subr.mxu0 0.0
        %990 = vmatpush1.xpose.msra.mxu0 0.0
        %991 = vmatprep.subr.mxu0 0.0
        %992 = vmatpush1.xpose.msra.mxu0 0.0
        %993 = vmatprep.subr.mxu0 0.0
        %994 = vmatpush1.xpose.msra.mxu0 0.0
        %995 = vmatprep.subr.mxu0 0.0
        %996 = vmatpush1.xpose.msra.mxu0 0.0
        %997 = vmatprep.subr.mxu0 0.0
        %998 = vmatpush1.xpose.msra.mxu0 0.0
        %999 = vmatprep.subr.mxu0 0.0
        %1000 = vmatpush1.xpose.msra.mxu0 0.0
        %1001 = vmatprep.subr.mxu0 0.0
        %1002 = vmatpush1.xpose.msra.mxu0 0.0
        %1003 = vmatprep.subr.mxu0 0.0
        %1004 = vmatpush1.xpose.msra.mxu0 0.0
        %1005 = vmatprep.subr.mxu0 0.0
        %1006 = vmatpush1.xpose.msra.mxu0 0.0
        %1007 = vmatprep.subr.mxu0 0.0
        %1008 = vmatpush1.xpose.msra.mxu0 0.0
        %1009 = vmatprep.subr.mxu0 0.0
        %1010 = vmatpush1.xpose.msra.mxu0 0.0
        %1011 = vmatprep.subr.mxu0 0.0
        %1012 = vmatpush1.xpose.msra.mxu0 0.0
        %1013 = vmatprep.subr.mxu0 0.0
        %1014 = vmatpush1.xpose.msra.mxu0 0.0
        %1015 = vmatprep.mubr.f32.mxu0 0.0
        %1016 = vmatmul.mubr.f32.gmra.mrb[0].mxu0 %v946
        %v1017 = vpop.f32.mrb[0].mxu0
        %v1018 = vadd.f32 %v930, %v1017
        %v1019 = vpop.f32.mrb[0].mxu0
        %1020 = vdwg.mxu0
        %vm1021 = vcmask 64512
        %v1022 = vsel %vm1021, %v1018, -inf
        %1023 = vmax.xlane.f32.xlu0 %v1022
        %v1024 = vpop.xlane.xlu0 %1023
        %v1025 = vsub.f32 %v1018, %v1024
        %v1026 = vmul.f32 %v1025, 1.442695
        %v1027 = vpow.pop %v1026
        %v1028 = vsel %vm1021, %v1027, 0.0
        %1029 = vadd.xlane.f32.xlu0 %v1028
        %v1030 = vpop.xlane.xlu0 %1029
        %v1031 = vrcp.pop %v1030
        %v1032 = vmul.f32 %v1027, %v1031
        %v1034 = vsel %vm1021, %v1032, 0
        %1036 = vmatprep.subr.mxu0 0.0
        %1037 = vmatpush1.msra.mxu0 %v647
        %1038 = vmatprep.subr.mxu0 0.0
        %1039 = vmatpush1.msra.mxu0 0.0
        %1040 = vmatprep.subr.mxu0 0.0
        %1041 = vmatpush1.msra.mxu0 0.0
        %1042 = vmatprep.subr.mxu0 0.0
        %1043 = vmatpush1.msra.mxu0 0.0
        %1044 = vmatprep.subr.mxu0 0.0
        %1045 = vmatpush1.msra.mxu0 0.0
        %1046 = vmatprep.subr.mxu0 0.0
        %1047 = vmatpush1.msra.mxu0 0.0
        %1048 = vmatprep.subr.mxu0 0.0
        %1049 = vmatpush1.msra.mxu0 0.0
        %1050 = vmatprep.subr.mxu0 0.0
        %1051 = vmatpush1.msra.mxu0 0.0
        %1052 = vmatprep.subr.mxu0 0.0
        %1053 = vmatpush1.msra.mxu0 0.0
        %1054 = vmatprep.subr.mxu0 0.0
        %1055 = vmatpush1.msra.mxu0 0.0
        %1056 = vmatprep.subr.mxu0 0.0
        %1057 = vmatpush1.msra.mxu0 0.0
        %1058 = vmatprep.subr.mxu0 0.0
        %1059 = vmatpush1.msra.mxu0 0.0
        %1060 = vmatprep.subr.mxu0 0.0
        %1061 = vmatpush1.msra.mxu0 0.0
        %1062 = vmatprep.subr.mxu0 0.0
        %1063 = vmatpush1.msra.mxu0 0.0
        %1064 = vmatprep.subr.mxu0 0.0
        %1065 = vmatpush1.msra.mxu0 0.0
        %1066 = vmatprep.subr.mxu0 0.0
        %1067 = vmatpush1.msra.mxu0 0.0
        %1068 = vmatprep.subr.mxu0 0.0
        %1069 = vmatpush1.msra.mxu0 0.0
        %1070 = vmatprep.subr.mxu0 0.0
        %1071 = vmatpush1.msra.mxu0 0.0
        %1072 = vmatprep.subr.mxu0 0.0
        %1073 = vmatpush1.msra.mxu0 0.0
        %1074 = vmatprep.subr.mxu0 0.0
        %1075 = vmatpush1.msra.mxu0 0.0
        %1076 = vmatprep.subr.mxu0 0.0
        %1077 = vmatpush1.msra.mxu0 0.0
        %1078 = vmatprep.subr.mxu0 0.0
        %1079 = vmatpush1.msra.mxu0 0.0
        %1080 = vmatprep.subr.mxu0 0.0
        %1081 = vmatpush1.msra.mxu0 0.0
        %1082 = vmatprep.subr.mxu0 0.0
        %1083 = vmatpush1.msra.mxu0 0.0
        %1084 = vmatprep.subr.mxu0 0.0
        %1085 = vmatpush1.msra.mxu0 0.0
        %1086 = vmatprep.subr.mxu0 0.0
        %1087 = vmatpush1.msra.mxu0 0.0
        %1088 = vmatprep.subr.mxu0 0.0
        %1089 = vmatpush1.msra.mxu0 0.0
        %1090 = vmatprep.subr.mxu0 0.0
        %1091 = vmatpush1.msra.mxu0 0.0
        %1092 = vmatprep.subr.mxu0 0.0
        %1093 = vmatpush1.msra.mxu0 0.0
        %1094 = vmatprep.subr.mxu0 0.0
        %1095 = vmatpush1.msra.mxu0 0.0
        %1096 = vmatprep.subr.mxu0 0.0
        %1097 = vmatpush1.msra.mxu0 0.0
        %1098 = vmatprep.subr.mxu0 0.0
        %1099 = vmatpush1.msra.mxu0 0.0
        %1100 = vmatprep.mubr.f32.mxu0 0.0
        %1101 = vmatmul.mubr.f32.gmra.mrb[0].mxu0 %v1034
        %v1102 = vpop.f32.mrb[0].mxu0
        %v1103 = vadd.f32 0.0, %v1102
        %v1104 = vpop.f32.mrb[0].mxu0
        %1105 = vdwg.mxu0
        %v1106 = vld [vmem:[#allocation14] sm:$0xff]
        %v1107 = vld [vmem:[#allocation14 + $0x8] sm:$0xff]
        %v1108 = vld [vmem:[#allocation14 + $0x10] sm:$0xff]
        %v1109 = vld [vmem:[#allocation14 + $0x18] sm:$0xff]
        %v1110 = vld [vmem:[#allocation14 + $0x20] sm:$0xff]
        %v1111 = vld [vmem:[#allocation14 + $0x28] sm:$0xff]
        %v1112 = vld [vmem:[#allocation14 + $0x30] sm:$0xff]
        %v1113 = vld [vmem:[#allocation14 + $0x38] sm:$0xff]
        %v1115 = vsel %vm944, %v1103, 0
        %1117 = vmatprep.subr.mxu0 %v1107
        %1118 = vmatpush1.msra.mxu0 %v1106
        %1119 = vmatprep.subr.mxu0 %v1109
        %1120 = vmatpush1.msra.mxu0 %v1108
        %1121 = vmatprep.subr.mxu0 %v1111
        %1122 = vmatpush1.msra.mxu0 %v1110
        %1123 = vmatprep.subr.mxu0 %v1113
        %1124 = vmatpush1.msra.mxu0 %v1112
        %1125 = vmatprep.subr.mxu0 0.0
        %1126 = vmatpush1.msra.mxu0 0.0
        %1127 = vmatprep.subr.mxu0 0.0
        %1128 = vmatpush1.msra.mxu0 0.0
        %1129 = vmatprep.subr.mxu0 0.0
        %1130 = vmatpush1.msra.mxu0 0.0
        %1131 = vmatprep.subr.mxu0 0.0
        %1132 = vmatpush1.msra.mxu0 0.0
        %1133 = vmatprep.subr.mxu0 0.0
        %1134 = vmatpush1.msra.mxu0 0.0
        %1135 = vmatprep.subr.mxu0 0.0
        %1136 = vmatpush1.msra.mxu0 0.0
        %1137 = vmatprep.subr.mxu0 0.0
        %1138 = vmatpush1.msra.mxu0 0.0
        %1139 = vmatprep.subr.mxu0 0.0
        %1140 = vmatpush1.msra.mxu0 0.0
        %1141 = vmatprep.subr.mxu0 0.0
        %1142 = vmatpush1.msra.mxu0 0.0
        %1143 = vmatprep.subr.mxu0 0.0
        %1144 = vmatpush1.msra.mxu0 0.0
        %1145 = vmatprep.subr.mxu0 0.0
        %1146 = vmatpush1.msra.mxu0 0.0
        %1147 = vmatprep.subr.mxu0 0.0
        %1148 = vmatpush1.msra.mxu0 0.0
        %1149 = vmatprep.subr.mxu0 0.0
        %1150 = vmatpush1.msra.mxu0 0.0
        %1151 = vmatprep.subr.mxu0 0.0
        %1152 = vmatpush1.msra.mxu0 0.0
        %1153 = vmatprep.subr.mxu0 0.0
        %1154 = vmatpush1.msra.mxu0 0.0
        %1155 = vmatprep.subr.mxu0 0.0
        %1156 = vmatpush1.msra.mxu0 0.0
        %1157 = vmatprep.subr.mxu0 0.0
        %1158 = vmatpush1.msra.mxu0 0.0
        %1159 = vmatprep.subr.mxu0 0.0
        %1160 = vmatpush1.msra.mxu0 0.0
        %1161 = vmatprep.subr.mxu0 0.0
        %1162 = vmatpush1.msra.mxu0 0.0
        %1163 = vmatprep.subr.mxu0 0.0
        %1164 = vmatpush1.msra.mxu0 0.0
        %1165 = vmatprep.subr.mxu0 0.0
        %1166 = vmatpush1.msra.mxu0 0.0
        %1167 = vmatprep.subr.mxu0 0.0
        %1168 = vmatpush1.msra.mxu0 0.0
        %1169 = vmatprep.subr.mxu0 0.0
        %1170 = vmatpush1.msra.mxu0 0.0
        %1171 = vmatprep.subr.mxu0 0.0
        %1172 = vmatpush1.msra.mxu0 0.0
        %1173 = vmatprep.subr.mxu0 0.0
        %1174 = vmatpush1.msra.mxu0 0.0
        %1175 = vmatprep.subr.mxu0 0.0
        %1176 = vmatpush1.msra.mxu0 0.0
        %1177 = vmatprep.subr.mxu0 0.0
        %1178 = vmatpush1.msra.mxu0 0.0
        %1179 = vmatprep.subr.mxu0 0.0
        %1180 = vmatpush1.msra.mxu0 0.0
        %1181 = vmatprep.mubr.f32.mxu0 0.0
        %1182 = vmatmul.mubr.f32.gmra.mrb[0].mxu0 %v1115
        %v1183 = vpop.f32.mrb[0].mxu0
        %v1184 = vadd.f32 0.0, %v1183
        %v1185 = vpop.f32.mrb[0].mxu0
        %v1186 = vadd.f32 0.0, %v1185
        %1187 = vdwg.mxu0
        %v1188 = vadd.f32 %v937, %v1184
        %v1189 = vadd.f32 %v941, %v1186
        %1190 = vrot.lane.b32.xlu0 %v921, 96
        %v1191 = vpop.permute.xlu0 %1190
        %1192 = vrot.lane.b32.xlu0 %v784, 96
        %v1193 = vpop.permute.xlu0 %1192
        %v1194 = vsel %vm944, %v1191, 0
        %v1196 = vsel %vm944, %v1193, 0
        %1198 = vmatprep.subr.mxu0 0.0
        %1199 = vmatpush1.xpose.msra.mxu0 %v1196
        %1200 = vmatprep.subr.mxu0 0.0
        %1201 = vmatpush1.xpose.msra.mxu0 0.0
        %1202 = vmatprep.subr.mxu0 0.0
        %1203 = vmatpush1.xpose.msra.mxu0 0.0
        %1204 = vmatprep.subr.mxu0 0.0
        %1205 = vmatpush1.xpose.msra.mxu0 0.0
        %1206 = vmatprep.subr.mxu0 0.0
        %1207 = vmatpush1.xpose.msra.mxu0 0.0
        %1208 = vmatprep.subr.mxu0 0.0
        %1209 = vmatpush1.xpose.msra.mxu0 0.0
        %1210 = vmatprep.subr.mxu0 0.0
        %1211 = vmatpush1.xpose.msra.mxu0 0.0
        %1212 = vmatprep.subr.mxu0 0.0
        %1213 = vmatpush1.xpose.msra.mxu0 0.0
        %1214 = vmatprep.subr.mxu0 0.0
        %1215 = vmatpush1.xpose.msra.mxu0 0.0
        %1216 = vmatprep.subr.mxu0 0.0
        %1217 = vmatpush1.xpose.msra.mxu0 0.0
        %1218 = vmatprep.subr.mxu0 0.0
        %1219 = vmatpush1.xpose.msra.mxu0 0.0
        %1220 = vmatprep.subr.mxu0 0.0
        %1221 = vmatpush1.xpose.msra.mxu0 0.0
        %1222 = vmatprep.subr.mxu0 0.0
        %1223 = vmatpush1.xpose.msra.mxu0 0.0
        %1224 = vmatprep.subr.mxu0 0.0
        %1225 = vmatpush1.xpose.msra.mxu0 0.0
        %1226 = vmatprep.subr.mxu0 0.0
        %1227 = vmatpush1.xpose.msra.mxu0 0.0
        %1228 = vmatprep.subr.mxu0 0.0
        %1229 = vmatpush1.xpose.msra.mxu0 0.0
        %1230 = vmatprep.subr.mxu0 0.0
        %1231 = vmatpush1.xpose.msra.mxu0 0.0
        %1232 = vmatprep.subr.mxu0 0.0
        %1233 = vmatpush1.xpose.msra.mxu0 0.0
        %1234 = vmatprep.subr.mxu0 0.0
        %1235 = vmatpush1.xpose.msra.mxu0 0.0
        %1236 = vmatprep.subr.mxu0 0.0
        %1237 = vmatpush1.xpose.msra.mxu0 0.0
        %1238 = vmatprep.subr.mxu0 0.0
        %1239 = vmatpush1.xpose.msra.mxu0 0.0
        %1240 = vmatprep.subr.mxu0 0.0
        %1241 = vmatpush1.xpose.msra.mxu0 0.0
        %1242 = vmatprep.subr.mxu0 0.0
        %1243 = vmatpush1.xpose.msra.mxu0 0.0
        %1244 = vmatprep.subr.mxu0 0.0
        %1245 = vmatpush1.xpose.msra.mxu0 0.0
        %1246 = vmatprep.subr.mxu0 0.0
        %1247 = vmatpush1.xpose.msra.mxu0 0.0
        %1248 = vmatprep.subr.mxu0 0.0
        %1249 = vmatpush1.xpose.msra.mxu0 0.0
        %1250 = vmatprep.subr.mxu0 0.0
        %1251 = vmatpush1.xpose.msra.mxu0 0.0
        %1252 = vmatprep.subr.mxu0 0.0
        %1253 = vmatpush1.xpose.msra.mxu0 0.0
        %1254 = vmatprep.subr.mxu0 0.0
        %1255 = vmatpush1.xpose.msra.mxu0 0.0
        %1256 = vmatprep.subr.mxu0 0.0
        %1257 = vmatpush1.xpose.msra.mxu0 0.0
        %1258 = vmatprep.subr.mxu0 0.0
        %1259 = vmatpush1.xpose.msra.mxu0 0.0
        %1260 = vmatprep.subr.mxu0 0.0
        %1261 = vmatpush1.xpose.msra.mxu0 0.0
        %1262 = vmatprep.mubr.f32.mxu0 0.0
        %1263 = vmatmul.mubr.f32.gmra.mrb[0].mxu0 %v1194
        %v1264 = vpop.f32.mrb[0].mxu0
        %v1265 = vadd.f32 %v930, %v1264
        %v1266 = vpop.f32.mrb[0].mxu0
        %1267 = vdwg.mxu0
        %v1268 = vsel %vm1021, %v1265, -inf
        %1269 = vmax.xlane.f32.xlu0 %v1268
        %v1270 = vpop.xlane.xlu0 %1269
        %v1271 = vsub.f32 %v1265, %v1270
        %v1272 = vmul.f32 %v1271, 1.442695
        %v1273 = vpow.pop %v1272
        %v1274 = vsel %vm1021, %v1273, 0.0
        %1275 = vadd.xlane.f32.xlu0 %v1274
        %v1276 = vpop.xlane.xlu0 %1275
        %v1277 = vrcp.pop %v1276
        %v1278 = vmul.f32 %v1273, %v1277
        %1280 = vrot.lane.b32.xlu0 %v647, 96
        %v1281 = vpop.permute.xlu0 %1280
        %v1284 = vsel %vm1021, %v1278, 0
        %1286 = vmatprep.subr.mxu0 0.0
        %1287 = vmatpush1.msra.mxu0 %v1281
        %1288 = vmatprep.subr.mxu0 0.0
        %1289 = vmatpush1.msra.mxu0 0.0
        %1290 = vmatprep.subr.mxu0 0.0
        %1291 = vmatpush1.msra.mxu0 0.0
        %1292 = vmatprep.subr.mxu0 0.0
        %1293 = vmatpush1.msra.mxu0 0.0
        %1294 = vmatprep.subr.mxu0 0.0
        %1295 = vmatpush1.msra.mxu0 0.0
        %1296 = vmatprep.subr.mxu0 0.0
        %1297 = vmatpush1.msra.mxu0 0.0
        %1298 = vmatprep.subr.mxu0 0.0
        %1299 = vmatpush1.msra.mxu0 0.0
        %1300 = vmatprep.subr.mxu0 0.0
        %1301 = vmatpush1.msra.mxu0 0.0
        %1302 = vmatprep.subr.mxu0 0.0
        %1303 = vmatpush1.msra.mxu0 0.0
        %1304 = vmatprep.subr.mxu0 0.0
        %1305 = vmatpush1.msra.mxu0 0.0
        %1306 = vmatprep.subr.mxu0 0.0
        %1307 = vmatpush1.msra.mxu0 0.0
        %1308 = vmatprep.subr.mxu0 0.0
        %1309 = vmatpush1.msra.mxu0 0.0
        %1310 = vmatprep.subr.mxu0 0.0
        %1311 = vmatpush1.msra.mxu0 0.0
        %1312 = vmatprep.subr.mxu0 0.0
        %1313 = vmatpush1.msra.mxu0 0.0
        %1314 = vmatprep.subr.mxu0 0.0
        %1315 = vmatpush1.msra.mxu0 0.0
        %1316 = vmatprep.subr.mxu0 0.0
        %1317 = vmatpush1.msra.mxu0 0.0
        %1318 = vmatprep.subr.mxu0 0.0
        %1319 = vmatpush1.msra.mxu0 0.0
        %1320 = vmatprep.subr.mxu0 0.0
        %1321 = vmatpush1.msra.mxu0 0.0
        %1322 = vmatprep.subr.mxu0 0.0
        %1323 = vmatpush1.msra.mxu0 0.0
        %1324 = vmatprep.subr.mxu0 0.0
        %1325 = vmatpush1.msra.mxu0 0.0
        %1326 = vmatprep.subr.mxu0 0.0
        %1327 = vmatpush1.msra.mxu0 0.0
        %1328 = vmatprep.subr.mxu0 0.0
        %1329 = vmatpush1.msra.mxu0 0.0
        %1330 = vmatprep.subr.mxu0 0.0
        %1331 = vmatpush1.msra.mxu0 0.0
        %1332 = vmatprep.subr.mxu0 0.0
        %1333 = vmatpush1.msra.mxu0 0.0
        %1334 = vmatprep.subr.mxu0 0.0
        %1335 = vmatpush1.msra.mxu0 0.0
        %1336 = vmatprep.subr.mxu0 0.0
        %1337 = vmatpush1.msra.mxu0 0.0
        %1338 = vmatprep.subr.mxu0 0.0
        %1339 = vmatpush1.msra.mxu0 0.0
        %1340 = vmatprep.subr.mxu0 0.0
        %1341 = vmatpush1.msra.mxu0 0.0
        %1342 = vmatprep.subr.mxu0 0.0
        %1343 = vmatpush1.msra.mxu0 0.0
        %1344 = vmatprep.subr.mxu0 0.0
        %1345 = vmatpush1.msra.mxu0 0.0
        %1346 = vmatprep.subr.mxu0 0.0
        %1347 = vmatpush1.msra.mxu0 0.0
        %1348 = vmatprep.subr.mxu0 0.0
        %1349 = vmatpush1.msra.mxu0 0.0
        %1350 = vmatprep.mubr.f32.mxu0 0.0
        %1351 = vmatmul.mubr.f32.gmra.mrb[0].mxu0 %v1284
        %v1352 = vpop.f32.mrb[0].mxu0
        %v1353 = vadd.f32 0.0, %v1352
        %v1354 = vpop.f32.mrb[0].mxu0
        %1355 = vdwg.mxu0
        %v1356 = vld [vmem:[#allocation14 + $0x40] sm:$0xff]
        %v1357 = vld [vmem:[#allocation14 + $0x48] sm:$0xff]
        %v1358 = vld [vmem:[#allocation14 + $0x50] sm:$0xff]
        %v1359 = vld [vmem:[#allocation14 + $0x58] sm:$0xff]
        %v1360 = vld [vmem:[#allocation14 + $0x60] sm:$0xff]
        %v1361 = vld [vmem:[#allocation14 + $0x68] sm:$0xff]
        %v1362 = vld [vmem:[#allocation14 + $0x70] sm:$0xff]
        %v1363 = vld [vmem:[#allocation14 + $0x78] sm:$0xff]
        %v1365 = vsel %vm944, %v1353, 0
        %1367 = vmatprep.subr.mxu0 %v1357
        %1368 = vmatpush1.msra.mxu0 %v1356
        %1369 = vmatprep.subr.mxu0 %v1359
        %1370 = vmatpush1.msra.mxu0 %v1358
        %1371 = vmatprep.subr.mxu0 %v1361
        %1372 = vmatpush1.msra.mxu0 %v1360
        %1373 = vmatprep.subr.mxu0 %v1363
        %1374 = vmatpush1.msra.mxu0 %v1362
        %1375 = vmatprep.subr.mxu0 0.0
        %1376 = vmatpush1.msra.mxu0 0.0
        %1377 = vmatprep.subr.mxu0 0.0
        %1378 = vmatpush1.msra.mxu0 0.0
        %1379 = vmatprep.subr.mxu0 0.0
        %1380 = vmatpush1.msra.mxu0 0.0
        %1381 = vmatprep.subr.mxu0 0.0
        %1382 = vmatpush1.msra.mxu0 0.0
        %1383 = vmatprep.subr.mxu0 0.0
        %1384 = vmatpush1.msra.mxu0 0.0
        %1385 = vmatprep.subr.mxu0 0.0
        %1386 = vmatpush1.msra.mxu0 0.0
        %1387 = vmatprep.subr.mxu0 0.0
        %1388 = vmatpush1.msra.mxu0 0.0
        %1389 = vmatprep.subr.mxu0 0.0
        %1390 = vmatpush1.msra.mxu0 0.0
        %1391 = vmatprep.subr.mxu0 0.0
        %1392 = vmatpush1.msra.mxu0 0.0
        %1393 = vmatprep.subr.mxu0 0.0
        %1394 = vmatpush1.msra.mxu0 0.0
        %1395 = vmatprep.subr.mxu0 0.0
        %1396 = vmatpush1.msra.mxu0 0.0
        %1397 = vmatprep.subr.mxu0 0.0
        %1398 = vmatpush1.msra.mxu0 0.0
        %1399 = vmatprep.subr.mxu0 0.0
        %1400 = vmatpush1.msra.mxu0 0.0
        %1401 = vmatprep.subr.mxu0 0.0
        %1402 = vmatpush1.msra.mxu0 0.0
        %1403 = vmatprep.subr.mxu0 0.0
        %1404 = vmatpush1.msra.mxu0 0.0
        %1405 = vmatprep.subr.mxu0 0.0
        %1406 = vmatpush1.msra.mxu0 0.0
        %1407 = vmatprep.subr.mxu0 0.0
        %1408 = vmatpush1.msra.mxu0 0.0
        %1409 = vmatprep.subr.mxu0 0.0
        %1410 = vmatpush1.msra.mxu0 0.0
        %1411 = vmatprep.subr.mxu0 0.0
        %1412 = vmatpush1.msra.mxu0 0.0
        %1413 = vmatprep.subr.mxu0 0.0
        %1414 = vmatpush1.msra.mxu0 0.0
        %1415 = vmatprep.subr.mxu0 0.0
        %1416 = vmatpush1.msra.mxu0 0.0
        %1417 = vmatprep.subr.mxu0 0.0
        %1418 = vmatpush1.msra.mxu0 0.0
        %1419 = vmatprep.subr.mxu0 0.0
        %1420 = vmatpush1.msra.mxu0 0.0
        %1421 = vmatprep.subr.mxu0 0.0
        %1422 = vmatpush1.msra.mxu0 0.0
        %1423 = vmatprep.subr.mxu0 0.0
        %1424 = vmatpush1.msra.mxu0 0.0
        %1425 = vmatprep.subr.mxu0 0.0
        %1426 = vmatpush1.msra.mxu0 0.0
        %1427 = vmatprep.subr.mxu0 0.0
        %1428 = vmatpush1.msra.mxu0 0.0
        %1429 = vmatprep.subr.mxu0 0.0
        %1430 = vmatpush1.msra.mxu0 0.0
        %1431 = vmatprep.mubr.f32.mxu0 0.0
        %1432 = vmatmul.mubr.f32.gmra.mrb[0].mxu0 %v1365
        %v1433 = vpop.f32.mrb[0].mxu0
        %v1434 = vadd.f32 0.0, %v1433
        %v1435 = vpop.f32.mrb[0].mxu0
        %v1436 = vadd.f32 0.0, %v1435
        %1437 = vdwg.mxu0
        %v1438 = vadd.f32 %v1188, %v1434
        %v1439 = vadd.f32 %v1189, %v1436
        %1440 = vrot.lane.b32.xlu0 %v921, 64
        %v1441 = vpop.permute.xlu0 %1440
        %1442 = vrot.lane.b32.xlu0 %v784, 64
        %v1443 = vpop.permute.xlu0 %1442
        %v1444 = vsel %vm944, %v1441, 0
        %v1446 = vsel %vm944, %v1443, 0
        %1448 = vmatprep.subr.mxu0 0.0
        %1449 = vmatpush1.xpose.msra.mxu0 %v1446
        %1450 = vmatprep.subr.mxu0 0.0
        %1451 = vmatpush1.xpose.msra.mxu0 0.0
        %1452 = vmatprep.subr.mxu0 0.0
        %1453 = vmatpush1.xpose.msra.mxu0 0.0
        %1454 = vmatprep.subr.mxu0 0.0
        %1455 = vmatpush1.xpose.msra.mxu0 0.0
        %1456 = vmatprep.subr.mxu0 0.0
        %1457 = vmatpush1.xpose.msra.mxu0 0.0
        %1458 = vmatprep.subr.mxu0 0.0
        %1459 = vmatpush1.xpose.msra.mxu0 0.0
        %1460 = vmatprep.subr.mxu0 0.0
        %1461 = vmatpush1.xpose.msra.mxu0 0.0
        %1462 = vmatprep.subr.mxu0 0.0
        %1463 = vmatpush1.xpose.msra.mxu0 0.0
        %1464 = vmatprep.subr.mxu0 0.0
        %1465 = vmatpush1.xpose.msra.mxu0 0.0
        %1466 = vmatprep.subr.mxu0 0.0
        %1467 = vmatpush1.xpose.msra.mxu0 0.0
        %1468 = vmatprep.subr.mxu0 0.0
        %1469 = vmatpush1.xpose.msra.mxu0 0.0
        %1470 = vmatprep.subr.mxu0 0.0
        %1471 = vmatpush1.xpose.msra.mxu0 0.0
        %1472 = vmatprep.subr.mxu0 0.0
        %1473 = vmatpush1.xpose.msra.mxu0 0.0
        %1474 = vmatprep.subr.mxu0 0.0
        %1475 = vmatpush1.xpose.msra.mxu0 0.0
        %1476 = vmatprep.subr.mxu0 0.0
        %1477 = vmatpush1.xpose.msra.mxu0 0.0
        %1478 = vmatprep.subr.mxu0 0.0
        %1479 = vmatpush1.xpose.msra.mxu0 0.0
        %1480 = vmatprep.subr.mxu0 0.0
        %1481 = vmatpush1.xpose.msra.mxu0 0.0
        %1482 = vmatprep.subr.mxu0 0.0
        %1483 = vmatpush1.xpose.msra.mxu0 0.0
        %1484 = vmatprep.subr.mxu0 0.0
        %1485 = vmatpush1.xpose.msra.mxu0 0.0
        %1486 = vmatprep.subr.mxu0 0.0
        %1487 = vmatpush1.xpose.msra.mxu0 0.0
        %1488 = vmatprep.subr.mxu0 0.0
        %1489 = vmatpush1.xpose.msra.mxu0 0.0
        %1490 = vmatprep.subr.mxu0 0.0
        %1491 = vmatpush1.xpose.msra.mxu0 0.0
        %1492 = vmatprep.subr.mxu0 0.0
        %1493 = vmatpush1.xpose.msra.mxu0 0.0
        %1494 = vmatprep.subr.mxu0 0.0
        %1495 = vmatpush1.xpose.msra.mxu0 0.0
        %1496 = vmatprep.subr.mxu0 0.0
        %1497 = vmatpush1.xpose.msra.mxu0 0.0
        %1498 = vmatprep.subr.mxu0 0.0
        %1499 = vmatpush1.xpose.msra.mxu0 0.0
        %1500 = vmatprep.subr.mxu0 0.0
        %1501 = vmatpush1.xpose.msra.mxu0 0.0
        %1502 = vmatprep.subr.mxu0 0.0
        %1503 = vmatpush1.xpose.msra.mxu0 0.0
        %1504 = vmatprep.subr.mxu0 0.0
        %1505 = vmatpush1.xpose.msra.mxu0 0.0
        %1506 = vmatprep.subr.mxu0 0.0
        %1507 = vmatpush1.xpose.msra.mxu0 0.0
        %1508 = vmatprep.subr.mxu0 0.0
        %1509 = vmatpush1.xpose.msra.mxu0 0.0
        %1510 = vmatprep.subr.mxu0 0.0
        %1511 = vmatpush1.xpose.msra.mxu0 0.0
        %1512 = vmatprep.mubr.f32.mxu0 0.0
        %1513 = vmatmul.mubr.f32.gmra.mrb[0].mxu0 %v1444
        %v1514 = vpop.f32.mrb[0].mxu0
        %v1515 = vadd.f32 %v930, %v1514
        %v1516 = vpop.f32.mrb[0].mxu0
        %1517 = vdwg.mxu0
        %v1518 = vsel %vm1021, %v1515, -inf
        %1519 = vmax.xlane.f32.xlu0 %v1518
        %v1520 = vpop.xlane.xlu0 %1519
        %v1521 = vsub.f32 %v1515, %v1520
        %v1522 = vmul.f32 %v1521, 1.442695
        %v1523 = vpow.pop %v1522
        %v1524 = vsel %vm1021, %v1523, 0.0
        %1525 = vadd.xlane.f32.xlu0 %v1524
        %v1526 = vpop.xlane.xlu0 %1525
        %v1527 = vrcp.pop %v1526
        %v1528 = vmul.f32 %v1523, %v1527
        %1529 = vrot.lane.b32.xlu0 %v647, 64
        %v1530 = vpop.permute.xlu0 %1529
        %v1533 = vsel %vm1021, %v1528, 0
        %1535 = vmatprep.subr.mxu0 0.0
        %1536 = vmatpush1.msra.mxu0 %v1530
        %1537 = vmatprep.subr.mxu0 0.0
        %1538 = vmatpush1.msra.mxu0 0.0
        %1539 = vmatprep.subr.mxu0 0.0
        %1540 = vmatpush1.msra.mxu0 0.0
        %1541 = vmatprep.subr.mxu0 0.0
        %1542 = vmatpush1.msra.mxu0 0.0
        %1543 = vmatprep.subr.mxu0 0.0
        %1544 = vmatpush1.msra.mxu0 0.0
        %1545 = vmatprep.subr.mxu0 0.0
        %1546 = vmatpush1.msra.mxu0 0.0
        %1547 = vmatprep.subr.mxu0 0.0
        %1548 = vmatpush1.msra.mxu0 0.0
        %1549 = vmatprep.subr.mxu0 0.0
        %1550 = vmatpush1.msra.mxu0 0.0
        %1551 = vmatprep.subr.mxu0 0.0
        %1552 = vmatpush1.msra.mxu0 0.0
        %1553 = vmatprep.subr.mxu0 0.0
        %1554 = vmatpush1.msra.mxu0 0.0
        %1555 = vmatprep.subr.mxu0 0.0
        %1556 = vmatpush1.msra.mxu0 0.0
        %1557 = vmatprep.subr.mxu0 0.0
        %1558 = vmatpush1.msra.mxu0 0.0
        %1559 = vmatprep.subr.mxu0 0.0
        %1560 = vmatpush1.msra.mxu0 0.0
        %1561 = vmatprep.subr.mxu0 0.0
        %1562 = vmatpush1.msra.mxu0 0.0
        %1563 = vmatprep.subr.mxu0 0.0
        %1564 = vmatpush1.msra.mxu0 0.0
        %1565 = vmatprep.subr.mxu0 0.0
        %1566 = vmatpush1.msra.mxu0 0.0
        %1567 = vmatprep.subr.mxu0 0.0
        %1568 = vmatpush1.msra.mxu0 0.0
        %1569 = vmatprep.subr.mxu0 0.0
        %1570 = vmatpush1.msra.mxu0 0.0
        %1571 = vmatprep.subr.mxu0 0.0
        %1572 = vmatpush1.msra.mxu0 0.0
        %1573 = vmatprep.subr.mxu0 0.0
        %1574 = vmatpush1.msra.mxu0 0.0
        %1575 = vmatprep.subr.mxu0 0.0
        %1576 = vmatpush1.msra.mxu0 0.0
        %1577 = vmatprep.subr.mxu0 0.0
        %1578 = vmatpush1.msra.mxu0 0.0
        %1579 = vmatprep.subr.mxu0 0.0
        %1580 = vmatpush1.msra.mxu0 0.0
        %1581 = vmatprep.subr.mxu0 0.0
        %1582 = vmatpush1.msra.mxu0 0.0
        %1583 = vmatprep.subr.mxu0 0.0
        %1584 = vmatpush1.msra.mxu0 0.0
        %1585 = vmatprep.subr.mxu0 0.0
        %1586 = vmatpush1.msra.mxu0 0.0
        %1587 = vmatprep.subr.mxu0 0.0
        %1588 = vmatpush1.msra.mxu0 0.0
        %1589 = vmatprep.subr.mxu0 0.0
        %1590 = vmatpush1.msra.mxu0 0.0
        %1591 = vmatprep.subr.mxu0 0.0
        %1592 = vmatpush1.msra.mxu0 0.0
        %1593 = vmatprep.subr.mxu0 0.0
        %1594 = vmatpush1.msra.mxu0 0.0
        %1595 = vmatprep.subr.mxu0 0.0
        %1596 = vmatpush1.msra.mxu0 0.0
        %1597 = vmatprep.subr.mxu0 0.0
        %1598 = vmatpush1.msra.mxu0 0.0
        %1599 = vmatprep.mubr.f32.mxu0 0.0
        %1600 = vmatmul.mubr.f32.gmra.mrb[0].mxu0 %v1533
        %v1601 = vpop.f32.mrb[0].mxu0
        %v1602 = vadd.f32 0.0, %v1601
        %v1603 = vpop.f32.mrb[0].mxu0
        %1604 = vdwg.mxu0
        %v1605 = vld [vmem:[#allocation14 + $0x80] sm:$0xff]
        %v1606 = vld [vmem:[#allocation14 + $0x88] sm:$0xff]
        %v1607 = vld [vmem:[#allocation14 + $0x90] sm:$0xff]
        %v1608 = vld [vmem:[#allocation14 + $0x98] sm:$0xff]
        %v1609 = vld [vmem:[#allocation14 + $0xa0] sm:$0xff]
        %v1610 = vld [vmem:[#allocation14 + $0xa8] sm:$0xff]
        %v1611 = vld [vmem:[#allocation14 + $0xb0] sm:$0xff]
        %v1612 = vld [vmem:[#allocation14 + $0xb8] sm:$0xff]
        %v1614 = vsel %vm944, %v1602, 0
        %1616 = vmatprep.subr.mxu0 %v1606
        %1617 = vmatpush1.msra.mxu0 %v1605
        %1618 = vmatprep.subr.mxu0 %v1608
        %1619 = vmatpush1.msra.mxu0 %v1607
        %1620 = vmatprep.subr.mxu0 %v1610
        %1621 = vmatpush1.msra.mxu0 %v1609
        %1622 = vmatprep.subr.mxu0 %v1612
        %1623 = vmatpush1.msra.mxu0 %v1611
        %1624 = vmatprep.subr.mxu0 0.0
        %1625 = vmatpush1.msra.mxu0 0.0
        %1626 = vmatprep.subr.mxu0 0.0
        %1627 = vmatpush1.msra.mxu0 0.0
        %1628 = vmatprep.subr.mxu0 0.0
        %1629 = vmatpush1.msra.mxu0 0.0
        %1630 = vmatprep.subr.mxu0 0.0
        %1631 = vmatpush1.msra.mxu0 0.0
        %1632 = vmatprep.subr.mxu0 0.0
        %1633 = vmatpush1.msra.mxu0 0.0
        %1634 = vmatprep.subr.mxu0 0.0
        %1635 = vmatpush1.msra.mxu0 0.0
        %1636 = vmatprep.subr.mxu0 0.0
        %1637 = vmatpush1.msra.mxu0 0.0
        %1638 = vmatprep.subr.mxu0 0.0
        %1639 = vmatpush1.msra.mxu0 0.0
        %1640 = vmatprep.subr.mxu0 0.0
        %1641 = vmatpush1.msra.mxu0 0.0
        %1642 = vmatprep.subr.mxu0 0.0
        %1643 = vmatpush1.msra.mxu0 0.0
        %1644 = vmatprep.subr.mxu0 0.0
        %1645 = vmatpush1.msra.mxu0 0.0
        %1646 = vmatprep.subr.mxu0 0.0
        %1647 = vmatpush1.msra.mxu0 0.0
        %1648 = vmatprep.subr.mxu0 0.0
        %1649 = vmatpush1.msra.mxu0 0.0
        %1650 = vmatprep.subr.mxu0 0.0
        %1651 = vmatpush1.msra.mxu0 0.0
        %1652 = vmatprep.subr.mxu0 0.0
        %1653 = vmatpush1.msra.mxu0 0.0
        %1654 = vmatprep.subr.mxu0 0.0
        %1655 = vmatpush1.msra.mxu0 0.0
        %1656 = vmatprep.subr.mxu0 0.0
        %1657 = vmatpush1.msra.mxu0 0.0
        %1658 = vmatprep.subr.mxu0 0.0
        %1659 = vmatpush1.msra.mxu0 0.0
        %1660 = vmatprep.subr.mxu0 0.0
        %1661 = vmatpush1.msra.mxu0 0.0
        %1662 = vmatprep.subr.mxu0 0.0
        %1663 = vmatpush1.msra.mxu0 0.0
        %1664 = vmatprep.subr.mxu0 0.0
        %1665 = vmatpush1.msra.mxu0 0.0
        %1666 = vmatprep.subr.mxu0 0.0
        %1667 = vmatpush1.msra.mxu0 0.0
        %1668 = vmatprep.subr.mxu0 0.0
        %1669 = vmatpush1.msra.mxu0 0.0
        %1670 = vmatprep.subr.mxu0 0.0
        %1671 = vmatpush1.msra.mxu0 0.0
        %1672 = vmatprep.subr.mxu0 0.0
        %1673 = vmatpush1.msra.mxu0 0.0
        %1674 = vmatprep.subr.mxu0 0.0
        %1675 = vmatpush1.msra.mxu0 0.0
        %1676 = vmatprep.subr.mxu0 0.0
        %1677 = vmatpush1.msra.mxu0 0.0
        %1678 = vmatprep.subr.mxu0 0.0
        %1679 = vmatpush1.msra.mxu0 0.0
        %1680 = vmatprep.mubr.f32.mxu0 0.0
        %1681 = vmatmul.mubr.f32.gmra.mrb[0].mxu0 %v1614
        %v1682 = vpop.f32.mrb[0].mxu0
        %v1683 = vadd.f32 0.0, %v1682
        %v1684 = vpop.f32.mrb[0].mxu0
        %v1685 = vadd.f32 0.0, %v1684
        %1686 = vdwg.mxu0
        %v1687 = vadd.f32 %v1438, %v1683
        %v1688 = vadd.f32 %v1439, %v1685
        %1689 = vrot.lane.b32.xlu0 %v921, 32
        %v1690 = vpop.permute.xlu0 %1689
        %1691 = vrot.lane.b32.xlu0 %v784, 32
        %v1692 = vpop.permute.xlu0 %1691
        %v1693 = vsel %vm944, %v1690, 0
        %v1695 = vsel %vm944, %v1692, 0
        %1697 = vmatprep.subr.mxu0 0.0
        %1698 = vmatpush1.xpose.msra.mxu0 %v1695
        %1699 = vmatprep.subr.mxu0 0.0
        %1700 = vmatpush1.xpose.msra.mxu0 0.0
        %1701 = vmatprep.subr.mxu0 0.0
        %1702 = vmatpush1.xpose.msra.mxu0 0.0
        %1703 = vmatprep.subr.mxu0 0.0
        %1704 = vmatpush1.xpose.msra.mxu0 0.0
        %1705 = vmatprep.subr.mxu0 0.0
        %1706 = vmatpush1.xpose.msra.mxu0 0.0
        %1707 = vmatprep.subr.mxu0 0.0
        %1708 = vmatpush1.xpose.msra.mxu0 0.0
        %1709 = vmatprep.subr.mxu0 0.0
        %1710 = vmatpush1.xpose.msra.mxu0 0.0
        %1711 = vmatprep.subr.mxu0 0.0
        %1712 = vmatpush1.xpose.msra.mxu0 0.0
        %1713 = vmatprep.subr.mxu0 0.0
        %1714 = vmatpush1.xpose.msra.mxu0 0.0
        %1715 = vmatprep.subr.mxu0 0.0
        %1716 = vmatpush1.xpose.msra.mxu0 0.0
        %1717 = vmatprep.subr.mxu0 0.0
        %1718 = vmatpush1.xpose.msra.mxu0 0.0
        %1719 = vmatprep.subr.mxu0 0.0
        %1720 = vmatpush1.xpose.msra.mxu0 0.0
        %1721 = vmatprep.subr.mxu0 0.0
        %1722 = vmatpush1.xpose.msra.mxu0 0.0
        %1723 = vmatprep.subr.mxu0 0.0
        %1724 = vmatpush1.xpose.msra.mxu0 0.0
        %1725 = vmatprep.subr.mxu0 0.0
        %1726 = vmatpush1.xpose.msra.mxu0 0.0
        %1727 = vmatprep.subr.mxu0 0.0
        %1728 = vmatpush1.xpose.msra.mxu0 0.0
        %1729 = vmatprep.subr.mxu0 0.0
        %1730 = vmatpush1.xpose.msra.mxu0 0.0
        %1731 = vmatprep.subr.mxu0 0.0
        %1732 = vmatpush1.xpose.msra.mxu0 0.0
        %1733 = vmatprep.subr.mxu0 0.0
        %1734 = vmatpush1.xpose.msra.mxu0 0.0
        %1735 = vmatprep.subr.mxu0 0.0
        %1736 = vmatpush1.xpose.msra.mxu0 0.0
        %1737 = vmatprep.subr.mxu0 0.0
        %1738 = vmatpush1.xpose.msra.mxu0 0.0
        %1739 = vmatprep.subr.mxu0 0.0
        %1740 = vmatpush1.xpose.msra.mxu0 0.0
        %1741 = vmatprep.subr.mxu0 0.0
        %1742 = vmatpush1.xpose.msra.mxu0 0.0
        %1743 = vmatprep.subr.mxu0 0.0
        %1744 = vmatpush1.xpose.msra.mxu0 0.0
        %1745 = vmatprep.subr.mxu0 0.0
        %1746 = vmatpush1.xpose.msra.mxu0 0.0
        %1747 = vmatprep.subr.mxu0 0.0
        %1748 = vmatpush1.xpose.msra.mxu0 0.0
        %1749 = vmatprep.subr.mxu0 0.0
        %1750 = vmatpush1.xpose.msra.mxu0 0.0
        %1751 = vmatprep.subr.mxu0 0.0
        %1752 = vmatpush1.xpose.msra.mxu0 0.0
        %1753 = vmatprep.subr.mxu0 0.0
        %1754 = vmatpush1.xpose.msra.mxu0 0.0
        %1755 = vmatprep.subr.mxu0 0.0
        %1756 = vmatpush1.xpose.msra.mxu0 0.0
        %1757 = vmatprep.subr.mxu0 0.0
        %1758 = vmatpush1.xpose.msra.mxu0 0.0
        %1759 = vmatprep.subr.mxu0 0.0
        %1760 = vmatpush1.xpose.msra.mxu0 0.0
        %1761 = vmatprep.mubr.f32.mxu0 0.0
        %1762 = vmatmul.mubr.f32.gmra.mrb[0].mxu0 %v1693
        %v1763 = vpop.f32.mrb[0].mxu0
        %v1764 = vadd.f32 %v930, %v1763
        %v1765 = vpop.f32.mrb[0].mxu0
        %1766 = vdwg.mxu0
        %v1767 = vsel %vm1021, %v1764, -inf
        %1768 = vmax.xlane.f32.xlu0 %v1767
        %v1769 = vpop.xlane.xlu0 %1768
        %v1770 = vsub.f32 %v1764, %v1769
        %v1771 = vmul.f32 %v1770, 1.442695
        %v1772 = vpow.pop %v1771
        %v1773 = vsel %vm1021, %v1772, 0.0
        %1774 = vadd.xlane.f32.xlu0 %v1773
        %v1775 = vpop.xlane.xlu0 %1774
        %v1776 = vrcp.pop %v1775
        %v1777 = vmul.f32 %v1772, %v1776
        %1778 = vrot.lane.b32.xlu0 %v647, 32
        %v1779 = vpop.permute.xlu0 %1778
        %v1782 = vsel %vm1021, %v1777, 0
        %1784 = vmatprep.subr.mxu0 0.0
        %1785 = vmatpush1.msra.mxu0 %v1779
        %1786 = vmatprep.subr.mxu0 0.0
        %1787 = vmatpush1.msra.mxu0 0.0
        %1788 = vmatprep.subr.mxu0 0.0
        %1789 = vmatpush1.msra.mxu0 0.0
        %1790 = vmatprep.subr.mxu0 0.0
        %1791 = vmatpush1.msra.mxu0 0.0
        %1792 = vmatprep.subr.mxu0 0.0
        %1793 = vmatpush1.msra.mxu0 0.0
        %1794 = vmatprep.subr.mxu0 0.0
        %1795 = vmatpush1.msra.mxu0 0.0
        %1796 = vmatprep.subr.mxu0 0.0
        %1797 = vmatpush1.msra.mxu0 0.0
        %1798 = vmatprep.subr.mxu0 0.0
        %1799 = vmatpush1.msra.mxu0 0.0
        %1800 = vmatprep.subr.mxu0 0.0
        %1801 = vmatpush1.msra.mxu0 0.0
        %1802 = vmatprep.subr.mxu0 0.0
        %1803 = vmatpush1.msra.mxu0 0.0
        %1804 = vmatprep.subr.mxu0 0.0
        %1805 = vmatpush1.msra.mxu0 0.0
        %1806 = vmatprep.subr.mxu0 0.0
        %1807 = vmatpush1.msra.mxu0 0.0
        %1808 = vmatprep.subr.mxu0 0.0
        %1809 = vmatpush1.msra.mxu0 0.0
        %1810 = vmatprep.subr.mxu0 0.0
        %1811 = vmatpush1.msra.mxu0 0.0
        %1812 = vmatprep.subr.mxu0 0.0
        %1813 = vmatpush1.msra.mxu0 0.0
        %1814 = vmatprep.subr.mxu0 0.0
        %1815 = vmatpush1.msra.mxu0 0.0
        %1816 = vmatprep.subr.mxu0 0.0
        %1817 = vmatpush1.msra.mxu0 0.0
        %1818 = vmatprep.subr.mxu0 0.0
        %1819 = vmatpush1.msra.mxu0 0.0
        %1820 = vmatprep.subr.mxu0 0.0
        %1821 = vmatpush1.msra.mxu0 0.0
        %1822 = vmatprep.subr.mxu0 0.0
        %1823 = vmatpush1.msra.mxu0 0.0
        %1824 = vmatprep.subr.mxu0 0.0
        %1825 = vmatpush1.msra.mxu0 0.0
        %1826 = vmatprep.subr.mxu0 0.0
        %1827 = vmatpush1.msra.mxu0 0.0
        %1828 = vmatprep.subr.mxu0 0.0
        %1829 = vmatpush1.msra.mxu0 0.0
        %1830 = vmatprep.subr.mxu0 0.0
        %1831 = vmatpush1.msra.mxu0 0.0
        %1832 = vmatprep.subr.mxu0 0.0
        %1833 = vmatpush1.msra.mxu0 0.0
        %1834 = vmatprep.subr.mxu0 0.0
        %1835 = vmatpush1.msra.mxu0 0.0
        %1836 = vmatprep.subr.mxu0 0.0
        %1837 = vmatpush1.msra.mxu0 0.0
        %1838 = vmatprep.subr.mxu0 0.0
        %1839 = vmatpush1.msra.mxu0 0.0
        %1840 = vmatprep.subr.mxu0 0.0
        %1841 = vmatpush1.msra.mxu0 0.0
        %1842 = vmatprep.subr.mxu0 0.0
        %1843 = vmatpush1.msra.mxu0 0.0
        %1844 = vmatprep.subr.mxu0 0.0
        %1845 = vmatpush1.msra.mxu0 0.0
        %1846 = vmatprep.subr.mxu0 0.0
        %1847 = vmatpush1.msra.mxu0 0.0
        %1848 = vmatprep.mubr.f32.mxu0 0.0
        %1849 = vmatmul.mubr.f32.gmra.mrb[0].mxu0 %v1782
        %v1850 = vpop.f32.mrb[0].mxu0
        %v1851 = vadd.f32 0.0, %v1850
        %v1852 = vpop.f32.mrb[0].mxu0
        %1853 = vdwg.mxu0
        %v1854 = vld [vmem:[#allocation14 + $0xc0] sm:$0xff]
        %v1855 = vld [vmem:[#allocation14 + $0xc8] sm:$0xff]
        %v1856 = vld [vmem:[#allocation14 + $0xd0] sm:$0xff]
        %v1857 = vld [vmem:[#allocation14 + $0xd8] sm:$0xff]
        %v1858 = vld [vmem:[#allocation14 + $0xe0] sm:$0xff]
        %v1859 = vld [vmem:[#allocation14 + $0xe8] sm:$0xff]
        %v1860 = vld [vmem:[#allocation14 + $0xf0] sm:$0xff]
        %v1861 = vld [vmem:[#allocation14 + $0xf8] sm:$0xff]
        %v1863 = vsel %vm944, %v1851, 0
        %1865 = vmatprep.subr.mxu0 %v1855
        %1866 = vmatpush1.msra.mxu0 %v1854
        %1867 = vmatprep.subr.mxu0 %v1857
        %1868 = vmatpush1.msra.mxu0 %v1856
        %1869 = vmatprep.subr.mxu0 %v1859
        %1870 = vmatpush1.msra.mxu0 %v1858
        %1871 = vmatprep.subr.mxu0 %v1861
        %1872 = vmatpush1.msra.mxu0 %v1860
        %1873 = vmatprep.subr.mxu0 0.0
        %1874 = vmatpush1.msra.mxu0 0.0
        %1875 = vmatprep.subr.mxu0 0.0
        %1876 = vmatpush1.msra.mxu0 0.0
        %1877 = vmatprep.subr.mxu0 0.0
        %1878 = vmatpush1.msra.mxu0 0.0
        %1879 = vmatprep.subr.mxu0 0.0
        %1880 = vmatpush1.msra.mxu0 0.0
        %1881 = vmatprep.subr.mxu0 0.0
        %1882 = vmatpush1.msra.mxu0 0.0
        %1883 = vmatprep.subr.mxu0 0.0
        %1884 = vmatpush1.msra.mxu0 0.0
        %1885 = vmatprep.subr.mxu0 0.0
        %1886 = vmatpush1.msra.mxu0 0.0
        %1887 = vmatprep.subr.mxu0 0.0
        %1888 = vmatpush1.msra.mxu0 0.0
        %1889 = vmatprep.subr.mxu0 0.0
        %1890 = vmatpush1.msra.mxu0 0.0
        %1891 = vmatprep.subr.mxu0 0.0
        %1892 = vmatpush1.msra.mxu0 0.0
        %1893 = vmatprep.subr.mxu0 0.0
        %1894 = vmatpush1.msra.mxu0 0.0
        %1895 = vmatprep.subr.mxu0 0.0
        %1896 = vmatpush1.msra.mxu0 0.0
        %1897 = vmatprep.subr.mxu0 0.0
        %1898 = vmatpush1.msra.mxu0 0.0
        %1899 = vmatprep.subr.mxu0 0.0
        %1900 = vmatpush1.msra.mxu0 0.0
        %1901 = vmatprep.subr.mxu0 0.0
        %1902 = vmatpush1.msra.mxu0 0.0
        %1903 = vmatprep.subr.mxu0 0.0
        %1904 = vmatpush1.msra.mxu0 0.0
        %1905 = vmatprep.subr.mxu0 0.0
        %1906 = vmatpush1.msra.mxu0 0.0
        %1907 = vmatprep.subr.mxu0 0.0
        %1908 = vmatpush1.msra.mxu0 0.0
        %1909 = vmatprep.subr.mxu0 0.0
        %1910 = vmatpush1.msra.mxu0 0.0
        %1911 = vmatprep.subr.mxu0 0.0
        %1912 = vmatpush1.msra.mxu0 0.0
        %1913 = vmatprep.subr.mxu0 0.0
        %1914 = vmatpush1.msra.mxu0 0.0
        %1915 = vmatprep.subr.mxu0 0.0
        %1916 = vmatpush1.msra.mxu0 0.0
        %1917 = vmatprep.subr.mxu0 0.0
        %1918 = vmatpush1.msra.mxu0 0.0
        %1919 = vmatprep.subr.mxu0 0.0
        %1920 = vmatpush1.msra.mxu0 0.0
        %1921 = vmatprep.subr.mxu0 0.0
        %1922 = vmatpush1.msra.mxu0 0.0
        %1923 = vmatprep.subr.mxu0 0.0
        %1924 = vmatpush1.msra.mxu0 0.0
        %1925 = vmatprep.subr.mxu0 0.0
        %1926 = vmatpush1.msra.mxu0 0.0
        %1927 = vmatprep.subr.mxu0 0.0
        %1928 = vmatpush1.msra.mxu0 0.0
        %1929 = vmatprep.mubr.f32.mxu0 0.0
        %1930 = vmatmul.mubr.f32.gmra.mrb[0].mxu0 %v1863
        %v1931 = vpop.f32.mrb[0].mxu0
        %v1932 = vadd.f32 0.0, %v1931
        %v1933 = vpop.f32.mrb[0].mxu0
        %v1934 = vadd.f32 0.0, %v1933
        %1935 = vdwg.mxu0
        %v1936 = vadd.f32 %v1687, %v1932
        %v1937 = vadd.f32 %v1688, %v1934
        %v1939 = vsel %vm944, %v923, 0
        %v1942 = vsel %vm944, %v786, 0
        %1944 = vmatprep.subr.mxu0 0.0
        %1945 = vmatpush1.xpose.msra.mxu0 %v1942
        %1946 = vmatprep.subr.mxu0 0.0
        %1947 = vmatpush1.xpose.msra.mxu0 0.0
        %1948 = vmatprep.subr.mxu0 0.0
        %1949 = vmatpush1.xpose.msra.mxu0 0.0
        %1950 = vmatprep.subr.mxu0 0.0
        %1951 = vmatpush1.xpose.msra.mxu0 0.0
        %1952 = vmatprep.subr.mxu0 0.0
        %1953 = vmatpush1.xpose.msra.mxu0 0.0
        %1954 = vmatprep.subr.mxu0 0.0
        %1955 = vmatpush1.xpose.msra.mxu0 0.0
        %1956 = vmatprep.subr.mxu0 0.0
        %1957 = vmatpush1.xpose.msra.mxu0 0.0
        %1958 = vmatprep.subr.mxu0 0.0
        %1959 = vmatpush1.xpose.msra.mxu0 0.0
        %1960 = vmatprep.subr.mxu0 0.0
        %1961 = vmatpush1.xpose.msra.mxu0 0.0
        %1962 = vmatprep.subr.mxu0 0.0
        %1963 = vmatpush1.xpose.msra.mxu0 0.0
        %1964 = vmatprep.subr.mxu0 0.0
        %1965 = vmatpush1.xpose.msra.mxu0 0.0
        %1966 = vmatprep.subr.mxu0 0.0
        %1967 = vmatpush1.xpose.msra.mxu0 0.0
        %1968 = vmatprep.subr.mxu0 0.0
        %1969 = vmatpush1.xpose.msra.mxu0 0.0
        %1970 = vmatprep.subr.mxu0 0.0
        %1971 = vmatpush1.xpose.msra.mxu0 0.0
        %1972 = vmatprep.subr.mxu0 0.0
        %1973 = vmatpush1.xpose.msra.mxu0 0.0
        %1974 = vmatprep.subr.mxu0 0.0
        %1975 = vmatpush1.xpose.msra.mxu0 0.0
        %1976 = vmatprep.subr.mxu0 0.0
        %1977 = vmatpush1.xpose.msra.mxu0 0.0
        %1978 = vmatprep.subr.mxu0 0.0
        %1979 = vmatpush1.xpose.msra.mxu0 0.0
        %1980 = vmatprep.subr.mxu0 0.0
        %1981 = vmatpush1.xpose.msra.mxu0 0.0
        %1982 = vmatprep.subr.mxu0 0.0
        %1983 = vmatpush1.xpose.msra.mxu0 0.0
        %1984 = vmatprep.subr.mxu0 0.0
        %1985 = vmatpush1.xpose.msra.mxu0 0.0
        %1986 = vmatprep.subr.mxu0 0.0
        %1987 = vmatpush1.xpose.msra.mxu0 0.0
        %1988 = vmatprep.subr.mxu0 0.0
        %1989 = vmatpush1.xpose.msra.mxu0 0.0
        %1990 = vmatprep.subr.mxu0 0.0
        %1991 = vmatpush1.xpose.msra.mxu0 0.0
        %1992 = vmatprep.subr.mxu0 0.0
        %1993 = vmatpush1.xpose.msra.mxu0 0.0
        %1994 = vmatprep.subr.mxu0 0.0
        %1995 = vmatpush1.xpose.msra.mxu0 0.0
        %1996 = vmatprep.subr.mxu0 0.0
        %1997 = vmatpush1.xpose.msra.mxu0 0.0
        %1998 = vmatprep.subr.mxu0 0.0
        %1999 = vmatpush1.xpose.msra.mxu0 0.0
        %2000 = vmatprep.subr.mxu0 0.0
        %2001 = vmatpush1.xpose.msra.mxu0 0.0
        %2002 = vmatprep.subr.mxu0 0.0
        %2003 = vmatpush1.xpose.msra.mxu0 0.0
        %2004 = vmatprep.subr.mxu0 0.0
        %2005 = vmatpush1.xpose.msra.mxu0 0.0
        %2006 = vmatprep.subr.mxu0 0.0
        %2007 = vmatpush1.xpose.msra.mxu0 0.0
        %2008 = vmatprep.mubr.f32.mxu0 0.0
        %2009 = vmatmul.mubr.f32.gmra.mrb[0].mxu0 %v1939
        %v2010 = vpop.f32.mrb[0].mxu0
        %v2011 = vadd.f32 %v930, %v2010
        %v2012 = vpop.f32.mrb[0].mxu0
        %2013 = vdwg.mxu0
        %v2014 = vsel %vm1021, %v2011, -inf
        %2015 = vmax.xlane.f32.xlu0 %v2014
        %v2016 = vpop.xlane.xlu0 %2015
        %v2017 = vsub.f32 %v2011, %v2016
        %v2018 = vmul.f32 %v2017, 1.442695
        %v2019 = vpow.pop %v2018
        %v2020 = vsel %vm1021, %v2019, 0.0
        %2021 = vadd.xlane.f32.xlu0 %v2020
        %v2022 = vpop.xlane.xlu0 %2021
        %v2023 = vrcp.pop %v2022
        %v2024 = vmul.f32 %v2019, %v2023
        %v2026 = vsel %vm1021, %v2024, 0
        %2028 = vmatprep.subr.mxu0 0.0
        %2029 = vmatpush1.msra.mxu0 %v649
        %2030 = vmatprep.subr.mxu0 0.0
        %2031 = vmatpush1.msra.mxu0 0.0
        %2032 = vmatprep.subr.mxu0 0.0
        %2033 = vmatpush1.msra.mxu0 0.0
        %2034 = vmatprep.subr.mxu0 0.0
        %2035 = vmatpush1.msra.mxu0 0.0
        %2036 = vmatprep.subr.mxu0 0.0
        %2037 = vmatpush1.msra.mxu0 0.0
        %2038 = vmatprep.subr.mxu0 0.0
        %2039 = vmatpush1.msra.mxu0 0.0
        %2040 = vmatprep.subr.mxu0 0.0
        %2041 = vmatpush1.msra.mxu0 0.0
        %2042 = vmatprep.subr.mxu0 0.0
        %2043 = vmatpush1.msra.mxu0 0.0
        %2044 = vmatprep.subr.mxu0 0.0
        %2045 = vmatpush1.msra.mxu0 0.0
        %2046 = vmatprep.subr.mxu0 0.0
        %2047 = vmatpush1.msra.mxu0 0.0
        %2048 = vmatprep.subr.mxu0 0.0
        %2049 = vmatpush1.msra.mxu0 0.0
        %2050 = vmatprep.subr.mxu0 0.0
        %2051 = vmatpush1.msra.mxu0 0.0
        %2052 = vmatprep.subr.mxu0 0.0
        %2053 = vmatpush1.msra.mxu0 0.0
        %2054 = vmatprep.subr.mxu0 0.0
        %2055 = vmatpush1.msra.mxu0 0.0
        %2056 = vmatprep.subr.mxu0 0.0
        %2057 = vmatpush1.msra.mxu0 0.0
        %2058 = vmatprep.subr.mxu0 0.0
        %2059 = vmatpush1.msra.mxu0 0.0
        %2060 = vmatprep.subr.mxu0 0.0
        %2061 = vmatpush1.msra.mxu0 0.0
        %2062 = vmatprep.subr.mxu0 0.0
        %2063 = vmatpush1.msra.mxu0 0.0
        %2064 = vmatprep.subr.mxu0 0.0
        %2065 = vmatpush1.msra.mxu0 0.0
        %2066 = vmatprep.subr.mxu0 0.0
        %2067 = vmatpush1.msra.mxu0 0.0
        %2068 = vmatprep.subr.mxu0 0.0
        %2069 = vmatpush1.msra.mxu0 0.0
        %2070 = vmatprep.subr.mxu0 0.0
        %2071 = vmatpush1.msra.mxu0 0.0
        %2072 = vmatprep.subr.mxu0 0.0
        %2073 = vmatpush1.msra.mxu0 0.0
        %2074 = vmatprep.subr.mxu0 0.0
        %2075 = vmatpush1.msra.mxu0 0.0
        %2076 = vmatprep.subr.mxu0 0.0
        %2077 = vmatpush1.msra.mxu0 0.0
        %2078 = vmatprep.subr.mxu0 0.0
        %2079 = vmatpush1.msra.mxu0 0.0
        %2080 = vmatprep.subr.mxu0 0.0
        %2081 = vmatpush1.msra.mxu0 0.0
        %2082 = vmatprep.subr.mxu0 0.0
        %2083 = vmatpush1.msra.mxu0 0.0
        %2084 = vmatprep.subr.mxu0 0.0
        %2085 = vmatpush1.msra.mxu0 0.0
        %2086 = vmatprep.subr.mxu0 0.0
        %2087 = vmatpush1.msra.mxu0 0.0
        %2088 = vmatprep.subr.mxu0 0.0
        %2089 = vmatpush1.msra.mxu0 0.0
        %2090 = vmatprep.subr.mxu0 0.0
        %2091 = vmatpush1.msra.mxu0 0.0
        %2092 = vmatprep.mubr.f32.mxu0 0.0
        %2093 = vmatmul.mubr.f32.gmra.mrb[0].mxu0 %v2026
        %v2094 = vpop.f32.mrb[0].mxu0
        %v2095 = vadd.f32 0.0, %v2094
        %v2096 = vpop.f32.mrb[0].mxu0
        %2097 = vdwg.mxu0
        %v2098 = vld [vmem:[#allocation14 + $0x100] sm:$0xff]
        %v2099 = vld [vmem:[#allocation14 + $0x108] sm:$0xff]
        %v2100 = vld [vmem:[#allocation14 + $0x110] sm:$0xff]
        %v2101 = vld [vmem:[#allocation14 + $0x118] sm:$0xff]
        %v2102 = vld [vmem:[#allocation14 + $0x120] sm:$0xff]
        %v2103 = vld [vmem:[#allocation14 + $0x128] sm:$0xff]
        %v2104 = vld [vmem:[#allocation14 + $0x130] sm:$0xff]
        %v2105 = vld [vmem:[#allocation14 + $0x138] sm:$0xff]
        %v2107 = vsel %vm944, %v2095, 0
        %2109 = vmatprep.subr.mxu0 %v2099
        %2110 = vmatpush1.msra.mxu0 %v2098
        %2111 = vmatprep.subr.mxu0 %v2101
        %2112 = vmatpush1.msra.mxu0 %v2100
        %2113 = vmatprep.subr.mxu0 %v2103
        %2114 = vmatpush1.msra.mxu0 %v2102
        %2115 = vmatprep.subr.mxu0 %v2105
        %2116 = vmatpush1.msra.mxu0 %v2104
        %2117 = vmatprep.subr.mxu0 0.0
        %2118 = vmatpush1.msra.mxu0 0.0
        %2119 = vmatprep.subr.mxu0 0.0
        %2120 = vmatpush1.msra.mxu0 0.0
        %2121 = vmatprep.subr.mxu0 0.0
        %2122 = vmatpush1.msra.mxu0 0.0
        %2123 = vmatprep.subr.mxu0 0.0
        %2124 = vmatpush1.msra.mxu0 0.0
        %2125 = vmatprep.subr.mxu0 0.0
        %2126 = vmatpush1.msra.mxu0 0.0
        %2127 = vmatprep.subr.mxu0 0.0
        %2128 = vmatpush1.msra.mxu0 0.0
        %2129 = vmatprep.subr.mxu0 0.0
        %2130 = vmatpush1.msra.mxu0 0.0
        %2131 = vmatprep.subr.mxu0 0.0
        %2132 = vmatpush1.msra.mxu0 0.0
        %2133 = vmatprep.subr.mxu0 0.0
        %2134 = vmatpush1.msra.mxu0 0.0
        %2135 = vmatprep.subr.mxu0 0.0
        %2136 = vmatpush1.msra.mxu0 0.0
        %2137 = vmatprep.subr.mxu0 0.0
        %2138 = vmatpush1.msra.mxu0 0.0
        %2139 = vmatprep.subr.mxu0 0.0
        %2140 = vmatpush1.msra.mxu0 0.0
        %2141 = vmatprep.subr.mxu0 0.0
        %2142 = vmatpush1.msra.mxu0 0.0
        %2143 = vmatprep.subr.mxu0 0.0
        %2144 = vmatpush1.msra.mxu0 0.0
        %2145 = vmatprep.subr.mxu0 0.0
        %2146 = vmatpush1.msra.mxu0 0.0
        %2147 = vmatprep.subr.mxu0 0.0
        %2148 = vmatpush1.msra.mxu0 0.0
        %2149 = vmatprep.subr.mxu0 0.0
        %2150 = vmatpush1.msra.mxu0 0.0
        %2151 = vmatprep.subr.mxu0 0.0
        %2152 = vmatpush1.msra.mxu0 0.0
        %2153 = vmatprep.subr.mxu0 0.0
        %2154 = vmatpush1.msra.mxu0 0.0
        %2155 = vmatprep.subr.mxu0 0.0
        %2156 = vmatpush1.msra.mxu0 0.0
        %2157 = vmatprep.subr.mxu0 0.0
        %2158 = vmatpush1.msra.mxu0 0.0
        %2159 = vmatprep.subr.mxu0 0.0
        %2160 = vmatpush1.msra.mxu0 0.0
        %2161 = vmatprep.subr.mxu0 0.0
        %2162 = vmatpush1.msra.mxu0 0.0
        %2163 = vmatprep.subr.mxu0 0.0
        %2164 = vmatpush1.msra.mxu0 0.0
        %2165 = vmatprep.subr.mxu0 0.0
        %2166 = vmatpush1.msra.mxu0 0.0
        %2167 = vmatprep.subr.mxu0 0.0
        %2168 = vmatpush1.msra.mxu0 0.0
        %2169 = vmatprep.subr.mxu0 0.0
        %2170 = vmatpush1.msra.mxu0 0.0
        %2171 = vmatprep.subr.mxu0 0.0
        %2172 = vmatpush1.msra.mxu0 0.0
        %2173 = vmatprep.mubr.f32.mxu0 0.0
        %2174 = vmatmul.mubr.f32.gmra.mrb[0].mxu0 %v2107
        %v2175 = vpop.f32.mrb[0].mxu0
        %v2176 = vadd.f32 0.0, %v2175
        %v2177 = vpop.f32.mrb[0].mxu0
        %v2178 = vadd.f32 0.0, %v2177
        %2179 = vdwg.mxu0
        %v2180 = vadd.f32 %v1936, %v2176
        %v2181 = vadd.f32 %v1937, %v2178
        %2182 = vrot.lane.b32.xlu0 %v923, 96
        %v2183 = vpop.permute.xlu0 %2182
        %2184 = vrot.lane.b32.xlu0 %v786, 96
        %v2185 = vpop.permute.xlu0 %2184
        %v2186 = vsel %vm944, %v2183, 0
        %v2188 = vsel %vm944, %v2185, 0
        %2190 = vmatprep.subr.mxu0 0.0
        %2191 = vmatpush1.xpose.msra.mxu0 %v2188
        %2192 = vmatprep.subr.mxu0 0.0
        %2193 = vmatpush1.xpose.msra.mxu0 0.0
        %2194 = vmatprep.subr.mxu0 0.0
        %2195 = vmatpush1.xpose.msra.mxu0 0.0
        %2196 = vmatprep.subr.mxu0 0.0
        %2197 = vmatpush1.xpose.msra.mxu0 0.0
        %2198 = vmatprep.subr.mxu0 0.0
        %2199 = vmatpush1.xpose.msra.mxu0 0.0
        %2200 = vmatprep.subr.mxu0 0.0
        %2201 = vmatpush1.xpose.msra.mxu0 0.0
        %2202 = vmatprep.subr.mxu0 0.0
        %2203 = vmatpush1.xpose.msra.mxu0 0.0
        %2204 = vmatprep.subr.mxu0 0.0
        %2205 = vmatpush1.xpose.msra.mxu0 0.0
        %2206 = vmatprep.subr.mxu0 0.0
        %2207 = vmatpush1.xpose.msra.mxu0 0.0
        %2208 = vmatprep.subr.mxu0 0.0
        %2209 = vmatpush1.xpose.msra.mxu0 0.0
        %2210 = vmatprep.subr.mxu0 0.0
        %2211 = vmatpush1.xpose.msra.mxu0 0.0
        %2212 = vmatprep.subr.mxu0 0.0
        %2213 = vmatpush1.xpose.msra.mxu0 0.0
        %2214 = vmatprep.subr.mxu0 0.0
        %2215 = vmatpush1.xpose.msra.mxu0 0.0
        %2216 = vmatprep.subr.mxu0 0.0
        %2217 = vmatpush1.xpose.msra.mxu0 0.0
        %2218 = vmatprep.subr.mxu0 0.0
        %2219 = vmatpush1.xpose.msra.mxu0 0.0
        %2220 = vmatprep.subr.mxu0 0.0
        %2221 = vmatpush1.xpose.msra.mxu0 0.0
        %2222 = vmatprep.subr.mxu0 0.0
        %2223 = vmatpush1.xpose.msra.mxu0 0.0
        %2224 = vmatprep.subr.mxu0 0.0
        %2225 = vmatpush1.xpose.msra.mxu0 0.0
        %2226 = vmatprep.subr.mxu0 0.0
        %2227 = vmatpush1.xpose.msra.mxu0 0.0
        %2228 = vmatprep.subr.mxu0 0.0
        %2229 = vmatpush1.xpose.msra.mxu0 0.0
        %2230 = vmatprep.subr.mxu0 0.0
        %2231 = vmatpush1.xpose.msra.mxu0 0.0
        %2232 = vmatprep.subr.mxu0 0.0
        %2233 = vmatpush1.xpose.msra.mxu0 0.0
        %2234 = vmatprep.subr.mxu0 0.0
        %2235 = vmatpush1.xpose.msra.mxu0 0.0
        %2236 = vmatprep.subr.mxu0 0.0
        %2237 = vmatpush1.xpose.msra.mxu0 0.0
        %2238 = vmatprep.subr.mxu0 0.0
        %2239 = vmatpush1.xpose.msra.mxu0 0.0
        %2240 = vmatprep.subr.mxu0 0.0
        %2241 = vmatpush1.xpose.msra.mxu0 0.0
        %2242 = vmatprep.subr.mxu0 0.0
        %2243 = vmatpush1.xpose.msra.mxu0 0.0
        %2244 = vmatprep.subr.mxu0 0.0
        %2245 = vmatpush1.xpose.msra.mxu0 0.0
        %2246 = vmatprep.subr.mxu0 0.0
        %2247 = vmatpush1.xpose.msra.mxu0 0.0
        %2248 = vmatprep.subr.mxu0 0.0
        %2249 = vmatpush1.xpose.msra.mxu0 0.0
        %2250 = vmatprep.subr.mxu0 0.0
        %2251 = vmatpush1.xpose.msra.mxu0 0.0
        %2252 = vmatprep.subr.mxu0 0.0
        %2253 = vmatpush1.xpose.msra.mxu0 0.0
        %2254 = vmatprep.mubr.f32.mxu0 0.0
        %2255 = vmatmul.mubr.f32.gmra.mrb[0].mxu0 %v2186
        %v2256 = vpop.f32.mrb[0].mxu0
        %v2257 = vadd.f32 %v930, %v2256
        %v2258 = vpop.f32.mrb[0].mxu0
        %2259 = vdwg.mxu0
        %v2260 = vsel %vm1021, %v2257, -inf
        %2261 = vmax.xlane.f32.xlu0 %v2260
        %v2262 = vpop.xlane.xlu0 %2261
        %v2263 = vsub.f32 %v2257, %v2262
        %v2264 = vmul.f32 %v2263, 1.442695
        %v2265 = vpow.pop %v2264
        %v2266 = vsel %vm1021, %v2265, 0.0
        %2267 = vadd.xlane.f32.xlu0 %v2266
        %v2268 = vpop.xlane.xlu0 %2267
        %v2269 = vrcp.pop %v2268
        %v2270 = vmul.f32 %v2265, %v2269
        %2272 = vrot.lane.b32.xlu0 %v649, 96
        %v2273 = vpop.permute.xlu0 %2272
        %v2276 = vsel %vm1021, %v2270, 0
        %2278 = vmatprep.subr.mxu0 0.0
        %2279 = vmatpush1.msra.mxu0 %v2273
        %2280 = vmatprep.subr.mxu0 0.0
        %2281 = vmatpush1.msra.mxu0 0.0
        %2282 = vmatprep.subr.mxu0 0.0
        %2283 = vmatpush1.msra.mxu0 0.0
        %2284 = vmatprep.subr.mxu0 0.0
        %2285 = vmatpush1.msra.mxu0 0.0
        %2286 = vmatprep.subr.mxu0 0.0
        %2287 = vmatpush1.msra.mxu0 0.0
        %2288 = vmatprep.subr.mxu0 0.0
        %2289 = vmatpush1.msra.mxu0 0.0
        %2290 = vmatprep.subr.mxu0 0.0
        %2291 = vmatpush1.msra.mxu0 0.0
        %2292 = vmatprep.subr.mxu0 0.0
        %2293 = vmatpush1.msra.mxu0 0.0
        %2294 = vmatprep.subr.mxu0 0.0
        %2295 = vmatpush1.msra.mxu0 0.0
        %2296 = vmatprep.subr.mxu0 0.0
        %2297 = vmatpush1.msra.mxu0 0.0
        %2298 = vmatprep.subr.mxu0 0.0
        %2299 = vmatpush1.msra.mxu0 0.0
        %2300 = vmatprep.subr.mxu0 0.0
        %2301 = vmatpush1.msra.mxu0 0.0
        %2302 = vmatprep.subr.mxu0 0.0
        %2303 = vmatpush1.msra.mxu0 0.0
        %2304 = vmatprep.subr.mxu0 0.0
        %2305 = vmatpush1.msra.mxu0 0.0
        %2306 = vmatprep.subr.mxu0 0.0
        %2307 = vmatpush1.msra.mxu0 0.0
        %2308 = vmatprep.subr.mxu0 0.0
        %2309 = vmatpush1.msra.mxu0 0.0
        %2310 = vmatprep.subr.mxu0 0.0
        %2311 = vmatpush1.msra.mxu0 0.0
        %2312 = vmatprep.subr.mxu0 0.0
        %2313 = vmatpush1.msra.mxu0 0.0
        %2314 = vmatprep.subr.mxu0 0.0
        %2315 = vmatpush1.msra.mxu0 0.0
        %2316 = vmatprep.subr.mxu0 0.0
        %2317 = vmatpush1.msra.mxu0 0.0
        %2318 = vmatprep.subr.mxu0 0.0
        %2319 = vmatpush1.msra.mxu0 0.0
        %2320 = vmatprep.subr.mxu0 0.0
        %2321 = vmatpush1.msra.mxu0 0.0
        %2322 = vmatprep.subr.mxu0 0.0
        %2323 = vmatpush1.msra.mxu0 0.0
        %2324 = vmatprep.subr.mxu0 0.0
        %2325 = vmatpush1.msra.mxu0 0.0
        %2326 = vmatprep.subr.mxu0 0.0
        %2327 = vmatpush1.msra.mxu0 0.0
        %2328 = vmatprep.subr.mxu0 0.0
        %2329 = vmatpush1.msra.mxu0 0.0
        %2330 = vmatprep.subr.mxu0 0.0
        %2331 = vmatpush1.msra.mxu0 0.0
        %2332 = vmatprep.subr.mxu0 0.0
        %2333 = vmatpush1.msra.mxu0 0.0
        %2334 = vmatprep.subr.mxu0 0.0
        %2335 = vmatpush1.msra.mxu0 0.0
        %2336 = vmatprep.subr.mxu0 0.0
        %2337 = vmatpush1.msra.mxu0 0.0
        %2338 = vmatprep.subr.mxu0 0.0
        %2339 = vmatpush1.msra.mxu0 0.0
        %2340 = vmatprep.subr.mxu0 0.0
        %2341 = vmatpush1.msra.mxu0 0.0
        %2342 = vmatprep.mubr.f32.mxu0 0.0
        %2343 = vmatmul.mubr.f32.gmra.mrb[0].mxu0 %v2276
        %v2344 = vpop.f32.mrb[0].mxu0
        %v2345 = vadd.f32 0.0, %v2344
        %v2346 = vpop.f32.mrb[0].mxu0
        %2347 = vdwg.mxu0
        %v2348 = vld [vmem:[#allocation14 + $0x140] sm:$0xff]
        %v2349 = vld [vmem:[#allocation14 + $0x148] sm:$0xff]
        %v2350 = vld [vmem:[#allocation14 + $0x150] sm:$0xff]
        %v2351 = vld [vmem:[#allocation14 + $0x158] sm:$0xff]
        %v2352 = vld [vmem:[#allocation14 + $0x160] sm:$0xff]
        %v2353 = vld [vmem:[#allocation14 + $0x168] sm:$0xff]
        %v2354 = vld [vmem:[#allocation14 + $0x170] sm:$0xff]
        %v2355 = vld [vmem:[#allocation14 + $0x178] sm:$0xff]
        %v2357 = vsel %vm944, %v2345, 0
        %2359 = vmatprep.subr.mxu0 %v2349
        %2360 = vmatpush1.msra.mxu0 %v2348
        %2361 = vmatprep.subr.mxu0 %v2351
        %2362 = vmatpush1.msra.mxu0 %v2350
        %2363 = vmatprep.subr.mxu0 %v2353
        %2364 = vmatpush1.msra.mxu0 %v2352
        %2365 = vmatprep.subr.mxu0 %v2355
        %2366 = vmatpush1.msra.mxu0 %v2354
        %2367 = vmatprep.subr.mxu0 0.0
        %2368 = vmatpush1.msra.mxu0 0.0
        %2369 = vmatprep.subr.mxu0 0.0
        %2370 = vmatpush1.msra.mxu0 0.0
        %2371 = vmatprep.subr.mxu0 0.0
        %2372 = vmatpush1.msra.mxu0 0.0
        %2373 = vmatprep.subr.mxu0 0.0
        %2374 = vmatpush1.msra.mxu0 0.0
        %2375 = vmatprep.subr.mxu0 0.0
        %2376 = vmatpush1.msra.mxu0 0.0
        %2377 = vmatprep.subr.mxu0 0.0
        %2378 = vmatpush1.msra.mxu0 0.0
        %2379 = vmatprep.subr.mxu0 0.0
        %2380 = vmatpush1.msra.mxu0 0.0
        %2381 = vmatprep.subr.mxu0 0.0
        %2382 = vmatpush1.msra.mxu0 0.0
        %2383 = vmatprep.subr.mxu0 0.0
        %2384 = vmatpush1.msra.mxu0 0.0
        %2385 = vmatprep.subr.mxu0 0.0
        %2386 = vmatpush1.msra.mxu0 0.0
        %2387 = vmatprep.subr.mxu0 0.0
        %2388 = vmatpush1.msra.mxu0 0.0
        %2389 = vmatprep.subr.mxu0 0.0
        %2390 = vmatpush1.msra.mxu0 0.0
        %2391 = vmatprep.subr.mxu0 0.0
        %2392 = vmatpush1.msra.mxu0 0.0
        %2393 = vmatprep.subr.mxu0 0.0
        %2394 = vmatpush1.msra.mxu0 0.0
        %2395 = vmatprep.subr.mxu0 0.0
        %2396 = vmatpush1.msra.mxu0 0.0
        %2397 = vmatprep.subr.mxu0 0.0
        %2398 = vmatpush1.msra.mxu0 0.0
        %2399 = vmatprep.subr.mxu0 0.0
        %2400 = vmatpush1.msra.mxu0 0.0
        %2401 = vmatprep.subr.mxu0 0.0
        %2402 = vmatpush1.msra.mxu0 0.0
        %2403 = vmatprep.subr.mxu0 0.0
        %2404 = vmatpush1.msra.mxu0 0.0
        %2405 = vmatprep.subr.mxu0 0.0
        %2406 = vmatpush1.msra.mxu0 0.0
        %2407 = vmatprep.subr.mxu0 0.0
        %2408 = vmatpush1.msra.mxu0 0.0
        %2409 = vmatprep.subr.mxu0 0.0
        %2410 = vmatpush1.msra.mxu0 0.0
        %2411 = vmatprep.subr.mxu0 0.0
        %2412 = vmatpush1.msra.mxu0 0.0
        %2413 = vmatprep.subr.mxu0 0.0
        %2414 = vmatpush1.msra.mxu0 0.0
        %2415 = vmatprep.subr.mxu0 0.0
        %2416 = vmatpush1.msra.mxu0 0.0
        %2417 = vmatprep.subr.mxu0 0.0
        %2418 = vmatpush1.msra.mxu0 0.0
        %2419 = vmatprep.subr.mxu0 0.0
        %2420 = vmatpush1.msra.mxu0 0.0
        %2421 = vmatprep.subr.mxu0 0.0
        %2422 = vmatpush1.msra.mxu0 0.0
        %2423 = vmatprep.mubr.f32.mxu0 0.0
        %2424 = vmatmul.mubr.f32.gmra.mrb[0].mxu0 %v2357
        %v2425 = vpop.f32.mrb[0].mxu0
        %v2426 = vadd.f32 0.0, %v2425
        %v2427 = vpop.f32.mrb[0].mxu0
        %v2428 = vadd.f32 0.0, %v2427
        %2429 = vdwg.mxu0
        %v2430 = vadd.f32 %v2180, %v2426
        %v2431 = vadd.f32 %v2181, %v2428
        %2432 = vrot.lane.b32.xlu0 %v923, 64
        %v2433 = vpop.permute.xlu0 %2432
        %2434 = vrot.lane.b32.xlu0 %v786, 64
        %v2435 = vpop.permute.xlu0 %2434
        %v2436 = vsel %vm944, %v2433, 0
        %v2438 = vsel %vm944, %v2435, 0
        %2440 = vmatprep.subr.mxu0 0.0
        %2441 = vmatpush1.xpose.msra.mxu0 %v2438
        %2442 = vmatprep.subr.mxu0 0.0
        %2443 = vmatpush1.xpose.msra.mxu0 0.0
        %2444 = vmatprep.subr.mxu0 0.0
        %2445 = vmatpush1.xpose.msra.mxu0 0.0
        %2446 = vmatprep.subr.mxu0 0.0
        %2447 = vmatpush1.xpose.msra.mxu0 0.0
        %2448 = vmatprep.subr.mxu0 0.0
        %2449 = vmatpush1.xpose.msra.mxu0 0.0
        %2450 = vmatprep.subr.mxu0 0.0
        %2451 = vmatpush1.xpose.msra.mxu0 0.0
        %2452 = vmatprep.subr.mxu0 0.0
        %2453 = vmatpush1.xpose.msra.mxu0 0.0
        %2454 = vmatprep.subr.mxu0 0.0
        %2455 = vmatpush1.xpose.msra.mxu0 0.0
        %2456 = vmatprep.subr.mxu0 0.0
        %2457 = vmatpush1.xpose.msra.mxu0 0.0
        %2458 = vmatprep.subr.mxu0 0.0
        %2459 = vmatpush1.xpose.msra.mxu0 0.0
        %2460 = vmatprep.subr.mxu0 0.0
        %2461 = vmatpush1.xpose.msra.mxu0 0.0
        %2462 = vmatprep.subr.mxu0 0.0
        %2463 = vmatpush1.xpose.msra.mxu0 0.0
        %2464 = vmatprep.subr.mxu0 0.0
        %2465 = vmatpush1.xpose.msra.mxu0 0.0
        %2466 = vmatprep.subr.mxu0 0.0
        %2467 = vmatpush1.xpose.msra.mxu0 0.0
        %2468 = vmatprep.subr.mxu0 0.0
        %2469 = vmatpush1.xpose.msra.mxu0 0.0
        %2470 = vmatprep.subr.mxu0 0.0
        %2471 = vmatpush1.xpose.msra.mxu0 0.0
        %2472 = vmatprep.subr.mxu0 0.0
        %2473 = vmatpush1.xpose.msra.mxu0 0.0
        %2474 = vmatprep.subr.mxu0 0.0
        %2475 = vmatpush1.xpose.msra.mxu0 0.0
        %2476 = vmatprep.subr.mxu0 0.0
        %2477 = vmatpush1.xpose.msra.mxu0 0.0
        %2478 = vmatprep.subr.mxu0 0.0
        %2479 = vmatpush1.xpose.msra.mxu0 0.0
        %2480 = vmatprep.subr.mxu0 0.0
        %2481 = vmatpush1.xpose.msra.mxu0 0.0
        %2482 = vmatprep.subr.mxu0 0.0
        %2483 = vmatpush1.xpose.msra.mxu0 0.0
        %2484 = vmatprep.subr.mxu0 0.0
        %2485 = vmatpush1.xpose.msra.mxu0 0.0
        %2486 = vmatprep.subr.mxu0 0.0
        %2487 = vmatpush1.xpose.msra.mxu0 0.0
        %2488 = vmatprep.subr.mxu0 0.0
        %2489 = vmatpush1.xpose.msra.mxu0 0.0
        %2490 = vmatprep.subr.mxu0 0.0
        %2491 = vmatpush1.xpose.msra.mxu0 0.0
        %2492 = vmatprep.subr.mxu0 0.0
        %2493 = vmatpush1.xpose.msra.mxu0 0.0
        %2494 = vmatprep.subr.mxu0 0.0
        %2495 = vmatpush1.xpose.msra.mxu0 0.0
        %2496 = vmatprep.subr.mxu0 0.0
        %2497 = vmatpush1.xpose.msra.mxu0 0.0
        %2498 = vmatprep.subr.mxu0 0.0
        %2499 = vmatpush1.xpose.msra.mxu0 0.0
        %2500 = vmatprep.subr.mxu0 0.0
        %2501 = vmatpush1.xpose.msra.mxu0 0.0
        %2502 = vmatprep.subr.mxu0 0.0
        %2503 = vmatpush1.xpose.msra.mxu0 0.0
        %2504 = vmatprep.mubr.f32.mxu0 0.0
        %2505 = vmatmul.mubr.f32.gmra.mrb[0].mxu0 %v2436
        %v2506 = vpop.f32.mrb[0].mxu0
        %v2507 = vadd.f32 %v930, %v2506
        %v2508 = vpop.f32.mrb[0].mxu0
        %2509 = vdwg.mxu0
        %v2510 = vsel %vm1021, %v2507, -inf
        %2511 = vmax.xlane.f32.xlu0 %v2510
        %v2512 = vpop.xlane.xlu0 %2511
        %v2513 = vsub.f32 %v2507, %v2512
        %v2514 = vmul.f32 %v2513, 1.442695
        %v2515 = vpow.pop %v2514
        %v2516 = vsel %vm1021, %v2515, 0.0
        %2517 = vadd.xlane.f32.xlu0 %v2516
        %v2518 = vpop.xlane.xlu0 %2517
        %v2519 = vrcp.pop %v2518
        %v2520 = vmul.f32 %v2515, %v2519
        %2521 = vrot.lane.b32.xlu0 %v649, 64
        %v2522 = vpop.permute.xlu0 %2521
        %v2525 = vsel %vm1021, %v2520, 0
        %2527 = vmatprep.subr.mxu0 0.0
        %2528 = vmatpush1.msra.mxu0 %v2522
        %2529 = vmatprep.subr.mxu0 0.0
        %2530 = vmatpush1.msra.mxu0 0.0
        %2531 = vmatprep.subr.mxu0 0.0
        %2532 = vmatpush1.msra.mxu0 0.0
        %2533 = vmatprep.subr.mxu0 0.0
        %2534 = vmatpush1.msra.mxu0 0.0
        %2535 = vmatprep.subr.mxu0 0.0
        %2536 = vmatpush1.msra.mxu0 0.0
        %2537 = vmatprep.subr.mxu0 0.0
        %2538 = vmatpush1.msra.mxu0 0.0
        %2539 = vmatprep.subr.mxu0 0.0
        %2540 = vmatpush1.msra.mxu0 0.0
        %2541 = vmatprep.subr.mxu0 0.0
        %2542 = vmatpush1.msra.mxu0 0.0
        %2543 = vmatprep.subr.mxu0 0.0
        %2544 = vmatpush1.msra.mxu0 0.0
        %2545 = vmatprep.subr.mxu0 0.0
        %2546 = vmatpush1.msra.mxu0 0.0
        %2547 = vmatprep.subr.mxu0 0.0
        %2548 = vmatpush1.msra.mxu0 0.0
        %2549 = vmatprep.subr.mxu0 0.0
        %2550 = vmatpush1.msra.mxu0 0.0
        %2551 = vmatprep.subr.mxu0 0.0
        %2552 = vmatpush1.msra.mxu0 0.0
        %2553 = vmatprep.subr.mxu0 0.0
        %2554 = vmatpush1.msra.mxu0 0.0
        %2555 = vmatprep.subr.mxu0 0.0
        %2556 = vmatpush1.msra.mxu0 0.0
        %2557 = vmatprep.subr.mxu0 0.0
        %2558 = vmatpush1.msra.mxu0 0.0
        %2559 = vmatprep.subr.mxu0 0.0
        %2560 = vmatpush1.msra.mxu0 0.0
        %2561 = vmatprep.subr.mxu0 0.0
        %2562 = vmatpush1.msra.mxu0 0.0
        %2563 = vmatprep.subr.mxu0 0.0
        %2564 = vmatpush1.msra.mxu0 0.0
        %2565 = vmatprep.subr.mxu0 0.0
        %2566 = vmatpush1.msra.mxu0 0.0
        %2567 = vmatprep.subr.mxu0 0.0
        %2568 = vmatpush1.msra.mxu0 0.0
        %2569 = vmatprep.subr.mxu0 0.0
        %2570 = vmatpush1.msra.mxu0 0.0
        %2571 = vmatprep.subr.mxu0 0.0
        %2572 = vmatpush1.msra.mxu0 0.0
        %2573 = vmatprep.subr.mxu0 0.0
        %2574 = vmatpush1.msra.mxu0 0.0
        %2575 = vmatprep.subr.mxu0 0.0
        %2576 = vmatpush1.msra.mxu0 0.0
        %2577 = vmatprep.subr.mxu0 0.0
        %2578 = vmatpush1.msra.mxu0 0.0
        %2579 = vmatprep.subr.mxu0 0.0
        %2580 = vmatpush1.msra.mxu0 0.0
        %2581 = vmatprep.subr.mxu0 0.0
        %2582 = vmatpush1.msra.mxu0 0.0
        %2583 = vmatprep.subr.mxu0 0.0
        %2584 = vmatpush1.msra.mxu0 0.0
        %2585 = vmatprep.subr.mxu0 0.0
        %2586 = vmatpush1.msra.mxu0 0.0
        %2587 = vmatprep.subr.mxu0 0.0
        %2588 = vmatpush1.msra.mxu0 0.0
        %2589 = vmatprep.subr.mxu0 0.0
        %2590 = vmatpush1.msra.mxu0 0.0
        %2591 = vmatprep.mubr.f32.mxu0 0.0
        %2592 = vmatmul.mubr.f32.gmra.mrb[0].mxu0 %v2525
        %v2593 = vpop.f32.mrb[0].mxu0
        %v2594 = vadd.f32 0.0, %v2593
        %v2595 = vpop.f32.mrb[0].mxu0
        %2596 = vdwg.mxu0
        %v2597 = vld [vmem:[#allocation14 + $0x180] sm:$0xff]
        %v2598 = vld [vmem:[#allocation14 + $0x188] sm:$0xff]
        %v2599 = vld [vmem:[#allocation14 + $0x190] sm:$0xff]
        %v2600 = vld [vmem:[#allocation14 + $0x198] sm:$0xff]
        %v2601 = vld [vmem:[#allocation14 + $0x1a0] sm:$0xff]
        %v2602 = vld [vmem:[#allocation14 + $0x1a8] sm:$0xff]
        %v2603 = vld [vmem:[#allocation14 + $0x1b0] sm:$0xff]
        %v2604 = vld [vmem:[#allocation14 + $0x1b8] sm:$0xff]
        %v2606 = vsel %vm944, %v2594, 0
        %2608 = vmatprep.subr.mxu0 %v2598
        %2609 = vmatpush1.msra.mxu0 %v2597
        %2610 = vmatprep.subr.mxu0 %v2600
        %2611 = vmatpush1.msra.mxu0 %v2599
        %2612 = vmatprep.subr.mxu0 %v2602
        %2613 = vmatpush1.msra.mxu0 %v2601
        %2614 = vmatprep.subr.mxu0 %v2604
        %2615 = vmatpush1.msra.mxu0 %v2603
        %2616 = vmatprep.subr.mxu0 0.0
        %2617 = vmatpush1.msra.mxu0 0.0
        %2618 = vmatprep.subr.mxu0 0.0
        %2619 = vmatpush1.msra.mxu0 0.0
        %2620 = vmatprep.subr.mxu0 0.0
        %2621 = vmatpush1.msra.mxu0 0.0
        %2622 = vmatprep.subr.mxu0 0.0
        %2623 = vmatpush1.msra.mxu0 0.0
        %2624 = vmatprep.subr.mxu0 0.0
        %2625 = vmatpush1.msra.mxu0 0.0
        %2626 = vmatprep.subr.mxu0 0.0
        %2627 = vmatpush1.msra.mxu0 0.0
        %2628 = vmatprep.subr.mxu0 0.0
        %2629 = vmatpush1.msra.mxu0 0.0
        %2630 = vmatprep.subr.mxu0 0.0
        %2631 = vmatpush1.msra.mxu0 0.0
        %2632 = vmatprep.subr.mxu0 0.0
        %2633 = vmatpush1.msra.mxu0 0.0
        %2634 = vmatprep.subr.mxu0 0.0
        %2635 = vmatpush1.msra.mxu0 0.0
        %2636 = vmatprep.subr.mxu0 0.0
        %2637 = vmatpush1.msra.mxu0 0.0
        %2638 = vmatprep.subr.mxu0 0.0
        %2639 = vmatpush1.msra.mxu0 0.0
        %2640 = vmatprep.subr.mxu0 0.0
        %2641 = vmatpush1.msra.mxu0 0.0
        %2642 = vmatprep.subr.mxu0 0.0
        %2643 = vmatpush1.msra.mxu0 0.0
        %2644 = vmatprep.subr.mxu0 0.0
        %2645 = vmatpush1.msra.mxu0 0.0
        %2646 = vmatprep.subr.mxu0 0.0
        %2647 = vmatpush1.msra.mxu0 0.0
        %2648 = vmatprep.subr.mxu0 0.0
        %2649 = vmatpush1.msra.mxu0 0.0
        %2650 = vmatprep.subr.mxu0 0.0
        %2651 = vmatpush1.msra.mxu0 0.0
        %2652 = vmatprep.subr.mxu0 0.0
        %2653 = vmatpush1.msra.mxu0 0.0
        %2654 = vmatprep.subr.mxu0 0.0
        %2655 = vmatpush1.msra.mxu0 0.0
        %2656 = vmatprep.subr.mxu0 0.0
        %2657 = vmatpush1.msra.mxu0 0.0
        %2658 = vmatprep.subr.mxu0 0.0
        %2659 = vmatpush1.msra.mxu0 0.0
        %2660 = vmatprep.subr.mxu0 0.0
        %2661 = vmatpush1.msra.mxu0 0.0
        %2662 = vmatprep.subr.mxu0 0.0
        %2663 = vmatpush1.msra.mxu0 0.0
        %2664 = vmatprep.subr.mxu0 0.0
        %2665 = vmatpush1.msra.mxu0 0.0
        %2666 = vmatprep.subr.mxu0 0.0
        %2667 = vmatpush1.msra.mxu0 0.0
        %2668 = vmatprep.subr.mxu0 0.0
        %2669 = vmatpush1.msra.mxu0 0.0
        %2670 = vmatprep.subr.mxu0 0.0
        %2671 = vmatpush1.msra.mxu0 0.0
        %2672 = vmatprep.mubr.f32.mxu0 0.0
        %2673 = vmatmul.mubr.f32.gmra.mrb[0].mxu0 %v2606
        %v2674 = vpop.f32.mrb[0].mxu0
        %v2675 = vadd.f32 0.0, %v2674
        %v2676 = vpop.f32.mrb[0].mxu0
        %v2677 = vadd.f32 0.0, %v2676
        %2678 = vdwg.mxu0
        %v2679 = vadd.f32 %v2430, %v2675
        %v2680 = vadd.f32 %v2431, %v2677
        %2681 = vrot.lane.b32.xlu0 %v923, 32
        %v2682 = vpop.permute.xlu0 %2681
        %2683 = vrot.lane.b32.xlu0 %v786, 32
        %v2684 = vpop.permute.xlu0 %2683
        %v2685 = vsel %vm944, %v2682, 0
        %v2687 = vsel %vm944, %v2684, 0
        %2689 = vmatprep.subr.mxu0 0.0
        %2690 = vmatpush1.xpose.msra.mxu0 %v2687
        %2691 = vmatprep.subr.mxu0 0.0
        %2692 = vmatpush1.xpose.msra.mxu0 0.0
        %2693 = vmatprep.subr.mxu0 0.0
        %2694 = vmatpush1.xpose.msra.mxu0 0.0
        %2695 = vmatprep.subr.mxu0 0.0
        %2696 = vmatpush1.xpose.msra.mxu0 0.0
        %2697 = vmatprep.subr.mxu0 0.0
        %2698 = vmatpush1.xpose.msra.mxu0 0.0
        %2699 = vmatprep.subr.mxu0 0.0
        %2700 = vmatpush1.xpose.msra.mxu0 0.0
        %2701 = vmatprep.subr.mxu0 0.0
        %2702 = vmatpush1.xpose.msra.mxu0 0.0
        %2703 = vmatprep.subr.mxu0 0.0
        %2704 = vmatpush1.xpose.msra.mxu0 0.0
        %2705 = vmatprep.subr.mxu0 0.0
        %2706 = vmatpush1.xpose.msra.mxu0 0.0
        %2707 = vmatprep.subr.mxu0 0.0
        %2708 = vmatpush1.xpose.msra.mxu0 0.0
        %2709 = vmatprep.subr.mxu0 0.0
        %2710 = vmatpush1.xpose.msra.mxu0 0.0
        %2711 = vmatprep.subr.mxu0 0.0
        %2712 = vmatpush1.xpose.msra.mxu0 0.0
        %2713 = vmatprep.subr.mxu0 0.0
        %2714 = vmatpush1.xpose.msra.mxu0 0.0
        %2715 = vmatprep.subr.mxu0 0.0
        %2716 = vmatpush1.xpose.msra.mxu0 0.0
        %2717 = vmatprep.subr.mxu0 0.0
        %2718 = vmatpush1.xpose.msra.mxu0 0.0
        %2719 = vmatprep.subr.mxu0 0.0
        %2720 = vmatpush1.xpose.msra.mxu0 0.0
        %2721 = vmatprep.subr.mxu0 0.0
        %2722 = vmatpush1.xpose.msra.mxu0 0.0
        %2723 = vmatprep.subr.mxu0 0.0
        %2724 = vmatpush1.xpose.msra.mxu0 0.0
        %2725 = vmatprep.subr.mxu0 0.0
        %2726 = vmatpush1.xpose.msra.mxu0 0.0
        %2727 = vmatprep.subr.mxu0 0.0
        %2728 = vmatpush1.xpose.msra.mxu0 0.0
        %2729 = vmatprep.subr.mxu0 0.0
        %2730 = vmatpush1.xpose.msra.mxu0 0.0
        %2731 = vmatprep.subr.mxu0 0.0
        %2732 = vmatpush1.xpose.msra.mxu0 0.0
        %2733 = vmatprep.subr.mxu0 0.0
        %2734 = vmatpush1.xpose.msra.mxu0 0.0
        %2735 = vmatprep.subr.mxu0 0.0
        %2736 = vmatpush1.xpose.msra.mxu0 0.0
        %2737 = vmatprep.subr.mxu0 0.0
        %2738 = vmatpush1.xpose.msra.mxu0 0.0
        %2739 = vmatprep.subr.mxu0 0.0
        %2740 = vmatpush1.xpose.msra.mxu0 0.0
        %2741 = vmatprep.subr.mxu0 0.0
        %2742 = vmatpush1.xpose.msra.mxu0 0.0
        %2743 = vmatprep.subr.mxu0 0.0
        %2744 = vmatpush1.xpose.msra.mxu0 0.0
        %2745 = vmatprep.subr.mxu0 0.0
        %2746 = vmatpush1.xpose.msra.mxu0 0.0
        %2747 = vmatprep.subr.mxu0 0.0
        %2748 = vmatpush1.xpose.msra.mxu0 0.0
        %2749 = vmatprep.subr.mxu0 0.0
        %2750 = vmatpush1.xpose.msra.mxu0 0.0
        %2751 = vmatprep.subr.mxu0 0.0
        %2752 = vmatpush1.xpose.msra.mxu0 0.0
        %2753 = vmatprep.mubr.f32.mxu0 0.0
        %2754 = vmatmul.mubr.f32.gmra.mrb[0].mxu0 %v2685
        %v2755 = vpop.f32.mrb[0].mxu0
        %v2756 = vadd.f32 %v930, %v2755
        %v2757 = vpop.f32.mrb[0].mxu0
        %2758 = vdwg.mxu0
        %v2759 = vsel %vm1021, %v2756, -inf
        %2760 = vmax.xlane.f32.xlu0 %v2759
        %v2761 = vpop.xlane.xlu0 %2760
        %v2762 = vsub.f32 %v2756, %v2761
        %v2763 = vmul.f32 %v2762, 1.442695
        %v2764 = vpow.pop %v2763
        %v2765 = vsel %vm1021, %v2764, 0.0
        %2766 = vadd.xlane.f32.xlu0 %v2765
        %v2767 = vpop.xlane.xlu0 %2766
        %v2768 = vrcp.pop %v2767
        %v2769 = vmul.f32 %v2764, %v2768
        %2770 = vrot.lane.b32.xlu0 %v649, 32
        %v2771 = vpop.permute.xlu0 %2770
        %v2774 = vsel %vm1021, %v2769, 0
        %2776 = vmatprep.subr.mxu0 0.0
        %2777 = vmatpush1.msra.mxu0 %v2771
        %2778 = vmatprep.subr.mxu0 0.0
        %2779 = vmatpush1.msra.mxu0 0.0
        %2780 = vmatprep.subr.mxu0 0.0
        %2781 = vmatpush1.msra.mxu0 0.0
        %2782 = vmatprep.subr.mxu0 0.0
        %2783 = vmatpush1.msra.mxu0 0.0
        %2784 = vmatprep.subr.mxu0 0.0
        %2785 = vmatpush1.msra.mxu0 0.0
        %2786 = vmatprep.subr.mxu0 0.0
        %2787 = vmatpush1.msra.mxu0 0.0
        %2788 = vmatprep.subr.mxu0 0.0
        %2789 = vmatpush1.msra.mxu0 0.0
        %2790 = vmatprep.subr.mxu0 0.0
        %2791 = vmatpush1.msra.mxu0 0.0
        %2792 = vmatprep.subr.mxu0 0.0
        %2793 = vmatpush1.msra.mxu0 0.0
        %2794 = vmatprep.subr.mxu0 0.0
        %2795 = vmatpush1.msra.mxu0 0.0
        %2796 = vmatprep.subr.mxu0 0.0
        %2797 = vmatpush1.msra.mxu0 0.0
        %2798 = vmatprep.subr.mxu0 0.0
        %2799 = vmatpush1.msra.mxu0 0.0
        %2800 = vmatprep.subr.mxu0 0.0
        %2801 = vmatpush1.msra.mxu0 0.0
        %2802 = vmatprep.subr.mxu0 0.0
        %2803 = vmatpush1.msra.mxu0 0.0
        %2804 = vmatprep.subr.mxu0 0.0
        %2805 = vmatpush1.msra.mxu0 0.0
        %2806 = vmatprep.subr.mxu0 0.0
        %2807 = vmatpush1.msra.mxu0 0.0
        %2808 = vmatprep.subr.mxu0 0.0
        %2809 = vmatpush1.msra.mxu0 0.0
        %2810 = vmatprep.subr.mxu0 0.0
        %2811 = vmatpush1.msra.mxu0 0.0
        %2812 = vmatprep.subr.mxu0 0.0
        %2813 = vmatpush1.msra.mxu0 0.0
        %2814 = vmatprep.subr.mxu0 0.0
        %2815 = vmatpush1.msra.mxu0 0.0
        %2816 = vmatprep.subr.mxu0 0.0
        %2817 = vmatpush1.msra.mxu0 0.0
        %2818 = vmatprep.subr.mxu0 0.0
        %2819 = vmatpush1.msra.mxu0 0.0
        %2820 = vmatprep.subr.mxu0 0.0
        %2821 = vmatpush1.msra.mxu0 0.0
        %2822 = vmatprep.subr.mxu0 0.0
        %2823 = vmatpush1.msra.mxu0 0.0
        %2824 = vmatprep.subr.mxu0 0.0
        %2825 = vmatpush1.msra.mxu0 0.0
        %2826 = vmatprep.subr.mxu0 0.0
        %2827 = vmatpush1.msra.mxu0 0.0
        %2828 = vmatprep.subr.mxu0 0.0
        %2829 = vmatpush1.msra.mxu0 0.0
        %2830 = vmatprep.subr.mxu0 0.0
        %2831 = vmatpush1.msra.mxu0 0.0
        %2832 = vmatprep.subr.mxu0 0.0
        %2833 = vmatpush1.msra.mxu0 0.0
        %2834 = vmatprep.subr.mxu0 0.0
        %2835 = vmatpush1.msra.mxu0 0.0
        %2836 = vmatprep.subr.mxu0 0.0
        %2837 = vmatpush1.msra.mxu0 0.0
        %2838 = vmatprep.subr.mxu0 0.0
        %2839 = vmatpush1.msra.mxu0 0.0
        %2840 = vmatprep.mubr.f32.mxu0 0.0
        %2841 = vmatmul.mubr.f32.gmra.mrb[0].mxu0 %v2774
        %v2842 = vpop.f32.mrb[0].mxu0
        %v2843 = vadd.f32 0.0, %v2842
        %v2844 = vpop.f32.mrb[0].mxu0
        %2845 = vdwg.mxu0
        %v2846 = vld [vmem:[#allocation14 + $0x1c0] sm:$0xff]
        %v2847 = vld [vmem:[#allocation14 + $0x1c8] sm:$0xff]
        %v2848 = vld [vmem:[#allocation14 + $0x1d0] sm:$0xff]
        %v2849 = vld [vmem:[#allocation14 + $0x1d8] sm:$0xff]
        %v2850 = vld [vmem:[#allocation14 + $0x1e0] sm:$0xff]
        %v2851 = vld [vmem:[#allocation14 + $0x1e8] sm:$0xff]
        %v2852 = vld [vmem:[#allocation14 + $0x1f0] sm:$0xff]
        %v2853 = vld [vmem:[#allocation14 + $0x1f8] sm:$0xff]
        %v2855 = vsel %vm944, %v2843, 0
        %2857 = vmatprep.subr.mxu0 %v2847
        %2858 = vmatpush1.msra.mxu0 %v2846
        %2859 = vmatprep.subr.mxu0 %v2849
        %2860 = vmatpush1.msra.mxu0 %v2848
        %2861 = vmatprep.subr.mxu0 %v2851
        %2862 = vmatpush1.msra.mxu0 %v2850
        %2863 = vmatprep.subr.mxu0 %v2853
        %2864 = vmatpush1.msra.mxu0 %v2852
        %2865 = vmatprep.subr.mxu0 0.0
        %2866 = vmatpush1.msra.mxu0 0.0
        %2867 = vmatprep.subr.mxu0 0.0
        %2868 = vmatpush1.msra.mxu0 0.0
        %2869 = vmatprep.subr.mxu0 0.0
        %2870 = vmatpush1.msra.mxu0 0.0
        %2871 = vmatprep.subr.mxu0 0.0
        %2872 = vmatpush1.msra.mxu0 0.0
        %2873 = vmatprep.subr.mxu0 0.0
        %2874 = vmatpush1.msra.mxu0 0.0
        %2875 = vmatprep.subr.mxu0 0.0
        %2876 = vmatpush1.msra.mxu0 0.0
        %2877 = vmatprep.subr.mxu0 0.0
        %2878 = vmatpush1.msra.mxu0 0.0
        %2879 = vmatprep.subr.mxu0 0.0
        %2880 = vmatpush1.msra.mxu0 0.0
        %2881 = vmatprep.subr.mxu0 0.0
        %2882 = vmatpush1.msra.mxu0 0.0
        %2883 = vmatprep.subr.mxu0 0.0
        %2884 = vmatpush1.msra.mxu0 0.0
        %2885 = vmatprep.subr.mxu0 0.0
        %2886 = vmatpush1.msra.mxu0 0.0
        %2887 = vmatprep.subr.mxu0 0.0
        %2888 = vmatpush1.msra.mxu0 0.0
        %2889 = vmatprep.subr.mxu0 0.0
        %2890 = vmatpush1.msra.mxu0 0.0
        %2891 = vmatprep.subr.mxu0 0.0
        %2892 = vmatpush1.msra.mxu0 0.0
        %2893 = vmatprep.subr.mxu0 0.0
        %2894 = vmatpush1.msra.mxu0 0.0
        %2895 = vmatprep.subr.mxu0 0.0
        %2896 = vmatpush1.msra.mxu0 0.0
        %2897 = vmatprep.subr.mxu0 0.0
        %2898 = vmatpush1.msra.mxu0 0.0
        %2899 = vmatprep.subr.mxu0 0.0
        %2900 = vmatpush1.msra.mxu0 0.0
        %2901 = vmatprep.subr.mxu0 0.0
        %2902 = vmatpush1.msra.mxu0 0.0
        %2903 = vmatprep.subr.mxu0 0.0
        %2904 = vmatpush1.msra.mxu0 0.0
        %2905 = vmatprep.subr.mxu0 0.0
        %2906 = vmatpush1.msra.mxu0 0.0
        %2907 = vmatprep.subr.mxu0 0.0
        %2908 = vmatpush1.msra.mxu0 0.0
        %2909 = vmatprep.subr.mxu0 0.0
        %2910 = vmatpush1.msra.mxu0 0.0
        %2911 = vmatprep.subr.mxu0 0.0
        %2912 = vmatpush1.msra.mxu0 0.0
        %2913 = vmatprep.subr.mxu0 0.0
        %2914 = vmatpush1.msra.mxu0 0.0
        %2915 = vmatprep.subr.mxu0 0.0
        %2916 = vmatpush1.msra.mxu0 0.0
        %2917 = vmatprep.subr.mxu0 0.0
        %2918 = vmatpush1.msra.mxu0 0.0
        %2919 = vmatprep.subr.mxu0 0.0
        %2920 = vmatpush1.msra.mxu0 0.0
        %2921 = vmatprep.mubr.f32.mxu0 0.0
        %2922 = vmatmul.mubr.f32.gmra.mrb[0].mxu0 %v2855
        %v2923 = vpop.f32.mrb[0].mxu0
        %v2924 = vadd.f32 0.0, %v2923
        %v2925 = vpop.f32.mrb[0].mxu0
        %v2926 = vadd.f32 0.0, %v2925
        %2927 = vdwg.mxu0
        %v2928 = vadd.f32 %v2679, %v2924
        %v2929 = vadd.f32 %v2680, %v2926
        %2930 = vst [vmem:[%s513] sm:$0xff] %v2928
        %2931 = vst [vmem:[%s513 + $0x8] sm:$0xff] %v2929
        %s2932 = sand.u32 %s251, 1
        %s2933 = scalar_lea.sflag [#allocation4], %s2932
        %s2934 = sand.u32 %s251, 1
        %s2935 = smul.addr %s2934, 16
        %s2936 = scalar_lea.vmem [#allocation16], %s2935
        // Predicated region
        $region89: #{tpu_custom_call.1} parent=55 // pred_check
          %p2937 = pneg %p261
        $region90: #{tpu_custom_call.1} parent=55 // pred_check_branch
          %2939 = sbr.rel (%p2937) target = $region92
        $region91: #{tpu_custom_call.1} parent=55 // pred_region
          %s2941 = ssub.s32 256, 256
          %2942 = vsyncadd %s2933, %s2941
          %s2943 = smul.addr %s34, 2
          %s2944 = smul.addr %s2943, 128
          %s2945 = scalar_lea.hbm %s9, %s2944
          %s2947 = sshll.u32 %s2936, 4
          %s2948 = int_to_ptr.vmem [resolvable:$true] %s2947
          %2950 = dma.vmem_to_hbm [thread:$0]  %s2948, 256, %s2945, %s2933
        $region92: #{tpu_custom_call.1} parent=55 // pred_fallthru
          _
      $region56: #{tpu_custom_call.1} parent=5 // pred_fallthru
        _
      %p2951 = scmp.le.s32.totalorder 2, %s29
      // Predicated region
      $region93: #{tpu_custom_call.1} parent=5 // pred_check
        %p2952 = pneg %p2951
      $region94: #{tpu_custom_call.1} parent=5 // pred_check_branch
        %2954 = sbr.rel (%p2952) target = $region96
      $region95: #{tpu_custom_call.1} parent=5 // pred_region
        %s2955 = ssub.s32 %s29, 2
        // Predicated region
        $region97: #{tpu_custom_call.1} parent=95 // pred_check
          %p2956 = pneg %p267
        $region98: #{tpu_custom_call.1} parent=95 // pred_check_branch
          %2958 = sbr.rel (%p2956) target = $region100
        $region99: #{tpu_custom_call.1} parent=95 // pred_region
          %s2959 = sand.u32 %s252, 1
          %s2960 = scalar_lea.sflag [#allocation4], %s2959
          %s2961 = sand.u32 %s252, 1
          %s2962 = smul.addr %s2961, 16
          %s2963 = scalar_lea.vmem [#allocation16], %s2962
          %2964 = dma.done %s2960, 256
        $region100: #{tpu_custom_call.1} parent=95 // pred_fallthru
          _
      $region96: #{tpu_custom_call.1} parent=5 // pred_fallthru
        _
    $region6: #{tpu_custom_call.1} parent=1 // loop_footer
      %s33 = sadd.s32 1, %s29
    $region7: #{tpu_custom_call.1} parent=1 // loop_footer_branch
      %28 = sbr.rel target = $region3
    $region8: #{tpu_custom_call.1} parent=1 // loop_exit
      _
    %2965 = vsyncpa [#allocation3], 1
    %s2966 = scalar_lea.sflag [#allocation3], 1
    %2967 = vsyncpa %s2966, 1
    %2968 = vsyncpa [#allocation6], 1
    %s2969 = scalar_lea.sflag [#allocation6], 1
    %2970 = vsyncpa %s2969, 1
    %2971 = vsyncpa [#allocation9], 1
    %s2972 = scalar_lea.sflag [#allocation9], 1
    %2973 = vsyncpa %s2972, 1
    %2974 = vsyncpa [#allocation12], 1
    %2975 = vsyncpa [#allocation15], 1
    %2976 = vsyncpa [#allocation4], 1
    %s2977 = scalar_lea.sflag [#allocation4], 1
    %2978 = vsyncpa %s2977, 1

</llo_original>
